<compile_context>
chip_gen: v7x
topology: tpu7x:2x2x1
jax: 0.10.0
libtpu: 0.0.40
codegen_flags: <defaults>
</compile_context>

<pallas_src>
import functools

import jax
import jax.numpy as jnp
from jax import lax
from jax.experimental import pallas as pl
from jax.experimental.pallas import tpu as pltpu

LANES = 128
SUBLANES = 8
TARGET_TILE_BYTES = 2 * 1024 * 1024       # per-input, per-step HBM traffic target
TARGET_TILE_BYTES_V7X = 4 * 1024 * 1024   # v7x HBM ~3.2 TB/s -> bigger tiles to amortize step overhead
SMALL_INPUT_ELEMS = 64 * 1024             # below this, a fused XLA reduction wins


def _chip_info():
    """Return (num_tensorcores_per_chip, is_v7x) with conservative fallbacks."""
    try:
        kind = jax.devices()[0].device_kind.lower()
    except Exception:
        kind = ""
    is_v7x = "v7" in kind
    return (2 if is_v7x else 1), is_v7x


def _ssd_kernel(x_ref, f_ref, o_ref, *, tiles_per_split, num_tiles,
                tail_valid_rows, need_gate, need_mask):
    """Accumulate sum((x - f)^2) for this split into an (8, 128) VMEM block."""
    c = pl.program_id(0)                  # split index (one per TensorCore on v7x)
    i = pl.program_id(1)                  # row-block index within split (reduction axis)
    tile_idx = c * tiles_per_split + i

    @pl.when(i == 0)
    def _():
        o_ref[...] = jnp.zeros_like(o_ref)

    def _accumulate(d2):
        # (tile_rows, 128) -> (8, 128) via vreg-wise adds only (VALU); the
        # reshape matches the natural vreg tiling so it's free.
        o_ref[...] += jnp.sum(d2.reshape(-1, SUBLANES, LANES), axis=0)

    def _full_tile():
        # Cast in-vreg (free on the VPU) so HBM only streams the native dtype.
        d = x_ref[...].astype(jnp.float32) - f_ref[...].astype(jnp.float32)
        _accumulate(d * d)

    if need_mask:
        # Only the globally-last tile pays for the iota/compare/select.
        def _tail_tile():
            d = x_ref[...].astype(jnp.float32) - f_ref[...].astype(jnp.float32)
            d2 = d * d
            # Local row index vs. static tail count -> no int32 overflow risk.
            row = lax.broadcasted_iota(jnp.int32, d2.shape, 0)
            _accumulate(jnp.where(row < tail_valid_rows, d2, 0.0))

        pl.when(tile_idx == num_tiles - 1)(_tail_tile)
        pl.when(tile_idx < num_tiles - 1)(_full_tile)   # also skips phantom tiles
    elif need_gate:
        pl.when(tile_idx < num_tiles)(_full_tile)       # skip phantom tiles
    else:
        _full_tile()


def perceptual_loss(x, f):
    """mean((x - f)**2) over all elements (== F.mse_loss(x, f, reduction='mean'))."""
    assert x.shape == f.shape, "x and f must have identical shapes"
    n = x.size
    itemsize = jnp.dtype(x.dtype).itemsize

    # Tiny inputs: the fixed pallas_call/grid cost dominates; let XLA fuse it.
    if n < SMALL_INPUT_ELEMS:
        d = x.astype(jnp.float32) - f.astype(jnp.float32)
        return jnp.mean(d * d)

    xf = x.reshape(-1)
    ff = f.reshape(-1)
    if n % LANES != 0:
        # Rare fallback: zero-pad (< 128 elems) BOTH inputs so the pad adds 0.
        pad = LANES - (n % LANES)
        xf = jnp.pad(xf, (0, pad))
        ff = jnp.pad(ff, (0, pad))

    rows = xf.size // LANES
    x2 = xf.reshape(rows, LANES)
    f2 = ff.reshape(rows, LANES)

    num_tc, is_v7x = _chip_info()

    # Keep HBM bytes-per-step constant across dtypes; row alignment keeps
    # sub-32-bit dtypes on native sublane packing and makes the (-1, 8, 128)
    # accumulator reshape legal (tile_rows is always a multiple of 8).
    row_align = SUBLANES if itemsize >= 4 else max(SUBLANES, 32 // itemsize)
    target_bytes = TARGET_TILE_BYTES_V7X if is_v7x else TARGET_TILE_BYTES
    target_rows = max(row_align,
                      (target_bytes // (LANES * itemsize)) // row_align * row_align)
    tile_rows = min(target_rows, (rows // row_align) * row_align)
    tile_rows = max(tile_rows, row_align)

    num_tiles = pl.cdiv(rows, tile_rows)
    # Only shard across TensorCores on multi-TC chips (v7x); on v5e/v6e a
    # 2-way split only costs phantom-tile HBM reads and a per-step gate.
    num_splits = num_tc if (num_tc > 1 and num_tiles >= num_tc) else 1
    tiles_per_split = pl.cdiv(num_tiles, num_splits)
    need_gate = (num_splits * tiles_per_split) != num_tiles
    need_mask = (rows % tile_rows) != 0
    tail_valid_rows = rows - (num_tiles - 1) * tile_rows   # static Python int

    if need_gate:
        def in_map(c, i):
            # Clamp phantom tiles (split rounding) so the DMA stays in bounds;
            # their contribution is skipped inside the kernel.
            return (jnp.minimum(c * tiles_per_split + i, num_tiles - 1), 0)
    else:
        def in_map(c, i):
            return (c * tiles_per_split + i, 0)

    kernel = functools.partial(
        _ssd_kernel,
        tiles_per_split=tiles_per_split,
        num_tiles=num_tiles,
        tail_valid_rows=tail_valid_rows,
        need_gate=need_gate,
        need_mask=need_mask,
    )

    # Only CORE_PARALLEL actually shards the leading axis across the two v7x
    # TensorCores; on 1-TC chips the axis has size 1 so semantics don't matter.
    if num_splits > 1:
        dim_sems = (getattr(pltpu, "CORE_PARALLEL", "parallel"), "arbitrary")
    else:
        dim_sems = ("arbitrary", "arbitrary")

    out_bytes = SUBLANES * num_splits * LANES * 4
    cost = pl.CostEstimate(flops=3 * n, transcendentals=0,
                           bytes_accessed=2 * n * itemsize + out_bytes)

    partials = pl.pallas_call(
        kernel,
        out_shape=jax.ShapeDtypeStruct((SUBLANES, num_splits * LANES), jnp.float32),
        grid_spec=pltpu.PrefetchScalarGridSpec(
            num_scalar_prefetch=0,
            grid=(num_splits, tiles_per_split),
            in_specs=[
                pl.BlockSpec((tile_rows, LANES), in_map),
                pl.BlockSpec((tile_rows, LANES), in_map),
            ],
            out_specs=pl.BlockSpec((SUBLANES, LANES), lambda c, i: (0, c)),
        ),
        compiler_params=pltpu.CompilerParams(dimension_semantics=dim_sems),
        cost_estimate=cost,
    )(x2, f2)

    # Epilogue: one tiny cross-sublane + cross-lane reduce, then the mean over
    # the ORIGINAL element count.
    return (jnp.sum(partials) / jnp.float32(n)).astype(jnp.float32)


if __name__ == "__main__":
    key = jax.random.PRNGKey(0)

    def _check(shape, dtype=jnp.float32, idx=0):
        kx, kf = jax.random.split(jax.random.fold_in(key, idx))
        x = jax.random.normal(kx, shape, dtype=jnp.float32).astype(dtype)
        f = jax.random.normal(kf, shape, dtype=jnp.float32).astype(dtype)  # fixed feature target
        loss = jax.block_until_ready(perceptual_loss(x, f))
        ref = jnp.mean((x.astype(jnp.float32) - f.astype(jnp.float32)) ** 2)
        assert loss.shape == ()
        assert jnp.allclose(loss, ref, rtol=1e-4, atol=1e-6), (shape, dtype, loss, ref)

    # Primary small shape consistent with the module's forward ([b, c, h, w]);
    # takes the small-input bypass path.
    _check((2, 4, 16, 16), idx=0)
    # Large enough to hit the Pallas kernel, the ragged-tail mask (rows=2050,
    # tile_rows=2048) and, on v7x, the 2-way CORE_PARALLEL split.
    _check((2, 4, 160, 205), idx=1)
    # Exactly tile-aligned f32 case (rows = 4096, single tile, no tail mask).
    _check((1, 8, 256, 256), idx=2)
    # bf16 streaming path (dtype-scaled tile rows, in-vreg f32 cast).
    _check((2, 4, 160, 205), dtype=jnp.bfloat16, idx=3)

    print("KERNEL_OK")
</pallas_src>

<mosaic_0001>
module attributes {stable_mosaic.version = 11 : i64} {
  func.func @_ssd_kernel(%arg0: i32, %arg1: i32, %arg2: memref<2048x128xf32, #tpu.memory_space<vmem>>, %arg3: memref<2048x128xf32, #tpu.memory_space<vmem>>, %arg4: memref<8x128xf32, #tpu.memory_space<vmem>>) attributes {dimension_semantics = [#tpu.dimension_semantics<arbitrary>, #tpu.dimension_semantics<arbitrary>], iteration_bounds = array<i64: 1, 2>, scalar_prefetch = 0 : i64, scratch_operands = 0 : i64, tpu.core_type = #tpu.core_type<tc>, window_params = [{transform_indices = @transform_0, window_bounds = array<i64: 2048, 128>}, {transform_indices = @transform_1, window_bounds = array<i64: 2048, 128>}, {transform_indices = @transform_2, window_bounds = array<i64: 8, 128>}]} {
    %c2_i32 = arith.constant 2 : i32
    %0 = arith.muli %arg0, %c2_i32 : i32
    %1 = arith.addi %0, %arg1 : i32
    %c0_i32 = arith.constant 0 : i32
    %2 = arith.cmpi eq, %arg1, %c0_i32 : i32
    %3 = arith.extui %2 : i1 to i32
    %c0_i32_0 = arith.constant 0 : i32
    %4 = arith.cmpi ne, %3, %c0_i32_0 : i32
    scf.if %4 {
      %cst = arith.constant 0.000000e+00 : f32
      %11 = vector.broadcast %cst : f32 to vector<8x128xf32>
      %c0 = arith.constant 0 : index
      %c0_4 = arith.constant 0 : index
      %12 = vector.load %arg4[%c0, %c0_4] : memref<8x128xf32, #tpu.memory_space<vmem>>, vector<8x128xf32>
      tpu.vector_store %arg4[%c0, %c0_4], %11 {strides = array<i32>} : memref<8x128xf32, #tpu.memory_space<vmem>>, vector<8x128xf32>,
    } else {
    }
    %c1_i32 = arith.constant 1 : i32
    %5 = arith.cmpi eq, %1, %c1_i32 : i32
    %6 = arith.extui %5 : i1 to i32
    %c0_i32_1 = arith.constant 0 : i32
    %7 = arith.cmpi ne, %6, %c0_i32_1 : i32
    scf.if %7 {
      %c0 = arith.constant 0 : index
      %c0_4 = arith.constant 0 : index
      %11 = vector.load %arg2[%c0, %c0_4] : memref<2048x128xf32, #tpu.memory_space<vmem>>, vector<2048x128xf32>
      %c0_5 = arith.constant 0 : index
      %c0_6 = arith.constant 0 : index
      %12 = vector.load %arg3[%c0_5, %c0_6] : memref<2048x128xf32, #tpu.memory_space<vmem>>, vector<2048x128xf32>
      %13 = arith.subf %11, %12 : vector<2048x128xf32>
      %14 = arith.mulf %13, %13 : vector<2048x128xf32>
      %15 = tpu.iota {dimensions = array<i32: 0>} : vector<2048x128xi32>
      %c2_i32_7 = arith.constant 2 : i32
      %16 = vector.broadcast %c2_i32_7 : i32 to vector<2048x128xi32>
      %17 = arith.cmpi slt, %15, %16 : vector<2048x128xi32>
      %cst = arith.constant 0.000000e+00 : f32
      %18 = vector.broadcast %cst : f32 to vector<2048x128xf32>
      %19 = arith.select %17, %14, %18 : vector<2048x128xi1>, vector<2048x128xf32>
      %c0_8 = arith.constant 0 : index
      %c0_9 = arith.constant 0 : index
      %20 = vector.load %arg4[%c0_8, %c0_9] : memref<8x128xf32, #tpu.memory_space<vmem>>, vector<8x128xf32>
      %21 = vector.shape_cast %19 : vector<2048x128xf32> to vector<256x8x128xf32>
      %cst_10 = arith.constant dense<0.000000e+00> : vector<8x128xf32>
      %22 = vector.multi_reduction <add>, %21, %cst_10 [0] : vector<256x8x128xf32> to vector<8x128xf32>
      %23 = arith.addf %20, %22 : vector<8x128xf32>
      %c0_11 = arith.constant 0 : index
      %c0_12 = arith.constant 0 : index
      %24 = vector.load %arg4[%c0_11, %c0_12] : memref<8x128xf32, #tpu.memory_space<vmem>>, vector<8x128xf32>
      tpu.vector_store %arg4[%c0_11, %c0_12], %23 {strides = array<i32>} : memref<8x128xf32, #tpu.memory_space<vmem>>, vector<8x128xf32>,
    } else {
    }
    %c1_i32_2 = arith.constant 1 : i32
    %8 = arith.cmpi slt, %1, %c1_i32_2 : i32
    %9 = arith.extui %8 : i1 to i32
    %c0_i32_3 = arith.constant 0 : i32
    %10 = arith.cmpi ne, %9, %c0_i32_3 : i32
    scf.if %10 {
      %c0 = arith.constant 0 : index
      %c0_4 = arith.constant 0 : index
      %11 = vector.load %arg2[%c0, %c0_4] : memref<2048x128xf32, #tpu.memory_space<vmem>>, vector<2048x128xf32>
      %c0_5 = arith.constant 0 : index
      %c0_6 = arith.constant 0 : index
      %12 = vector.load %arg3[%c0_5, %c0_6] : memref<2048x128xf32, #tpu.memory_space<vmem>>, vector<2048x128xf32>
      %13 = arith.subf %11, %12 : vector<2048x128xf32>
      %14 = arith.mulf %13, %13 : vector<2048x128xf32>
      %c0_7 = arith.constant 0 : index
      %c0_8 = arith.constant 0 : index
      %15 = vector.load %arg4[%c0_7, %c0_8] : memref<8x128xf32, #tpu.memory_space<vmem>>, vector<8x128xf32>
      %16 = vector.shape_cast %14 : vector<2048x128xf32> to vector<256x8x128xf32>
      %cst = arith.constant dense<0.000000e+00> : vector<8x128xf32>
      %17 = vector.multi_reduction <add>, %16, %cst [0] : vector<256x8x128xf32> to vector<8x128xf32>
      %18 = arith.addf %15, %17 : vector<8x128xf32>
      %c0_9 = arith.constant 0 : index
      %c0_10 = arith.constant 0 : index
      %19 = vector.load %arg4[%c0_9, %c0_10] : memref<8x128xf32, #tpu.memory_space<vmem>>, vector<8x128xf32>
      tpu.vector_store %arg4[%c0_9, %c0_10], %18 {strides = array<i32>} : memref<8x128xf32, #tpu.memory_space<vmem>>, vector<8x128xf32>,
    } else {
    }
    return
  }
  func.func @transform_0(%arg0: i32, %arg1: i32) -> (i32, i32) {
    %c2_i32 = arith.constant 2 : i32
    %0 = arith.muli %arg0, %c2_i32 : i32
    %1 = arith.addi %0, %arg1 : i32
    %c0_i32 = arith.constant 0 : i32
    %c0_i32_0 = arith.constant 0 : i32
    return %1, %c0_i32 : i32, i32
  }
  func.func @transform_1(%arg0: i32, %arg1: i32) -> (i32, i32) {
    %c2_i32 = arith.constant 2 : i32
    %0 = arith.muli %arg0, %c2_i32 : i32
    %1 = arith.addi %0, %arg1 : i32
    %c0_i32 = arith.constant 0 : i32
    %c0_i32_0 = arith.constant 0 : i32
    return %1, %c0_i32 : i32, i32
  }
  func.func @transform_2(%arg0: i32, %arg1: i32) -> (i32, i32) {
    %c0_i32 = arith.constant 0 : i32
    %c0_i32_0 = arith.constant 0 : i32
    return %c0_i32, %arg0 : i32, i32
  }
}

</mosaic_0001>

<llo_original>
// kernel: tpu_custom_call.1
$region0: #{tpu_custom_call.1}
  #allocation0 [shape = 'u32[]', space=smem, size = 0x4, offset = 0x4, fixed_abs, tag = 'smem constant byte address 0x4 - core index']
  #allocation1 [shape = 'u32[144,128]{1,0:T(1,128)}', space=vmem, size = 0x12000, scoped, tag = 'internal scratch']
  %s0 = inlined_call_operand.hbm [shape: f32[2050,128], index: 0, kind: input, shape index: {}]
  %s1 = inlined_call_operand.hbm [shape: f32[2050,128], index: 1, kind: input, shape index: {}]
  %s2 = inlined_call_operand.hbm [shape: f32[8,128], index: 2, kind: output, shape index: {}]
  %s3 = sld [smem:[#allocation0]]
  $region61: #{tpu_custom_call.1} parent=0
    _
  %s5 = ssub.s32 1, %s3
  %s6 = scalar_select 0, %s5, %s3
  $region1: #{tpu_custom_call.1} parent=0
    #allocation2 [shape = 'u8[2097152]{0}', space=vmem, size = 0x200000, scoped, tag = 'input window, operand 0']
    #allocation3 [shape = 's32[2]{0}', space=sflag, size = 0x8, scoped, tag = 'scoped memory for tpu_custom_call.1']
    #allocation4 [shape = 's32[2]{0}', space=sflag, size = 0x8, scoped, tag = 'scoped memory for tpu_custom_call.1']
    #allocation5 [shape = 'u8[2097152]{0}', space=vmem, size = 0x200000, scoped, tag = 'input window, operand 1']
    #allocation6 [shape = 's32[2]{0}', space=sflag, size = 0x8, scoped, tag = 'scoped memory for tpu_custom_call.1']
    #allocation7 [shape = 'u8[4096]{0}', space=vmem, size = 0x1000, scoped, tag = 'output window, operand 0, single buffered']
    %7 = vsyncpa [#allocation3], 0
    %s8 = scalar_lea.sflag [#allocation3], 1
    %9 = vsyncpa %s8, 0
    %10 = vsyncpa [#allocation6], 0
    %s11 = scalar_lea.sflag [#allocation6], 1
    %12 = vsyncpa %s11, 0
    %13 = vsyncpa [#allocation4], 0
    loop: start=0, step=1, limit=4
    $region2: #{tpu_custom_call.1} parent=1 // loop_pre_header
      _
    $region3: #{tpu_custom_call.1} parent=1 // loop_header
      %s15 = sphi 0, %s19
      %p16 = scmp.ge.s32.totalorder %s15, 4
      %s22 = sphi 0, %s34
      %s23 = sphi 0, %s30
      %s24 = sphi 0, %s22
      %s25 = sphi 0, %s23
      %s26 = sphi 0, %s24
      %s27 = sphi 0, %s25
      %s41 = sphi 0, %s43
      %s44 = sphi 0, %s41
      %s45 = sphi 0, %s44
      %s61 = sphi 0, %s45
      %s71 = sphi 0, %s73
      %s74 = sphi 0, %s71
      %s75 = sphi 0, %s74
      %s91 = sphi 0, %s75
      %s97 = sphi 0, %s99
      %s100 = sphi 0, %s97
      %s101 = sphi 0, %s100
      %s117 = sphi 0, %s101
    $region4: #{tpu_custom_call.1} parent=1 // loop_header_branch
      %18 = sbr.rel (%p16) target = $region8
    $region5: #{tpu_custom_call.1} parent=1 // loop_body
      %s20 = ssub.s32 %s15, 1
      %s21 = ssub.s32 %s15, 2
      %s28 = sadd.s32 1, %s23
      %p29 = scmp.ge.s32.totalorder %s28, 2
      %s30 = scalar_select %p29, 0, %s28
      %s31 = sadd.s32 1, %s22
      %s32 = scalar_select %p29, %s31, %s22
      %p33 = scmp.ge.s32.totalorder %s32, 1
      %s34 = scalar_select %p33, 0, %s32
      %s35 = smul.u32 %s22, 2
      %s36 = sadd.s32 %s35, %s23
      %s37 = smul.u32 %s34, 2
      %s38 = sadd.s32 %s37, %s30
      %s39 = ssub.s32 %s36, %s38
      %p40 = scmp.eq.s32.totalorder %s39, 0
      %s42 = sadd.s32 %s41, 1
      %s43 = scalar_select %p40, %s41, %s42
      %p46 = pneg %p40
      %p47 = scmp.eq.s32.totalorder %s15, 1
      %p48 = por %p46, %p47
      %p49 = scmp.ne.s32.totalorder %s41, %s44
      %p50 = scmp.eq.s32.totalorder %s15, 0
      %p51 = por %p49, %p50
      %p52 = scmp.ne.s32.totalorder %s41, %s44
      %p53 = scmp.eq.s32.totalorder %s20, 1
      %p54 = por %p52, %p53
      %p55 = scmp.ne.s32.totalorder %s44, %s45
      %p56 = scmp.eq.s32.totalorder %s20, 0
      %p57 = por %p55, %p56
      %p58 = scmp.ne.s32.totalorder %s44, %s45
      %p59 = scmp.eq.s32.totalorder %s21, 1
      %p60 = por %p58, %p59
      %p62 = scmp.ne.s32.totalorder %s45, %s61
      %p63 = scmp.eq.s32.totalorder %s21, 0
      %p64 = por %p62, %p63
      %s65 = smul.u32 %s22, 2
      %s66 = sadd.s32 %s65, %s23
      %s67 = smul.u32 %s34, 2
      %s68 = sadd.s32 %s67, %s30
      %s69 = ssub.s32 %s66, %s68
      %p70 = scmp.eq.s32.totalorder %s69, 0
      %s72 = sadd.s32 %s71, 1
      %s73 = scalar_select %p70, %s71, %s72
      %p76 = pneg %p70
      %p77 = scmp.eq.s32.totalorder %s15, 1
      %p78 = por %p76, %p77
      %p79 = scmp.ne.s32.totalorder %s71, %s74
      %p80 = scmp.eq.s32.totalorder %s15, 0
      %p81 = por %p79, %p80
      %p82 = scmp.ne.s32.totalorder %s71, %s74
      %p83 = scmp.eq.s32.totalorder %s20, 1
      %p84 = por %p82, %p83
      %p85 = scmp.ne.s32.totalorder %s74, %s75
      %p86 = scmp.eq.s32.totalorder %s20, 0
      %p87 = por %p85, %p86
      %p88 = scmp.ne.s32.totalorder %s74, %s75
      %p89 = scmp.eq.s32.totalorder %s21, 1
      %p90 = por %p88, %p89
      %p92 = scmp.ne.s32.totalorder %s75, %s91
      %p93 = scmp.eq.s32.totalorder %s21, 0
      %p94 = por %p92, %p93
      %s95 = ssub.s32 %s22, %s34
      %p96 = scmp.eq.s32.totalorder %s95, 0
      %s98 = sadd.s32 %s97, 1
      %s99 = scalar_select %p96, %s97, %s98
      %p102 = pneg %p96
      %p103 = scmp.eq.s32.totalorder %s15, 1
      %p104 = por %p102, %p103
      %p105 = scmp.ne.s32.totalorder %s97, %s100
      %p106 = scmp.eq.s32.totalorder %s15, 0
      %p107 = por %p105, %p106
      %p108 = scmp.ne.s32.totalorder %s97, %s100
      %p109 = scmp.eq.s32.totalorder %s20, 1
      %p110 = por %p108, %p109
      %p111 = scmp.ne.s32.totalorder %s100, %s101
      %p112 = scmp.eq.s32.totalorder %s20, 0
      %p113 = por %p111, %p112
      %p114 = scmp.ne.s32.totalorder %s100, %s101
      %p115 = scmp.eq.s32.totalorder %s21, 1
      %p116 = por %p114, %p115
      %p118 = scmp.ne.s32.totalorder %s101, %s117
      %p119 = scmp.eq.s32.totalorder %s21, 0
      %p120 = por %p118, %p119
      %p121 = scmp.le.s32.totalorder 1, %s15
      %p122 = scmp.lt.s32.totalorder %s15, 3
      %p123 = pnand %p121, %p122
      %p124 = pneg %p123
      // Predicated region
      $region9: #{tpu_custom_call.1} parent=5 // pred_check
        _
      $region10: #{tpu_custom_call.1} parent=5 // pred_check_branch
        %126 = sbr.rel (%p123) target = $region12
      $region11: #{tpu_custom_call.1} parent=5 // pred_region
        %s127 = ssub.s32 %s15, 1
      $region12: #{tpu_custom_call.1} parent=5 // pred_fallthru
        _
      %p128 = scmp.lt.s32.totalorder %s15, 2
      // Predicated region
      $region13: #{tpu_custom_call.1} parent=5 // pred_check
        %p129 = pneg %p128
      $region14: #{tpu_custom_call.1} parent=5 // pred_check_branch
        %131 = sbr.rel (%p129) target = $region16
      $region15: #{tpu_custom_call.1} parent=5 // pred_region
        // Predicated region
        $region17: #{tpu_custom_call.1} parent=15 // pred_check
          %p132 = pneg %p51
        $region18: #{tpu_custom_call.1} parent=15 // pred_check_branch
          %134 = sbr.rel (%p132) target = $region20
        $region19: #{tpu_custom_call.1} parent=15 // pred_region
          %s135 = sand.u32 %s41, 1
          %s136 = scalar_lea.sflag [#allocation3], %s135
          %s137 = sand.u32 %s41, 1
          %s138 = smul.addr %s137, 2048
          %s139 = scalar_lea.vmem [#allocation2], %s138
          %s140 = smul.u32 %s22, 2
          %s141 = sadd.s32 %s140, %s23
          %s142 = smul.u32 256, %s141
          %s143 = ssub.s32 257, %s142
          %p144 = scmp.lt.s32.totalorder %s143, 256
          %s145 = scalar_select %p144, %s143, 256
          %s146 = smul.u32 128, %s145
          %s148 = ssub.s32 32768, %s146
          %149 = vsyncadd %s136, %s148
          %p150 = scmp.ne.s32.totalorder 0, %s146
          %s151 = smul.addr %s142, 128
          %s152 = scalar_lea.hbm %s0, %s151
          %s153 = smul.u32 8, %s145
          %s154 = sshll.u32 %s139, 4
          %s155 = int_to_ptr.vmem [resolvable:$true] %s154
          %s156 = sshll.u32 %s153, 4
          %160 = dma.hbm_to_vmem [thread:$0]  (%p150), %s152, %s156, %s155, %s136, 128, 128, 8
        $region20: #{tpu_custom_call.1} parent=15 // pred_fallthru
          _
        // Predicated region
        $region21: #{tpu_custom_call.1} parent=15 // pred_check
          %p161 = pneg %p81
        $region22: #{tpu_custom_call.1} parent=15 // pred_check_branch
          %163 = sbr.rel (%p161) target = $region24
        $region23: #{tpu_custom_call.1} parent=15 // pred_region
          %s164 = sand.u32 %s71, 1
          %s165 = scalar_lea.sflag [#allocation6], %s164
          %s166 = sand.u32 %s71, 1
          %s167 = smul.addr %s166, 2048
          %s168 = scalar_lea.vmem [#allocation5], %s167
          %s169 = smul.u32 %s22, 2
          %s170 = sadd.s32 %s169, %s23
          %s171 = smul.u32 256, %s170
          %s172 = ssub.s32 257, %s171
          %p173 = scmp.lt.s32.totalorder %s172, 256
          %s174 = scalar_select %p173, %s172, 256
          %s175 = smul.u32 128, %s174
          %s177 = ssub.s32 32768, %s175
          %178 = vsyncadd %s165, %s177
          %p179 = scmp.ne.s32.totalorder 0, %s175
          %s180 = smul.addr %s171, 128
          %s181 = scalar_lea.hbm %s1, %s180
          %s182 = smul.u32 8, %s174
          %s183 = sshll.u32 %s168, 4
          %s184 = int_to_ptr.vmem [resolvable:$true] %s183
          %s185 = sshll.u32 %s182, 4
          %189 = dma.hbm_to_vmem [thread:$0]  (%p179), %s181, %s185, %s184, %s165, 128, 128, 8
        $region24: #{tpu_custom_call.1} parent=15 // pred_fallthru
          _
      $region16: #{tpu_custom_call.1} parent=5 // pred_fallthru
        _
      %p190 = scmp.le.s32.totalorder 1, %s15
      %p191 = scmp.lt.s32.totalorder %s15, 3
      %p192 = pnand %p190, %p191
      %p193 = pneg %p192
      // Predicated region
      $region25: #{tpu_custom_call.1} parent=5 // pred_check
        _
      $region26: #{tpu_custom_call.1} parent=5 // pred_check_branch
        %195 = sbr.rel (%p192) target = $region28
      $region27: #{tpu_custom_call.1} parent=5 // pred_region
        %s196 = ssub.s32 %s15, 1
        %s197 = sand.u32 %s44, 1
        %s198 = scalar_lea.sflag [#allocation3], %s197
        %s199 = sand.u32 %s44, 1
        %s200 = smul.addr %s199, 2048
        %s201 = scalar_lea.vmem [#allocation2], %s200
        // Predicated region
        $region29: #{tpu_custom_call.1} parent=27 // pred_check
          %p202 = pneg %p57
        $region30: #{tpu_custom_call.1} parent=27 // pred_check_branch
          %204 = sbr.rel (%p202) target = $region32
        $region31: #{tpu_custom_call.1} parent=27 // pred_region
          %205 = dma.done %s198, 32768
        $region32: #{tpu_custom_call.1} parent=27 // pred_fallthru
          _
        %s206 = sand.u32 %s74, 1
        %s207 = scalar_lea.sflag [#allocation6], %s206
        %s208 = sand.u32 %s74, 1
        %s209 = smul.addr %s208, 2048
        %s210 = scalar_lea.vmem [#allocation5], %s209
        // Predicated region
        $region33: #{tpu_custom_call.1} parent=27 // pred_check
          %p211 = pneg %p87
        $region34: #{tpu_custom_call.1} parent=27 // pred_check_branch
          %213 = sbr.rel (%p211) target = $region36
        $region35: #{tpu_custom_call.1} parent=27 // pred_region
          %214 = dma.done %s207, 32768
        $region36: #{tpu_custom_call.1} parent=27 // pred_fallthru
          _
        %s215 = sand.u32 %s44, 1
        %s216 = scalar_lea.sflag [#allocation3], %s215
        %s217 = sand.u32 %s44, 1
        %s218 = smul.addr %s217, 2048
        %s219 = scalar_lea.vmem [#allocation2], %s218
        %p220 = pneg %p57
        %p221 = pneg %p54
        %s222 = sand.u32 %s74, 1
        %s223 = scalar_lea.sflag [#allocation6], %s222
        %s224 = sand.u32 %s74, 1
        %s225 = smul.addr %s224, 2048
        %s226 = scalar_lea.vmem [#allocation5], %s225
        %p227 = pneg %p87
        %p228 = pneg %p84
        %p229 = pneg %p113
        %p230 = pneg %p110
        %s231 = smul.u32 %s24, 2
        %s232 = sadd.s32 %s231, %s25
        %s233 = smul.u32 256, %s232
        %s234 = ssub.s32 257, %s233
        %p235 = scmp.lt.s32.totalorder %s234, 256
        %s236 = scalar_select %p235, %s234, 256
        %s237 = smul.u32 128, %s236
        %s238 = smul.u32 %s24, 2
        %s239 = sadd.s32 %s238, %s25
        %s240 = smul.u32 256, %s239
        %s241 = ssub.s32 257, %s240
        %p242 = scmp.lt.s32.totalorder %s241, 256
        %s243 = scalar_select %p242, %s241, 256
        %s244 = smul.u32 128, %s243
        %s245 = smul.u32 %s24, 2
        %s246 = sadd.s32 %s245, %s25
        %p247 = scmp.eq.s32.totalorder %s25, 0
        // Predicated region
        $region37: #{tpu_custom_call.1} parent=27 // pred_check
          %p248 = pneg %p247
        $region38: #{tpu_custom_call.1} parent=27 // pred_check_branch
          %250 = sbr.rel (%p248) target = $region40
        $region39: #{tpu_custom_call.1} parent=27 // pred_region
          %251 = vst [vmem:[#allocation7] sm:$0xff] 0.0
        $region40: #{tpu_custom_call.1} parent=27 // pred_fallthru
          _
        %p252 = scmp.eq.s32.totalorder %s246, 1
        // Predicated region
        $region41: #{tpu_custom_call.1} parent=27 // pred_check
          %p253 = pneg %p252
        $region42: #{tpu_custom_call.1} parent=27 // pred_check_branch
          %255 = sbr.rel (%p253) target = $region44
        $region43: #{tpu_custom_call.1} parent=27 // pred_region
          %v256 = vld [vmem:[%s201] sm:$0xff]
          %v257 = vld [vmem:[%s201 + $0x8] sm:$0xff]
          %v258 = vld [vmem:[%s201 + $0x10] sm:$0xff]
          %v259 = vld [vmem:[%s201 + $0x18] sm:$0xff]
          %v260 = vld [vmem:[%s201 + $0x20] sm:$0xff]
          %v261 = vld [vmem:[%s201 + $0x28] sm:$0xff]
          %v262 = vld [vmem:[%s201 + $0x30] sm:$0xff]
          %v263 = vld [vmem:[%s201 + $0x38] sm:$0xff]
          %v264 = vld [vmem:[%s201 + $0x40] sm:$0xff]
          %v265 = vld [vmem:[%s201 + $0x48] sm:$0xff]
          %v266 = vld [vmem:[%s201 + $0x50] sm:$0xff]
          %v267 = vld [vmem:[%s201 + $0x58] sm:$0xff]
          %v268 = vld [vmem:[%s201 + $0x60] sm:$0xff]
          %v269 = vld [vmem:[%s201 + $0x68] sm:$0xff]
          %v270 = vld [vmem:[%s201 + $0x70] sm:$0xff]
          %v271 = vld [vmem:[%s201 + $0x78] sm:$0xff]
          %v272 = vld [vmem:[%s201 + $0x80] sm:$0xff]
          %v273 = vld [vmem:[%s201 + $0x88] sm:$0xff]
          %v274 = vld [vmem:[%s201 + $0x90] sm:$0xff]
          %v275 = vld [vmem:[%s201 + $0x98] sm:$0xff]
          %v276 = vld [vmem:[%s201 + $0xa0] sm:$0xff]
          %v277 = vld [vmem:[%s201 + $0xa8] sm:$0xff]
          %v278 = vld [vmem:[%s201 + $0xb0] sm:$0xff]
          %v279 = vld [vmem:[%s201 + $0xb8] sm:$0xff]
          %v280 = vld [vmem:[%s201 + $0xc0] sm:$0xff]
          %v281 = vld [vmem:[%s201 + $0xc8] sm:$0xff]
          %v282 = vld [vmem:[%s201 + $0xd0] sm:$0xff]
          %v283 = vld [vmem:[%s201 + $0xd8] sm:$0xff]
          %v284 = vld [vmem:[%s201 + $0xe0] sm:$0xff]
          %v285 = vld [vmem:[%s201 + $0xe8] sm:$0xff]
          %v286 = vld [vmem:[%s201 + $0xf0] sm:$0xff]
          %v287 = vld [vmem:[%s201 + $0xf8] sm:$0xff]
          %v288 = vld [vmem:[%s201 + $0x100] sm:$0xff]
          %v289 = vld [vmem:[%s201 + $0x108] sm:$0xff]
          %v290 = vld [vmem:[%s201 + $0x110] sm:$0xff]
          %v291 = vld [vmem:[%s201 + $0x118] sm:$0xff]
          %v292 = vld [vmem:[%s201 + $0x120] sm:$0xff]
          %v293 = vld [vmem:[%s201 + $0x128] sm:$0xff]
          %v294 = vld [vmem:[%s201 + $0x130] sm:$0xff]
          %v295 = vld [vmem:[%s201 + $0x138] sm:$0xff]
          %v296 = vld [vmem:[%s201 + $0x140] sm:$0xff]
          %v297 = vld [vmem:[%s201 + $0x148] sm:$0xff]
          %v298 = vld [vmem:[%s201 + $0x150] sm:$0xff]
          %v299 = vld [vmem:[%s201 + $0x158] sm:$0xff]
          %v300 = vld [vmem:[%s201 + $0x160] sm:$0xff]
          %v301 = vld [vmem:[%s201 + $0x168] sm:$0xff]
          %v302 = vld [vmem:[%s201 + $0x170] sm:$0xff]
          %v303 = vld [vmem:[%s201 + $0x178] sm:$0xff]
          %v304 = vld [vmem:[%s201 + $0x180] sm:$0xff]
          %v305 = vld [vmem:[%s201 + $0x188] sm:$0xff]
          %v306 = vld [vmem:[%s201 + $0x190] sm:$0xff]
          %v307 = vld [vmem:[%s201 + $0x198] sm:$0xff]
          %v308 = vld [vmem:[%s201 + $0x1a0] sm:$0xff]
          %v309 = vld [vmem:[%s201 + $0x1a8] sm:$0xff]
          %v310 = vld [vmem:[%s201 + $0x1b0] sm:$0xff]
          %v311 = vld [vmem:[%s201 + $0x1b8] sm:$0xff]
          %v312 = vld [vmem:[%s201 + $0x1c0] sm:$0xff]
          %v313 = vld [vmem:[%s201 + $0x1c8] sm:$0xff]
          %v314 = vld [vmem:[%s201 + $0x1d0] sm:$0xff]
          %v315 = vld [vmem:[%s201 + $0x1d8] sm:$0xff]
          %v316 = vld [vmem:[%s201 + $0x1e0] sm:$0xff]
          %v317 = vld [vmem:[%s201 + $0x1e8] sm:$0xff]
          %v318 = vld [vmem:[%s201 + $0x1f0] sm:$0xff]
          %v319 = vld [vmem:[%s201 + $0x1f8] sm:$0xff]
          %v320 = vld [vmem:[%s201 + $0x200] sm:$0xff]
          %v321 = vld [vmem:[%s201 + $0x208] sm:$0xff]
          %v322 = vld [vmem:[%s201 + $0x210] sm:$0xff]
          %v323 = vld [vmem:[%s201 + $0x218] sm:$0xff]
          %v324 = vld [vmem:[%s201 + $0x220] sm:$0xff]
          %v325 = vld [vmem:[%s201 + $0x228] sm:$0xff]
          %v326 = vld [vmem:[%s201 + $0x230] sm:$0xff]
          %v327 = vld [vmem:[%s201 + $0x238] sm:$0xff]
          %v328 = vld [vmem:[%s201 + $0x240] sm:$0xff]
          %v329 = vld [vmem:[%s201 + $0x248] sm:$0xff]
          %v330 = vld [vmem:[%s201 + $0x250] sm:$0xff]
          %v331 = vld [vmem:[%s201 + $0x258] sm:$0xff]
          %v332 = vld [vmem:[%s201 + $0x260] sm:$0xff]
          %v333 = vld [vmem:[%s201 + $0x268] sm:$0xff]
          %v334 = vld [vmem:[%s201 + $0x270] sm:$0xff]
          %v335 = vld [vmem:[%s201 + $0x278] sm:$0xff]
          %v336 = vld [vmem:[%s201 + $0x280] sm:$0xff]
          %v337 = vld [vmem:[%s201 + $0x288] sm:$0xff]
          %v338 = vld [vmem:[%s201 + $0x290] sm:$0xff]
          %v339 = vld [vmem:[%s201 + $0x298] sm:$0xff]
          %v340 = vld [vmem:[%s201 + $0x2a0] sm:$0xff]
          %v341 = vld [vmem:[%s201 + $0x2a8] sm:$0xff]
          %v342 = vld [vmem:[%s201 + $0x2b0] sm:$0xff]
          %v343 = vld [vmem:[%s201 + $0x2b8] sm:$0xff]
          %v344 = vld [vmem:[%s201 + $0x2c0] sm:$0xff]
          %v345 = vld [vmem:[%s201 + $0x2c8] sm:$0xff]
          %v346 = vld [vmem:[%s201 + $0x2d0] sm:$0xff]
          %v347 = vld [vmem:[%s201 + $0x2d8] sm:$0xff]
          %v348 = vld [vmem:[%s201 + $0x2e0] sm:$0xff]
          %v349 = vld [vmem:[%s201 + $0x2e8] sm:$0xff]
          %v350 = vld [vmem:[%s201 + $0x2f0] sm:$0xff]
          %v351 = vld [vmem:[%s201 + $0x2f8] sm:$0xff]
          %v352 = vld [vmem:[%s201 + $0x300] sm:$0xff]
          %v353 = vld [vmem:[%s201 + $0x308] sm:$0xff]
          %v354 = vld [vmem:[%s201 + $0x310] sm:$0xff]
          %v355 = vld [vmem:[%s201 + $0x318] sm:$0xff]
          %v356 = vld [vmem:[%s201 + $0x320] sm:$0xff]
          %v357 = vld [vmem:[%s201 + $0x328] sm:$0xff]
          %v358 = vld [vmem:[%s201 + $0x330] sm:$0xff]
          %v359 = vld [vmem:[%s201 + $0x338] sm:$0xff]
          %v360 = vld [vmem:[%s201 + $0x340] sm:$0xff]
          %v361 = vld [vmem:[%s201 + $0x348] sm:$0xff]
          %v362 = vld [vmem:[%s201 + $0x350] sm:$0xff]
          %v363 = vld [vmem:[%s201 + $0x358] sm:$0xff]
          %v364 = vld [vmem:[%s201 + $0x360] sm:$0xff]
          %v365 = vld [vmem:[%s201 + $0x368] sm:$0xff]
          %v366 = vld [vmem:[%s201 + $0x370] sm:$0xff]
          %v367 = vld [vmem:[%s201 + $0x378] sm:$0xff]
          %v368 = vld [vmem:[%s201 + $0x380] sm:$0xff]
          %v369 = vld [vmem:[%s201 + $0x388] sm:$0xff]
          %v370 = vld [vmem:[%s201 + $0x390] sm:$0xff]
          %v371 = vld [vmem:[%s201 + $0x398] sm:$0xff]
          %v372 = vld [vmem:[%s201 + $0x3a0] sm:$0xff]
          %v373 = vld [vmem:[%s201 + $0x3a8] sm:$0xff]
          %v374 = vld [vmem:[%s201 + $0x3b0] sm:$0xff]
          %v375 = vld [vmem:[%s201 + $0x3b8] sm:$0xff]
          %v376 = vld [vmem:[%s201 + $0x3c0] sm:$0xff]
          %v377 = vld [vmem:[%s201 + $0x3c8] sm:$0xff]
          %v378 = vld [vmem:[%s201 + $0x3d0] sm:$0xff]
          %v379 = vld [vmem:[%s201 + $0x3d8] sm:$0xff]
          %v380 = vld [vmem:[%s201 + $0x3e0] sm:$0xff]
          %v381 = vld [vmem:[%s201 + $0x3e8] sm:$0xff]
          %v382 = vld [vmem:[%s201 + $0x3f0] sm:$0xff]
          %v383 = vld [vmem:[%s201 + $0x3f8] sm:$0xff]
          %v384 = vld [vmem:[%s201 + $0x400] sm:$0xff]
          %v385 = vld [vmem:[%s201 + $0x408] sm:$0xff]
          %v386 = vld [vmem:[%s201 + $0x410] sm:$0xff]
          %v387 = vld [vmem:[%s201 + $0x418] sm:$0xff]
          %v388 = vld [vmem:[%s201 + $0x420] sm:$0xff]
          %v389 = vld [vmem:[%s201 + $0x428] sm:$0xff]
          %v390 = vld [vmem:[%s201 + $0x430] sm:$0xff]
          %v391 = vld [vmem:[%s201 + $0x438] sm:$0xff]
          %v392 = vld [vmem:[%s201 + $0x440] sm:$0xff]
          %v393 = vld [vmem:[%s201 + $0x448] sm:$0xff]
          %v394 = vld [vmem:[%s201 + $0x450] sm:$0xff]
          %v395 = vld [vmem:[%s201 + $0x458] sm:$0xff]
          %v396 = vld [vmem:[%s201 + $0x460] sm:$0xff]
          %v397 = vld [vmem:[%s201 + $0x468] sm:$0xff]
          %v398 = vld [vmem:[%s201 + $0x470] sm:$0xff]
          %v399 = vld [vmem:[%s201 + $0x478] sm:$0xff]
          %v400 = vld [vmem:[%s201 + $0x480] sm:$0xff]
          %v401 = vld [vmem:[%s201 + $0x488] sm:$0xff]
          %v402 = vld [vmem:[%s201 + $0x490] sm:$0xff]
          %v403 = vld [vmem:[%s201 + $0x498] sm:$0xff]
          %v404 = vld [vmem:[%s201 + $0x4a0] sm:$0xff]
          %v405 = vld [vmem:[%s201 + $0x4a8] sm:$0xff]
          %v406 = vld [vmem:[%s201 + $0x4b0] sm:$0xff]
          %v407 = vld [vmem:[%s201 + $0x4b8] sm:$0xff]
          %v408 = vld [vmem:[%s201 + $0x4c0] sm:$0xff]
          %v409 = vld [vmem:[%s201 + $0x4c8] sm:$0xff]
          %v410 = vld [vmem:[%s201 + $0x4d0] sm:$0xff]
          %v411 = vld [vmem:[%s201 + $0x4d8] sm:$0xff]
          %v412 = vld [vmem:[%s201 + $0x4e0] sm:$0xff]
          %v413 = vld [vmem:[%s201 + $0x4e8] sm:$0xff]
          %v414 = vld [vmem:[%s201 + $0x4f0] sm:$0xff]
          %v415 = vld [vmem:[%s201 + $0x4f8] sm:$0xff]
          %v416 = vld [vmem:[%s201 + $0x500] sm:$0xff]
          %v417 = vld [vmem:[%s201 + $0x508] sm:$0xff]
          %v418 = vld [vmem:[%s201 + $0x510] sm:$0xff]
          %v419 = vld [vmem:[%s201 + $0x518] sm:$0xff]
          %v420 = vld [vmem:[%s201 + $0x520] sm:$0xff]
          %v421 = vld [vmem:[%s201 + $0x528] sm:$0xff]
          %v422 = vld [vmem:[%s201 + $0x530] sm:$0xff]
          %v423 = vld [vmem:[%s201 + $0x538] sm:$0xff]
          %v424 = vld [vmem:[%s201 + $0x540] sm:$0xff]
          %v425 = vld [vmem:[%s201 + $0x548] sm:$0xff]
          %v426 = vld [vmem:[%s201 + $0x550] sm:$0xff]
          %v427 = vld [vmem:[%s201 + $0x558] sm:$0xff]
          %v428 = vld [vmem:[%s201 + $0x560] sm:$0xff]
          %v429 = vld [vmem:[%s201 + $0x568] sm:$0xff]
          %v430 = vld [vmem:[%s201 + $0x570] sm:$0xff]
          %v431 = vld [vmem:[%s201 + $0x578] sm:$0xff]
          %v432 = vld [vmem:[%s201 + $0x580] sm:$0xff]
          %v433 = vld [vmem:[%s201 + $0x588] sm:$0xff]
          %v434 = vld [vmem:[%s201 + $0x590] sm:$0xff]
          %v435 = vld [vmem:[%s201 + $0x598] sm:$0xff]
          %v436 = vld [vmem:[%s201 + $0x5a0] sm:$0xff]
          %v437 = vld [vmem:[%s201 + $0x5a8] sm:$0xff]
          %v438 = vld [vmem:[%s201 + $0x5b0] sm:$0xff]
          %v439 = vld [vmem:[%s201 + $0x5b8] sm:$0xff]
          %v440 = vld [vmem:[%s201 + $0x5c0] sm:$0xff]
          %v441 = vld [vmem:[%s201 + $0x5c8] sm:$0xff]
          %v442 = vld [vmem:[%s201 + $0x5d0] sm:$0xff]
          %v443 = vld [vmem:[%s201 + $0x5d8] sm:$0xff]
          %v444 = vld [vmem:[%s201 + $0x5e0] sm:$0xff]
          %v445 = vld [vmem:[%s201 + $0x5e8] sm:$0xff]
          %v446 = vld [vmem:[%s201 + $0x5f0] sm:$0xff]
          %v447 = vld [vmem:[%s201 + $0x5f8] sm:$0xff]
          %v448 = vld [vmem:[%s201 + $0x600] sm:$0xff]
          %v449 = vld [vmem:[%s201 + $0x608] sm:$0xff]
          %v450 = vld [vmem:[%s201 + $0x610] sm:$0xff]
          %v451 = vld [vmem:[%s201 + $0x618] sm:$0xff]
          %v452 = vld [vmem:[%s201 + $0x620] sm:$0xff]
          %v453 = vld [vmem:[%s201 + $0x628] sm:$0xff]
          %v454 = vld [vmem:[%s201 + $0x630] sm:$0xff]
          %v455 = vld [vmem:[%s201 + $0x638] sm:$0xff]
          %v456 = vld [vmem:[%s201 + $0x640] sm:$0xff]
          %v457 = vld [vmem:[%s201 + $0x648] sm:$0xff]
          %v458 = vld [vmem:[%s201 + $0x650] sm:$0xff]
          %v459 = vld [vmem:[%s201 + $0x658] sm:$0xff]
          %v460 = vld [vmem:[%s201 + $0x660] sm:$0xff]
          %v461 = vld [vmem:[%s201 + $0x668] sm:$0xff]
          %v462 = vld [vmem:[%s201 + $0x670] sm:$0xff]
          %v463 = vld [vmem:[%s201 + $0x678] sm:$0xff]
          %v464 = vld [vmem:[%s201 + $0x680] sm:$0xff]
          %v465 = vld [vmem:[%s201 + $0x688] sm:$0xff]
          %v466 = vld [vmem:[%s201 + $0x690] sm:$0xff]
          %v467 = vld [vmem:[%s201 + $0x698] sm:$0xff]
          %v468 = vld [vmem:[%s201 + $0x6a0] sm:$0xff]
          %v469 = vld [vmem:[%s201 + $0x6a8] sm:$0xff]
          %v470 = vld [vmem:[%s201 + $0x6b0] sm:$0xff]
          %v471 = vld [vmem:[%s201 + $0x6b8] sm:$0xff]
          %v472 = vld [vmem:[%s201 + $0x6c0] sm:$0xff]
          %v473 = vld [vmem:[%s201 + $0x6c8] sm:$0xff]
          %v474 = vld [vmem:[%s201 + $0x6d0] sm:$0xff]
          %v475 = vld [vmem:[%s201 + $0x6d8] sm:$0xff]
          %v476 = vld [vmem:[%s201 + $0x6e0] sm:$0xff]
          %v477 = vld [vmem:[%s201 + $0x6e8] sm:$0xff]
          %v478 = vld [vmem:[%s201 + $0x6f0] sm:$0xff]
          %v479 = vld [vmem:[%s201 + $0x6f8] sm:$0xff]
          %v480 = vld [vmem:[%s201 + $0x700] sm:$0xff]
          %v481 = vld [vmem:[%s201 + $0x708] sm:$0xff]
          %v482 = vld [vmem:[%s201 + $0x710] sm:$0xff]
          %v483 = vld [vmem:[%s201 + $0x718] sm:$0xff]
          %v484 = vld [vmem:[%s201 + $0x720] sm:$0xff]
          %v485 = vld [vmem:[%s201 + $0x728] sm:$0xff]
          %v486 = vld [vmem:[%s201 + $0x730] sm:$0xff]
          %v487 = vld [vmem:[%s201 + $0x738] sm:$0xff]
          %v488 = vld [vmem:[%s201 + $0x740] sm:$0xff]
          %v489 = vld [vmem:[%s201 + $0x748] sm:$0xff]
          %v490 = vld [vmem:[%s201 + $0x750] sm:$0xff]
          %v491 = vld [vmem:[%s201 + $0x758] sm:$0xff]
          %v492 = vld [vmem:[%s201 + $0x760] sm:$0xff]
          %v493 = vld [vmem:[%s201 + $0x768] sm:$0xff]
          %v494 = vld [vmem:[%s201 + $0x770] sm:$0xff]
          %v495 = vld [vmem:[%s201 + $0x778] sm:$0xff]
          %v496 = vld [vmem:[%s201 + $0x780] sm:$0xff]
          %v497 = vld [vmem:[%s201 + $0x788] sm:$0xff]
          %v498 = vld [vmem:[%s201 + $0x790] sm:$0xff]
          %v499 = vld [vmem:[%s201 + $0x798] sm:$0xff]
          %v500 = vld [vmem:[%s201 + $0x7a0] sm:$0xff]
          %v501 = vld [vmem:[%s201 + $0x7a8] sm:$0xff]
          %v502 = vld [vmem:[%s201 + $0x7b0] sm:$0xff]
          %v503 = vld [vmem:[%s201 + $0x7b8] sm:$0xff]
          %v504 = vld [vmem:[%s201 + $0x7c0] sm:$0xff]
          %v505 = vld [vmem:[%s201 + $0x7c8] sm:$0xff]
          %v506 = vld [vmem:[%s201 + $0x7d0] sm:$0xff]
          %v507 = vld [vmem:[%s201 + $0x7d8] sm:$0xff]
          %v508 = vld [vmem:[%s201 + $0x7e0] sm:$0xff]
          %v509 = vld [vmem:[%s201 + $0x7e8] sm:$0xff]
          %v510 = vld [vmem:[%s201 + $0x7f0] sm:$0xff]
          %v511 = vld [vmem:[%s201 + $0x7f8] sm:$0xff]
          %v512 = vld [vmem:[%s210] sm:$0xff]
          %v513 = vld [vmem:[%s210 + $0x8] sm:$0xff]
          %v514 = vld [vmem:[%s210 + $0x10] sm:$0xff]
          %v515 = vld [vmem:[%s210 + $0x18] sm:$0xff]
          %v516 = vld [vmem:[%s210 + $0x20] sm:$0xff]
          %v517 = vld [vmem:[%s210 + $0x28] sm:$0xff]
          %v518 = vld [vmem:[%s210 + $0x30] sm:$0xff]
          %v519 = vld [vmem:[%s210 + $0x38] sm:$0xff]
          %v520 = vld [vmem:[%s210 + $0x40] sm:$0xff]
          %v521 = vld [vmem:[%s210 + $0x48] sm:$0xff]
          %v522 = vld [vmem:[%s210 + $0x50] sm:$0xff]
          %v523 = vld [vmem:[%s210 + $0x58] sm:$0xff]
          %v524 = vld [vmem:[%s210 + $0x60] sm:$0xff]
          %v525 = vld [vmem:[%s210 + $0x68] sm:$0xff]
          %v526 = vld [vmem:[%s210 + $0x70] sm:$0xff]
          %v527 = vld [vmem:[%s210 + $0x78] sm:$0xff]
          %v528 = vld [vmem:[%s210 + $0x80] sm:$0xff]
          %v529 = vld [vmem:[%s210 + $0x88] sm:$0xff]
          %v530 = vld [vmem:[%s210 + $0x90] sm:$0xff]
          %v531 = vld [vmem:[%s210 + $0x98] sm:$0xff]
          %v532 = vld [vmem:[%s210 + $0xa0] sm:$0xff]
          %v533 = vld [vmem:[%s210 + $0xa8] sm:$0xff]
          %v534 = vld [vmem:[%s210 + $0xb0] sm:$0xff]
          %v535 = vld [vmem:[%s210 + $0xb8] sm:$0xff]
          %v536 = vld [vmem:[%s210 + $0xc0] sm:$0xff]
          %v537 = vld [vmem:[%s210 + $0xc8] sm:$0xff]
          %v538 = vld [vmem:[%s210 + $0xd0] sm:$0xff]
          %v539 = vld [vmem:[%s210 + $0xd8] sm:$0xff]
          %v540 = vld [vmem:[%s210 + $0xe0] sm:$0xff]
          %v541 = vld [vmem:[%s210 + $0xe8] sm:$0xff]
          %v542 = vld [vmem:[%s210 + $0xf0] sm:$0xff]
          %v543 = vld [vmem:[%s210 + $0xf8] sm:$0xff]
          %v544 = vld [vmem:[%s210 + $0x100] sm:$0xff]
          %v545 = vld [vmem:[%s210 + $0x108] sm:$0xff]
          %v546 = vld [vmem:[%s210 + $0x110] sm:$0xff]
          %v547 = vld [vmem:[%s210 + $0x118] sm:$0xff]
          %v548 = vld [vmem:[%s210 + $0x120] sm:$0xff]
          %v549 = vld [vmem:[%s210 + $0x128] sm:$0xff]
          %v550 = vld [vmem:[%s210 + $0x130] sm:$0xff]
          %v551 = vld [vmem:[%s210 + $0x138] sm:$0xff]
          %v552 = vld [vmem:[%s210 + $0x140] sm:$0xff]
          %v553 = vld [vmem:[%s210 + $0x148] sm:$0xff]
          %v554 = vld [vmem:[%s210 + $0x150] sm:$0xff]
          %v555 = vld [vmem:[%s210 + $0x158] sm:$0xff]
          %v556 = vld [vmem:[%s210 + $0x160] sm:$0xff]
          %v557 = vld [vmem:[%s210 + $0x168] sm:$0xff]
          %v558 = vld [vmem:[%s210 + $0x170] sm:$0xff]
          %v559 = vld [vmem:[%s210 + $0x178] sm:$0xff]
          %v560 = vld [vmem:[%s210 + $0x180] sm:$0xff]
          %v561 = vld [vmem:[%s210 + $0x188] sm:$0xff]
          %v562 = vld [vmem:[%s210 + $0x190] sm:$0xff]
          %v563 = vld [vmem:[%s210 + $0x198] sm:$0xff]
          %v564 = vld [vmem:[%s210 + $0x1a0] sm:$0xff]
          %v565 = vld [vmem:[%s210 + $0x1a8] sm:$0xff]
          %v566 = vld [vmem:[%s210 + $0x1b0] sm:$0xff]
          %v567 = vld [vmem:[%s210 + $0x1b8] sm:$0xff]
          %v568 = vld [vmem:[%s210 + $0x1c0] sm:$0xff]
          %v569 = vld [vmem:[%s210 + $0x1c8] sm:$0xff]
          %v570 = vld [vmem:[%s210 + $0x1d0] sm:$0xff]
          %v571 = vld [vmem:[%s210 + $0x1d8] sm:$0xff]
          %v572 = vld [vmem:[%s210 + $0x1e0] sm:$0xff]
          %v573 = vld [vmem:[%s210 + $0x1e8] sm:$0xff]
          %v574 = vld [vmem:[%s210 + $0x1f0] sm:$0xff]
          %v575 = vld [vmem:[%s210 + $0x1f8] sm:$0xff]
          %v576 = vld [vmem:[%s210 + $0x200] sm:$0xff]
          %v577 = vld [vmem:[%s210 + $0x208] sm:$0xff]
          %v578 = vld [vmem:[%s210 + $0x210] sm:$0xff]
          %v579 = vld [vmem:[%s210 + $0x218] sm:$0xff]
          %v580 = vld [vmem:[%s210 + $0x220] sm:$0xff]
          %v581 = vld [vmem:[%s210 + $0x228] sm:$0xff]
          %v582 = vld [vmem:[%s210 + $0x230] sm:$0xff]
          %v583 = vld [vmem:[%s210 + $0x238] sm:$0xff]
          %v584 = vld [vmem:[%s210 + $0x240] sm:$0xff]
          %v585 = vld [vmem:[%s210 + $0x248] sm:$0xff]
          %v586 = vld [vmem:[%s210 + $0x250] sm:$0xff]
          %v587 = vld [vmem:[%s210 + $0x258] sm:$0xff]
          %v588 = vld [vmem:[%s210 + $0x260] sm:$0xff]
          %v589 = vld [vmem:[%s210 + $0x268] sm:$0xff]
          %v590 = vld [vmem:[%s210 + $0x270] sm:$0xff]
          %v591 = vld [vmem:[%s210 + $0x278] sm:$0xff]
          %v592 = vld [vmem:[%s210 + $0x280] sm:$0xff]
          %v593 = vld [vmem:[%s210 + $0x288] sm:$0xff]
          %v594 = vld [vmem:[%s210 + $0x290] sm:$0xff]
          %v595 = vld [vmem:[%s210 + $0x298] sm:$0xff]
          %v596 = vld [vmem:[%s210 + $0x2a0] sm:$0xff]
          %v597 = vld [vmem:[%s210 + $0x2a8] sm:$0xff]
          %v598 = vld [vmem:[%s210 + $0x2b0] sm:$0xff]
          %v599 = vld [vmem:[%s210 + $0x2b8] sm:$0xff]
          %v600 = vld [vmem:[%s210 + $0x2c0] sm:$0xff]
          %v601 = vld [vmem:[%s210 + $0x2c8] sm:$0xff]
          %v602 = vld [vmem:[%s210 + $0x2d0] sm:$0xff]
          %v603 = vld [vmem:[%s210 + $0x2d8] sm:$0xff]
          %v604 = vld [vmem:[%s210 + $0x2e0] sm:$0xff]
          %v605 = vld [vmem:[%s210 + $0x2e8] sm:$0xff]
          %v606 = vld [vmem:[%s210 + $0x2f0] sm:$0xff]
          %v607 = vld [vmem:[%s210 + $0x2f8] sm:$0xff]
          %v608 = vld [vmem:[%s210 + $0x300] sm:$0xff]
          %v609 = vld [vmem:[%s210 + $0x308] sm:$0xff]
          %v610 = vld [vmem:[%s210 + $0x310] sm:$0xff]
          %v611 = vld [vmem:[%s210 + $0x318] sm:$0xff]
          %v612 = vld [vmem:[%s210 + $0x320] sm:$0xff]
          %v613 = vld [vmem:[%s210 + $0x328] sm:$0xff]
          %v614 = vld [vmem:[%s210 + $0x330] sm:$0xff]
          %v615 = vld [vmem:[%s210 + $0x338] sm:$0xff]
          %v616 = vld [vmem:[%s210 + $0x340] sm:$0xff]
          %v617 = vld [vmem:[%s210 + $0x348] sm:$0xff]
          %v618 = vld [vmem:[%s210 + $0x350] sm:$0xff]
          %v619 = vld [vmem:[%s210 + $0x358] sm:$0xff]
          %v620 = vld [vmem:[%s210 + $0x360] sm:$0xff]
          %v621 = vld [vmem:[%s210 + $0x368] sm:$0xff]
          %v622 = vld [vmem:[%s210 + $0x370] sm:$0xff]
          %v623 = vld [vmem:[%s210 + $0x378] sm:$0xff]
          %v624 = vld [vmem:[%s210 + $0x380] sm:$0xff]
          %v625 = vld [vmem:[%s210 + $0x388] sm:$0xff]
          %v626 = vld [vmem:[%s210 + $0x390] sm:$0xff]
          %v627 = vld [vmem:[%s210 + $0x398] sm:$0xff]
          %v628 = vld [vmem:[%s210 + $0x3a0] sm:$0xff]
          %v629 = vld [vmem:[%s210 + $0x3a8] sm:$0xff]
          %v630 = vld [vmem:[%s210 + $0x3b0] sm:$0xff]
          %v631 = vld [vmem:[%s210 + $0x3b8] sm:$0xff]
          %v632 = vld [vmem:[%s210 + $0x3c0] sm:$0xff]
          %v633 = vld [vmem:[%s210 + $0x3c8] sm:$0xff]
          %v634 = vld [vmem:[%s210 + $0x3d0] sm:$0xff]
          %v635 = vld [vmem:[%s210 + $0x3d8] sm:$0xff]
          %v636 = vld [vmem:[%s210 + $0x3e0] sm:$0xff]
          %v637 = vld [vmem:[%s210 + $0x3e8] sm:$0xff]
          %v638 = vld [vmem:[%s210 + $0x3f0] sm:$0xff]
          %v639 = vld [vmem:[%s210 + $0x3f8] sm:$0xff]
          %v640 = vld [vmem:[%s210 + $0x400] sm:$0xff]
          %v641 = vld [vmem:[%s210 + $0x408] sm:$0xff]
          %v642 = vld [vmem:[%s210 + $0x410] sm:$0xff]
          %v643 = vld [vmem:[%s210 + $0x418] sm:$0xff]
          %v644 = vld [vmem:[%s210 + $0x420] sm:$0xff]
          %v645 = vld [vmem:[%s210 + $0x428] sm:$0xff]
          %v646 = vld [vmem:[%s210 + $0x430] sm:$0xff]
          %v647 = vld [vmem:[%s210 + $0x438] sm:$0xff]
          %v648 = vld [vmem:[%s210 + $0x440] sm:$0xff]
          %v649 = vld [vmem:[%s210 + $0x448] sm:$0xff]
          %v650 = vld [vmem:[%s210 + $0x450] sm:$0xff]
          %v651 = vld [vmem:[%s210 + $0x458] sm:$0xff]
          %v652 = vld [vmem:[%s210 + $0x460] sm:$0xff]
          %v653 = vld [vmem:[%s210 + $0x468] sm:$0xff]
          %v654 = vld [vmem:[%s210 + $0x470] sm:$0xff]
          %v655 = vld [vmem:[%s210 + $0x478] sm:$0xff]
          %v656 = vld [vmem:[%s210 + $0x480] sm:$0xff]
          %v657 = vld [vmem:[%s210 + $0x488] sm:$0xff]
          %v658 = vld [vmem:[%s210 + $0x490] sm:$0xff]
          %v659 = vld [vmem:[%s210 + $0x498] sm:$0xff]
          %v660 = vld [vmem:[%s210 + $0x4a0] sm:$0xff]
          %v661 = vld [vmem:[%s210 + $0x4a8] sm:$0xff]
          %v662 = vld [vmem:[%s210 + $0x4b0] sm:$0xff]
          %v663 = vld [vmem:[%s210 + $0x4b8] sm:$0xff]
          %v664 = vld [vmem:[%s210 + $0x4c0] sm:$0xff]
          %v665 = vld [vmem:[%s210 + $0x4c8] sm:$0xff]
          %v666 = vld [vmem:[%s210 + $0x4d0] sm:$0xff]
          %v667 = vld [vmem:[%s210 + $0x4d8] sm:$0xff]
          %v668 = vld [vmem:[%s210 + $0x4e0] sm:$0xff]
          %v669 = vld [vmem:[%s210 + $0x4e8] sm:$0xff]
          %v670 = vld [vmem:[%s210 + $0x4f0] sm:$0xff]
          %v671 = vld [vmem:[%s210 + $0x4f8] sm:$0xff]
          %v672 = vld [vmem:[%s210 + $0x500] sm:$0xff]
          %v673 = vld [vmem:[%s210 + $0x508] sm:$0xff]
          %v674 = vld [vmem:[%s210 + $0x510] sm:$0xff]
          %v675 = vld [vmem:[%s210 + $0x518] sm:$0xff]
          %v676 = vld [vmem:[%s210 + $0x520] sm:$0xff]
          %v677 = vld [vmem:[%s210 + $0x528] sm:$0xff]
          %v678 = vld [vmem:[%s210 + $0x530] sm:$0xff]
          %v679 = vld [vmem:[%s210 + $0x538] sm:$0xff]
          %v680 = vld [vmem:[%s210 + $0x540] sm:$0xff]
          %v681 = vld [vmem:[%s210 + $0x548] sm:$0xff]
          %v682 = vld [vmem:[%s210 + $0x550] sm:$0xff]
          %v683 = vld [vmem:[%s210 + $0x558] sm:$0xff]
          %v684 = vld [vmem:[%s210 + $0x560] sm:$0xff]
          %v685 = vld [vmem:[%s210 + $0x568] sm:$0xff]
          %v686 = vld [vmem:[%s210 + $0x570] sm:$0xff]
          %v687 = vld [vmem:[%s210 + $0x578] sm:$0xff]
          %v688 = vld [vmem:[%s210 + $0x580] sm:$0xff]
          %v689 = vld [vmem:[%s210 + $0x588] sm:$0xff]
          %v690 = vld [vmem:[%s210 + $0x590] sm:$0xff]
          %v691 = vld [vmem:[%s210 + $0x598] sm:$0xff]
          %v692 = vld [vmem:[%s210 + $0x5a0] sm:$0xff]
          %v693 = vld [vmem:[%s210 + $0x5a8] sm:$0xff]
          %v694 = vld [vmem:[%s210 + $0x5b0] sm:$0xff]
          %v695 = vld [vmem:[%s210 + $0x5b8] sm:$0xff]
          %v696 = vld [vmem:[%s210 + $0x5c0] sm:$0xff]
          %v697 = vld [vmem:[%s210 + $0x5c8] sm:$0xff]
          %v698 = vld [vmem:[%s210 + $0x5d0] sm:$0xff]
          %v699 = vld [vmem:[%s210 + $0x5d8] sm:$0xff]
          %v700 = vld [vmem:[%s210 + $0x5e0] sm:$0xff]
          %v701 = vld [vmem:[%s210 + $0x5e8] sm:$0xff]
          %v702 = vld [vmem:[%s210 + $0x5f0] sm:$0xff]
          %v703 = vld [vmem:[%s210 + $0x5f8] sm:$0xff]
          %v704 = vld [vmem:[%s210 + $0x600] sm:$0xff]
          %v705 = vld [vmem:[%s210 + $0x608] sm:$0xff]
          %v706 = vld [vmem:[%s210 + $0x610] sm:$0xff]
          %v707 = vld [vmem:[%s210 + $0x618] sm:$0xff]
          %v708 = vld [vmem:[%s210 + $0x620] sm:$0xff]
          %v709 = vld [vmem:[%s210 + $0x628] sm:$0xff]
          %v710 = vld [vmem:[%s210 + $0x630] sm:$0xff]
          %v711 = vld [vmem:[%s210 + $0x638] sm:$0xff]
          %v712 = vld [vmem:[%s210 + $0x640] sm:$0xff]
          %v713 = vld [vmem:[%s210 + $0x648] sm:$0xff]
          %v714 = vld [vmem:[%s210 + $0x650] sm:$0xff]
          %v715 = vld [vmem:[%s210 + $0x658] sm:$0xff]
          %v716 = vld [vmem:[%s210 + $0x660] sm:$0xff]
          %v717 = vld [vmem:[%s210 + $0x668] sm:$0xff]
          %v718 = vld [vmem:[%s210 + $0x670] sm:$0xff]
          %v719 = vld [vmem:[%s210 + $0x678] sm:$0xff]
          %v720 = vld [vmem:[%s210 + $0x680] sm:$0xff]
          %v721 = vld [vmem:[%s210 + $0x688] sm:$0xff]
          %v722 = vld [vmem:[%s210 + $0x690] sm:$0xff]
          %v723 = vld [vmem:[%s210 + $0x698] sm:$0xff]
          %v724 = vld [vmem:[%s210 + $0x6a0] sm:$0xff]
          %v725 = vld [vmem:[%s210 + $0x6a8] sm:$0xff]
          %v726 = vld [vmem:[%s210 + $0x6b0] sm:$0xff]
          %v727 = vld [vmem:[%s210 + $0x6b8] sm:$0xff]
          %v728 = vld [vmem:[%s210 + $0x6c0] sm:$0xff]
          %v729 = vld [vmem:[%s210 + $0x6c8] sm:$0xff]
          %v730 = vld [vmem:[%s210 + $0x6d0] sm:$0xff]
          %v731 = vld [vmem:[%s210 + $0x6d8] sm:$0xff]
          %v732 = vld [vmem:[%s210 + $0x6e0] sm:$0xff]
          %v733 = vld [vmem:[%s210 + $0x6e8] sm:$0xff]
          %v734 = vld [vmem:[%s210 + $0x6f0] sm:$0xff]
          %v735 = vld [vmem:[%s210 + $0x6f8] sm:$0xff]
          %v736 = vld [vmem:[%s210 + $0x700] sm:$0xff]
          %v737 = vld [vmem:[%s210 + $0x708] sm:$0xff]
          %v738 = vld [vmem:[%s210 + $0x710] sm:$0xff]
          %v739 = vld [vmem:[%s210 + $0x718] sm:$0xff]
          %v740 = vld [vmem:[%s210 + $0x720] sm:$0xff]
          %v741 = vld [vmem:[%s210 + $0x728] sm:$0xff]
          %v742 = vld [vmem:[%s210 + $0x730] sm:$0xff]
          %v743 = vld [vmem:[%s210 + $0x738] sm:$0xff]
          %v744 = vld [vmem:[%s210 + $0x740] sm:$0xff]
          %v745 = vld [vmem:[%s210 + $0x748] sm:$0xff]
          %v746 = vld [vmem:[%s210 + $0x750] sm:$0xff]
          %v747 = vld [vmem:[%s210 + $0x758] sm:$0xff]
          %v748 = vld [vmem:[%s210 + $0x760] sm:$0xff]
          %v749 = vld [vmem:[%s210 + $0x768] sm:$0xff]
          %v750 = vld [vmem:[%s210 + $0x770] sm:$0xff]
          %v751 = vld [vmem:[%s210 + $0x778] sm:$0xff]
          %v752 = vld [vmem:[%s210 + $0x780] sm:$0xff]
          %v753 = vld [vmem:[%s210 + $0x788] sm:$0xff]
          %v754 = vld [vmem:[%s210 + $0x790] sm:$0xff]
          %v755 = vld [vmem:[%s210 + $0x798] sm:$0xff]
          %v756 = vld [vmem:[%s210 + $0x7a0] sm:$0xff]
          %v757 = vld [vmem:[%s210 + $0x7a8] sm:$0xff]
          %v758 = vld [vmem:[%s210 + $0x7b0] sm:$0xff]
          %v759 = vld [vmem:[%s210 + $0x7b8] sm:$0xff]
          %v760 = vld [vmem:[%s210 + $0x7c0] sm:$0xff]
          %v761 = vld [vmem:[%s210 + $0x7c8] sm:$0xff]
          %v762 = vld [vmem:[%s210 + $0x7d0] sm:$0xff]
          %v763 = vld [vmem:[%s210 + $0x7d8] sm:$0xff]
          %v764 = vld [vmem:[%s210 + $0x7e0] sm:$0xff]
          %v765 = vld [vmem:[%s210 + $0x7e8] sm:$0xff]
          %v766 = vld [vmem:[%s210 + $0x7f0] sm:$0xff]
          %v767 = vld [vmem:[%s210 + $0x7f8] sm:$0xff]
          %v768 = vsub.f32 %v256, %v512
          %v769 = vsub.f32 %v257, %v513
          %v770 = vsub.f32 %v258, %v514
          %v771 = vsub.f32 %v259, %v515
          %v772 = vsub.f32 %v260, %v516
          %v773 = vsub.f32 %v261, %v517
          %v774 = vsub.f32 %v262, %v518
          %v775 = vsub.f32 %v263, %v519
          %v776 = vsub.f32 %v264, %v520
          %v777 = vsub.f32 %v265, %v521
          %v778 = vsub.f32 %v266, %v522
          %v779 = vsub.f32 %v267, %v523
          %v780 = vsub.f32 %v268, %v524
          %v781 = vsub.f32 %v269, %v525
          %v782 = vsub.f32 %v270, %v526
          %v783 = vsub.f32 %v271, %v527
          %v784 = vsub.f32 %v272, %v528
          %v785 = vsub.f32 %v273, %v529
          %v786 = vsub.f32 %v274, %v530
          %v787 = vsub.f32 %v275, %v531
          %v788 = vsub.f32 %v276, %v532
          %v789 = vsub.f32 %v277, %v533
          %v790 = vsub.f32 %v278, %v534
          %v791 = vsub.f32 %v279, %v535
          %v792 = vsub.f32 %v280, %v536
          %v793 = vsub.f32 %v281, %v537
          %v794 = vsub.f32 %v282, %v538
          %v795 = vsub.f32 %v283, %v539
          %v796 = vsub.f32 %v284, %v540
          %v797 = vsub.f32 %v285, %v541
          %v798 = vsub.f32 %v286, %v542
          %v799 = vsub.f32 %v287, %v543
          %v800 = vsub.f32 %v288, %v544
          %v801 = vsub.f32 %v289, %v545
          %v802 = vsub.f32 %v290, %v546
          %v803 = vsub.f32 %v291, %v547
          %v804 = vsub.f32 %v292, %v548
          %v805 = vsub.f32 %v293, %v549
          %v806 = vsub.f32 %v294, %v550
          %v807 = vsub.f32 %v295, %v551
          %v808 = vsub.f32 %v296, %v552
          %v809 = vsub.f32 %v297, %v553
          %v810 = vsub.f32 %v298, %v554
          %v811 = vsub.f32 %v299, %v555
          %v812 = vsub.f32 %v300, %v556
          %v813 = vsub.f32 %v301, %v557
          %v814 = vsub.f32 %v302, %v558
          %v815 = vsub.f32 %v303, %v559
          %v816 = vsub.f32 %v304, %v560
          %v817 = vsub.f32 %v305, %v561
          %v818 = vsub.f32 %v306, %v562
          %v819 = vsub.f32 %v307, %v563
          %v820 = vsub.f32 %v308, %v564
          %v821 = vsub.f32 %v309, %v565
          %v822 = vsub.f32 %v310, %v566
          %v823 = vsub.f32 %v311, %v567
          %v824 = vsub.f32 %v312, %v568
          %v825 = vsub.f32 %v313, %v569
          %v826 = vsub.f32 %v314, %v570
          %v827 = vsub.f32 %v315, %v571
          %v828 = vsub.f32 %v316, %v572
          %v829 = vsub.f32 %v317, %v573
          %v830 = vsub.f32 %v318, %v574
          %v831 = vsub.f32 %v319, %v575
          %v832 = vsub.f32 %v320, %v576
          %v833 = vsub.f32 %v321, %v577
          %v834 = vsub.f32 %v322, %v578
          %v835 = vsub.f32 %v323, %v579
          %v836 = vsub.f32 %v324, %v580
          %v837 = vsub.f32 %v325, %v581
          %v838 = vsub.f32 %v326, %v582
          %v839 = vsub.f32 %v327, %v583
          %v840 = vsub.f32 %v328, %v584
          %v841 = vsub.f32 %v329, %v585
          %v842 = vsub.f32 %v330, %v586
          %v843 = vsub.f32 %v331, %v587
          %v844 = vsub.f32 %v332, %v588
          %v845 = vsub.f32 %v333, %v589
          %v846 = vsub.f32 %v334, %v590
          %v847 = vsub.f32 %v335, %v591
          %v848 = vsub.f32 %v336, %v592
          %v849 = vsub.f32 %v337, %v593
          %v850 = vsub.f32 %v338, %v594
          %v851 = vsub.f32 %v339, %v595
          %v852 = vsub.f32 %v340, %v596
          %v853 = vsub.f32 %v341, %v597
          %v854 = vsub.f32 %v342, %v598
          %v855 = vsub.f32 %v343, %v599
          %v856 = vsub.f32 %v344, %v600
          %v857 = vsub.f32 %v345, %v601
          %v858 = vsub.f32 %v346, %v602
          %v859 = vsub.f32 %v347, %v603
          %v860 = vsub.f32 %v348, %v604
          %v861 = vsub.f32 %v349, %v605
          %v862 = vsub.f32 %v350, %v606
          %v863 = vsub.f32 %v351, %v607
          %v864 = vsub.f32 %v352, %v608
          %v865 = vsub.f32 %v353, %v609
          %v866 = vsub.f32 %v354, %v610
          %v867 = vsub.f32 %v355, %v611
          %v868 = vsub.f32 %v356, %v612
          %v869 = vsub.f32 %v357, %v613
          %v870 = vsub.f32 %v358, %v614
          %v871 = vsub.f32 %v359, %v615
          %v872 = vsub.f32 %v360, %v616
          %v873 = vsub.f32 %v361, %v617
          %v874 = vsub.f32 %v362, %v618
          %v875 = vsub.f32 %v363, %v619
          %v876 = vsub.f32 %v364, %v620
          %v877 = vsub.f32 %v365, %v621
          %v878 = vsub.f32 %v366, %v622
          %v879 = vsub.f32 %v367, %v623
          %v880 = vsub.f32 %v368, %v624
          %v881 = vsub.f32 %v369, %v625
          %v882 = vsub.f32 %v370, %v626
          %v883 = vsub.f32 %v371, %v627
          %v884 = vsub.f32 %v372, %v628
          %v885 = vsub.f32 %v373, %v629
          %v886 = vsub.f32 %v374, %v630
          %v887 = vsub.f32 %v375, %v631
          %v888 = vsub.f32 %v376, %v632
          %v889 = vsub.f32 %v377, %v633
          %v890 = vsub.f32 %v378, %v634
          %v891 = vsub.f32 %v379, %v635
          %v892 = vsub.f32 %v380, %v636
          %v893 = vsub.f32 %v381, %v637
          %v894 = vsub.f32 %v382, %v638
          %v895 = vsub.f32 %v383, %v639
          %v896 = vsub.f32 %v384, %v640
          %v897 = vsub.f32 %v385, %v641
          %v898 = vsub.f32 %v386, %v642
          %v899 = vsub.f32 %v387, %v643
          %v900 = vsub.f32 %v388, %v644
          %v901 = vsub.f32 %v389, %v645
          %v902 = vsub.f32 %v390, %v646
          %v903 = vsub.f32 %v391, %v647
          %v904 = vsub.f32 %v392, %v648
          %v905 = vsub.f32 %v393, %v649
          %v906 = vsub.f32 %v394, %v650
          %v907 = vsub.f32 %v395, %v651
          %v908 = vsub.f32 %v396, %v652
          %v909 = vsub.f32 %v397, %v653
          %v910 = vsub.f32 %v398, %v654
          %v911 = vsub.f32 %v399, %v655
          %v912 = vsub.f32 %v400, %v656
          %v913 = vsub.f32 %v401, %v657
          %v914 = vsub.f32 %v402, %v658
          %v915 = vsub.f32 %v403, %v659
          %v916 = vsub.f32 %v404, %v660
          %v917 = vsub.f32 %v405, %v661
          %v918 = vsub.f32 %v406, %v662
          %v919 = vsub.f32 %v407, %v663
          %v920 = vsub.f32 %v408, %v664
          %v921 = vsub.f32 %v409, %v665
          %v922 = vsub.f32 %v410, %v666
          %v923 = vsub.f32 %v411, %v667
          %v924 = vsub.f32 %v412, %v668
          %v925 = vsub.f32 %v413, %v669
          %v926 = vsub.f32 %v414, %v670
          %v927 = vsub.f32 %v415, %v671
          %v928 = vsub.f32 %v416, %v672
          %v929 = vsub.f32 %v417, %v673
          %v930 = vsub.f32 %v418, %v674
          %v931 = vsub.f32 %v419, %v675
          %v932 = vsub.f32 %v420, %v676
          %v933 = vsub.f32 %v421, %v677
          %v934 = vsub.f32 %v422, %v678
          %v935 = vsub.f32 %v423, %v679
          %v936 = vsub.f32 %v424, %v680
          %v937 = vsub.f32 %v425, %v681
          %v938 = vsub.f32 %v426, %v682
          %v939 = vsub.f32 %v427, %v683
          %v940 = vsub.f32 %v428, %v684
          %v941 = vsub.f32 %v429, %v685
          %v942 = vsub.f32 %v430, %v686
          %v943 = vsub.f32 %v431, %v687
          %v944 = vsub.f32 %v432, %v688
          %v945 = vsub.f32 %v433, %v689
          %v946 = vsub.f32 %v434, %v690
          %v947 = vsub.f32 %v435, %v691
          %v948 = vsub.f32 %v436, %v692
          %v949 = vsub.f32 %v437, %v693
          %v950 = vsub.f32 %v438, %v694
          %v951 = vsub.f32 %v439, %v695
          %v952 = vsub.f32 %v440, %v696
          %v953 = vsub.f32 %v441, %v697
          %v954 = vsub.f32 %v442, %v698
          %v955 = vsub.f32 %v443, %v699
          %v956 = vsub.f32 %v444, %v700
          %v957 = vsub.f32 %v445, %v701
          %v958 = vsub.f32 %v446, %v702
          %v959 = vsub.f32 %v447, %v703
          %v960 = vsub.f32 %v448, %v704
          %v961 = vsub.f32 %v449, %v705
          %v962 = vsub.f32 %v450, %v706
          %v963 = vsub.f32 %v451, %v707
          %v964 = vsub.f32 %v452, %v708
          %v965 = vsub.f32 %v453, %v709
          %v966 = vsub.f32 %v454, %v710
          %v967 = vsub.f32 %v455, %v711
          %v968 = vsub.f32 %v456, %v712
          %v969 = vsub.f32 %v457, %v713
          %v970 = vsub.f32 %v458, %v714
          %v971 = vsub.f32 %v459, %v715
          %v972 = vsub.f32 %v460, %v716
          %v973 = vsub.f32 %v461, %v717
          %v974 = vsub.f32 %v462, %v718
          %v975 = vsub.f32 %v463, %v719
          %v976 = vsub.f32 %v464, %v720
          %v977 = vsub.f32 %v465, %v721
          %v978 = vsub.f32 %v466, %v722
          %v979 = vsub.f32 %v467, %v723
          %v980 = vsub.f32 %v468, %v724
          %v981 = vsub.f32 %v469, %v725
          %v982 = vsub.f32 %v470, %v726
          %v983 = vsub.f32 %v471, %v727
          %v984 = vsub.f32 %v472, %v728
          %v985 = vsub.f32 %v473, %v729
          %v986 = vsub.f32 %v474, %v730
          %v987 = vsub.f32 %v475, %v731
          %v988 = vsub.f32 %v476, %v732
          %v989 = vsub.f32 %v477, %v733
          %v990 = vsub.f32 %v478, %v734
          %v991 = vsub.f32 %v479, %v735
          %v992 = vsub.f32 %v480, %v736
          %v993 = vsub.f32 %v481, %v737
          %v994 = vsub.f32 %v482, %v738
          %v995 = vsub.f32 %v483, %v739
          %v996 = vsub.f32 %v484, %v740
          %v997 = vsub.f32 %v485, %v741
          %v998 = vsub.f32 %v486, %v742
          %v999 = vsub.f32 %v487, %v743
          %v1000 = vsub.f32 %v488, %v744
          %v1001 = vsub.f32 %v489, %v745
          %v1002 = vsub.f32 %v490, %v746
          %v1003 = vsub.f32 %v491, %v747
          %v1004 = vsub.f32 %v492, %v748
          %v1005 = vsub.f32 %v493, %v749
          %v1006 = vsub.f32 %v494, %v750
          %v1007 = vsub.f32 %v495, %v751
          %v1008 = vsub.f32 %v496, %v752
          %v1009 = vsub.f32 %v497, %v753
          %v1010 = vsub.f32 %v498, %v754
          %v1011 = vsub.f32 %v499, %v755
          %v1012 = vsub.f32 %v500, %v756
          %v1013 = vsub.f32 %v501, %v757
          %v1014 = vsub.f32 %v502, %v758
          %v1015 = vsub.f32 %v503, %v759
          %v1016 = vsub.f32 %v504, %v760
          %v1017 = vsub.f32 %v505, %v761
          %v1018 = vsub.f32 %v506, %v762
          %v1019 = vsub.f32 %v507, %v763
          %v1020 = vsub.f32 %v508, %v764
          %v1021 = vsub.f32 %v509, %v765
          %v1022 = vsub.f32 %v510, %v766
          %v1023 = vsub.f32 %v511, %v767
          %v1024 = vmul.f32 %v768, %v768
          %v1025 = vmul.f32 %v769, %v769
          %v1026 = vmul.f32 %v770, %v770
          %v1027 = vmul.f32 %v771, %v771
          %v1028 = vmul.f32 %v772, %v772
          %v1029 = vmul.f32 %v773, %v773
          %v1030 = vmul.f32 %v774, %v774
          %v1031 = vmul.f32 %v775, %v775
          %v1032 = vmul.f32 %v776, %v776
          %v1033 = vmul.f32 %v777, %v777
          %v1034 = vmul.f32 %v778, %v778
          %v1035 = vmul.f32 %v779, %v779
          %v1036 = vmul.f32 %v780, %v780
          %v1037 = vmul.f32 %v781, %v781
          %v1038 = vmul.f32 %v782, %v782
          %v1039 = vmul.f32 %v783, %v783
          %v1040 = vmul.f32 %v784, %v784
          %v1041 = vmul.f32 %v785, %v785
          %v1042 = vmul.f32 %v786, %v786
          %v1043 = vmul.f32 %v787, %v787
          %v1044 = vmul.f32 %v788, %v788
          %v1045 = vmul.f32 %v789, %v789
          %v1046 = vmul.f32 %v790, %v790
          %v1047 = vmul.f32 %v791, %v791
          %v1048 = vmul.f32 %v792, %v792
          %v1049 = vmul.f32 %v793, %v793
          %v1050 = vmul.f32 %v794, %v794
          %v1051 = vmul.f32 %v795, %v795
          %v1052 = vmul.f32 %v796, %v796
          %v1053 = vmul.f32 %v797, %v797
          %v1054 = vmul.f32 %v798, %v798
          %v1055 = vmul.f32 %v799, %v799
          %v1056 = vmul.f32 %v800, %v800
          %v1057 = vmul.f32 %v801, %v801
          %v1058 = vmul.f32 %v802, %v802
          %v1059 = vmul.f32 %v803, %v803
          %v1060 = vmul.f32 %v804, %v804
          %v1061 = vmul.f32 %v805, %v805
          %v1062 = vmul.f32 %v806, %v806
          %v1063 = vmul.f32 %v807, %v807
          %v1064 = vmul.f32 %v808, %v808
          %v1065 = vmul.f32 %v809, %v809
          %v1066 = vmul.f32 %v810, %v810
          %v1067 = vmul.f32 %v811, %v811
          %v1068 = vmul.f32 %v812, %v812
          %v1069 = vmul.f32 %v813, %v813
          %v1070 = vmul.f32 %v814, %v814
          %v1071 = vmul.f32 %v815, %v815
          %v1072 = vmul.f32 %v816, %v816
          %v1073 = vmul.f32 %v817, %v817
          %v1074 = vmul.f32 %v818, %v818
          %v1075 = vmul.f32 %v819, %v819
          %v1076 = vmul.f32 %v820, %v820
          %v1077 = vmul.f32 %v821, %v821
          %v1078 = vmul.f32 %v822, %v822
          %v1079 = vmul.f32 %v823, %v823
          %v1080 = vmul.f32 %v824, %v824
          %v1081 = vmul.f32 %v825, %v825
          %v1082 = vmul.f32 %v826, %v826
          %v1083 = vmul.f32 %v827, %v827
          %v1084 = vmul.f32 %v828, %v828
          %v1085 = vmul.f32 %v829, %v829
          %v1086 = vmul.f32 %v830, %v830
          %v1087 = vmul.f32 %v831, %v831
          %v1088 = vmul.f32 %v832, %v832
          %v1089 = vmul.f32 %v833, %v833
          %v1090 = vmul.f32 %v834, %v834
          %v1091 = vmul.f32 %v835, %v835
          %v1092 = vmul.f32 %v836, %v836
          %v1093 = vmul.f32 %v837, %v837
          %v1094 = vmul.f32 %v838, %v838
          %v1095 = vmul.f32 %v839, %v839
          %v1096 = vmul.f32 %v840, %v840
          %v1097 = vmul.f32 %v841, %v841
          %v1098 = vmul.f32 %v842, %v842
          %v1099 = vmul.f32 %v843, %v843
          %v1100 = vmul.f32 %v844, %v844
          %v1101 = vmul.f32 %v845, %v845
          %v1102 = vmul.f32 %v846, %v846
          %v1103 = vmul.f32 %v847, %v847
          %v1104 = vmul.f32 %v848, %v848
          %v1105 = vmul.f32 %v849, %v849
          %v1106 = vmul.f32 %v850, %v850
          %v1107 = vmul.f32 %v851, %v851
          %v1108 = vmul.f32 %v852, %v852
          %v1109 = vmul.f32 %v853, %v853
          %v1110 = vmul.f32 %v854, %v854
          %v1111 = vmul.f32 %v855, %v855
          %v1112 = vmul.f32 %v856, %v856
          %v1113 = vmul.f32 %v857, %v857
          %v1114 = vmul.f32 %v858, %v858
          %v1115 = vmul.f32 %v859, %v859
          %v1116 = vmul.f32 %v860, %v860
          %v1117 = vmul.f32 %v861, %v861
          %v1118 = vmul.f32 %v862, %v862
          %v1119 = vmul.f32 %v863, %v863
          %v1120 = vmul.f32 %v864, %v864
          %v1121 = vmul.f32 %v865, %v865
          %v1122 = vmul.f32 %v866, %v866
          %v1123 = vmul.f32 %v867, %v867
          %v1124 = vmul.f32 %v868, %v868
          %v1125 = vmul.f32 %v869, %v869
          %v1126 = vmul.f32 %v870, %v870
          %v1127 = vmul.f32 %v871, %v871
          %v1128 = vmul.f32 %v872, %v872
          %v1129 = vmul.f32 %v873, %v873
          %v1130 = vmul.f32 %v874, %v874
          %v1131 = vmul.f32 %v875, %v875
          %v1132 = vmul.f32 %v876, %v876
          %v1133 = vmul.f32 %v877, %v877
          %v1134 = vmul.f32 %v878, %v878
          %v1135 = vmul.f32 %v879, %v879
          %v1136 = vmul.f32 %v880, %v880
          %v1137 = vmul.f32 %v881, %v881
          %v1138 = vmul.f32 %v882, %v882
          %v1139 = vmul.f32 %v883, %v883
          %v1140 = vmul.f32 %v884, %v884
          %v1141 = vmul.f32 %v885, %v885
          %v1142 = vmul.f32 %v886, %v886
          %v1143 = vmul.f32 %v887, %v887
          %v1144 = vmul.f32 %v888, %v888
          %v1145 = vmul.f32 %v889, %v889
          %v1146 = vmul.f32 %v890, %v890
          %v1147 = vmul.f32 %v891, %v891
          %v1148 = vmul.f32 %v892, %v892
          %v1149 = vmul.f32 %v893, %v893
          %v1150 = vmul.f32 %v894, %v894
          %v1151 = vmul.f32 %v895, %v895
          %v1152 = vmul.f32 %v896, %v896
          %v1153 = vmul.f32 %v897, %v897
          %v1154 = vmul.f32 %v898, %v898
          %v1155 = vmul.f32 %v899, %v899
          %v1156 = vmul.f32 %v900, %v900
          %v1157 = vmul.f32 %v901, %v901
          %v1158 = vmul.f32 %v902, %v902
          %v1159 = vmul.f32 %v903, %v903
          %v1160 = vmul.f32 %v904, %v904
          %v1161 = vmul.f32 %v905, %v905
          %v1162 = vmul.f32 %v906, %v906
          %v1163 = vmul.f32 %v907, %v907
          %v1164 = vmul.f32 %v908, %v908
          %v1165 = vmul.f32 %v909, %v909
          %v1166 = vmul.f32 %v910, %v910
          %v1167 = vmul.f32 %v911, %v911
          %v1168 = vmul.f32 %v912, %v912
          %v1169 = vmul.f32 %v913, %v913
          %v1170 = vmul.f32 %v914, %v914
          %v1171 = vmul.f32 %v915, %v915
          %v1172 = vmul.f32 %v916, %v916
          %v1173 = vmul.f32 %v917, %v917
          %v1174 = vmul.f32 %v918, %v918
          %v1175 = vmul.f32 %v919, %v919
          %v1176 = vmul.f32 %v920, %v920
          %v1177 = vmul.f32 %v921, %v921
          %v1178 = vmul.f32 %v922, %v922
          %v1179 = vmul.f32 %v923, %v923
          %v1180 = vmul.f32 %v924, %v924
          %v1181 = vmul.f32 %v925, %v925
          %v1182 = vmul.f32 %v926, %v926
          %v1183 = vmul.f32 %v927, %v927
          %v1184 = vmul.f32 %v928, %v928
          %v1185 = vmul.f32 %v929, %v929
          %v1186 = vmul.f32 %v930, %v930
          %v1187 = vmul.f32 %v931, %v931
          %v1188 = vmul.f32 %v932, %v932
          %v1189 = vmul.f32 %v933, %v933
          %v1190 = vmul.f32 %v934, %v934
          %v1191 = vmul.f32 %v935, %v935
          %v1192 = vmul.f32 %v936, %v936
          %v1193 = vmul.f32 %v937, %v937
          %v1194 = vmul.f32 %v938, %v938
          %v1195 = vmul.f32 %v939, %v939
          %v1196 = vmul.f32 %v940, %v940
          %v1197 = vmul.f32 %v941, %v941
          %v1198 = vmul.f32 %v942, %v942
          %v1199 = vmul.f32 %v943, %v943
          %v1200 = vmul.f32 %v944, %v944
          %v1201 = vmul.f32 %v945, %v945
          %v1202 = vmul.f32 %v946, %v946
          %v1203 = vmul.f32 %v947, %v947
          %v1204 = vmul.f32 %v948, %v948
          %v1205 = vmul.f32 %v949, %v949
          %v1206 = vmul.f32 %v950, %v950
          %v1207 = vmul.f32 %v951, %v951
          %v1208 = vmul.f32 %v952, %v952
          %v1209 = vmul.f32 %v953, %v953
          %v1210 = vmul.f32 %v954, %v954
          %v1211 = vmul.f32 %v955, %v955
          %v1212 = vmul.f32 %v956, %v956
          %v1213 = vmul.f32 %v957, %v957
          %v1214 = vmul.f32 %v958, %v958
          %v1215 = vmul.f32 %v959, %v959
          %v1216 = vmul.f32 %v960, %v960
          %v1217 = vmul.f32 %v961, %v961
          %v1218 = vmul.f32 %v962, %v962
          %v1219 = vmul.f32 %v963, %v963
          %v1220 = vmul.f32 %v964, %v964
          %v1221 = vmul.f32 %v965, %v965
          %v1222 = vmul.f32 %v966, %v966
          %v1223 = vmul.f32 %v967, %v967
          %v1224 = vmul.f32 %v968, %v968
          %v1225 = vmul.f32 %v969, %v969
          %v1226 = vmul.f32 %v970, %v970
          %v1227 = vmul.f32 %v971, %v971
          %v1228 = vmul.f32 %v972, %v972
          %v1229 = vmul.f32 %v973, %v973
          %v1230 = vmul.f32 %v974, %v974
          %v1231 = vmul.f32 %v975, %v975
          %v1232 = vmul.f32 %v976, %v976
          %v1233 = vmul.f32 %v977, %v977
          %v1234 = vmul.f32 %v978, %v978
          %v1235 = vmul.f32 %v979, %v979
          %v1236 = vmul.f32 %v980, %v980
          %v1237 = vmul.f32 %v981, %v981
          %v1238 = vmul.f32 %v982, %v982
          %v1239 = vmul.f32 %v983, %v983
          %v1240 = vmul.f32 %v984, %v984
          %v1241 = vmul.f32 %v985, %v985
          %v1242 = vmul.f32 %v986, %v986
          %v1243 = vmul.f32 %v987, %v987
          %v1244 = vmul.f32 %v988, %v988
          %v1245 = vmul.f32 %v989, %v989
          %v1246 = vmul.f32 %v990, %v990
          %v1247 = vmul.f32 %v991, %v991
          %v1248 = vmul.f32 %v992, %v992
          %v1249 = vmul.f32 %v993, %v993
          %v1250 = vmul.f32 %v994, %v994
          %v1251 = vmul.f32 %v995, %v995
          %v1252 = vmul.f32 %v996, %v996
          %v1253 = vmul.f32 %v997, %v997
          %v1254 = vmul.f32 %v998, %v998
          %v1255 = vmul.f32 %v999, %v999
          %v1256 = vmul.f32 %v1000, %v1000
          %v1257 = vmul.f32 %v1001, %v1001
          %v1258 = vmul.f32 %v1002, %v1002
          %v1259 = vmul.f32 %v1003, %v1003
          %v1260 = vmul.f32 %v1004, %v1004
          %v1261 = vmul.f32 %v1005, %v1005
          %v1262 = vmul.f32 %v1006, %v1006
          %v1263 = vmul.f32 %v1007, %v1007
          %v1264 = vmul.f32 %v1008, %v1008
          %v1265 = vmul.f32 %v1009, %v1009
          %v1266 = vmul.f32 %v1010, %v1010
          %v1267 = vmul.f32 %v1011, %v1011
          %v1268 = vmul.f32 %v1012, %v1012
          %v1269 = vmul.f32 %v1013, %v1013
          %v1270 = vmul.f32 %v1014, %v1014
          %v1271 = vmul.f32 %v1015, %v1015
          %v1272 = vmul.f32 %v1016, %v1016
          %v1273 = vmul.f32 %v1017, %v1017
          %v1274 = vmul.f32 %v1018, %v1018
          %v1275 = vmul.f32 %v1019, %v1019
          %v1276 = vmul.f32 %v1020, %v1020
          %v1277 = vmul.f32 %v1021, %v1021
          %v1278 = vmul.f32 %v1022, %v1022
          %v1279 = vmul.f32 %v1023, %v1023
          %v1280 = vlaneseq
          %v1281 = vshrl.u32 %v1280, 7
          %v1282 = vadd.s32 %v1281, 8
          %v1283 = vadd.s32 %v1281, 16
          %v1284 = vadd.s32 %v1281, 24
          %v1285 = vadd.s32 %v1281, 32
          %v1286 = vadd.s32 %v1281, 40
          %v1287 = vadd.s32 %v1281, 48
          %v1288 = vadd.s32 %v1281, 56
          %v1289 = vadd.s32 %v1281, 64
          %v1290 = vadd.s32 %v1281, 72
          %v1291 = vadd.s32 %v1281, 80
          %v1292 = vadd.s32 %v1281, 88
          %v1293 = vadd.s32 %v1281, 96
          %v1294 = vadd.s32 %v1281, 104
          %v1295 = vadd.s32 %v1281, 112
          %v1296 = vadd.s32 %v1281, 120
          %v1297 = vadd.s32 %v1281, 128
          %v1298 = vadd.s32 %v1281, 136
          %v1299 = vadd.s32 %v1281, 144
          %v1300 = vadd.s32 %v1281, 152
          %v1301 = vadd.s32 %v1281, 160
          %v1302 = vadd.s32 %v1281, 168
          %v1303 = vadd.s32 %v1281, 176
          %v1304 = vadd.s32 %v1281, 184
          %v1305 = vadd.s32 %v1281, 192
          %v1306 = vadd.s32 %v1281, 200
          %v1307 = vadd.s32 %v1281, 208
          %v1308 = vadd.s32 %v1281, 216
          %v1309 = vadd.s32 %v1281, 224
          %v1310 = vadd.s32 %v1281, 232
          %v1311 = vadd.s32 %v1281, 240
          %v1312 = vadd.s32 %v1281, 248
          %v1313 = vadd.s32 %v1281, 256
          %v1314 = vadd.s32 %v1281, 264
          %v1315 = vadd.s32 %v1281, 272
          %v1316 = vadd.s32 %v1281, 280
          %v1317 = vadd.s32 %v1281, 288
          %v1318 = vadd.s32 %v1281, 296
          %v1319 = vadd.s32 %v1281, 304
          %v1320 = vadd.s32 %v1281, 312
          %v1321 = vadd.s32 %v1281, 320
          %v1322 = vadd.s32 %v1281, 328
          %v1323 = vadd.s32 %v1281, 336
          %v1324 = vadd.s32 %v1281, 344
          %v1325 = vadd.s32 %v1281, 352
          %v1326 = vadd.s32 %v1281, 360
          %v1327 = vadd.s32 %v1281, 368
          %v1328 = vadd.s32 %v1281, 376
          %v1329 = vadd.s32 %v1281, 384
          %v1330 = vadd.s32 %v1281, 392
          %v1331 = vadd.s32 %v1281, 400
          %v1332 = vadd.s32 %v1281, 408
          %v1333 = vadd.s32 %v1281, 416
          %v1334 = vadd.s32 %v1281, 424
          %v1335 = vadd.s32 %v1281, 432
          %v1336 = vadd.s32 %v1281, 440
          %v1337 = vadd.s32 %v1281, 448
          %v1338 = vadd.s32 %v1281, 456
          %v1339 = vadd.s32 %v1281, 464
          %v1340 = vadd.s32 %v1281, 472
          %v1341 = vadd.s32 %v1281, 480
          %v1342 = vadd.s32 %v1281, 488
          %v1343 = vadd.s32 %v1281, 496
          %v1344 = vadd.s32 %v1281, 504
          %v1345 = vadd.s32 %v1281, 512
          %v1346 = vadd.s32 %v1281, 520
          %v1347 = vadd.s32 %v1281, 528
          %v1348 = vadd.s32 %v1281, 536
          %v1349 = vadd.s32 %v1281, 544
          %v1350 = vadd.s32 %v1281, 552
          %v1351 = vadd.s32 %v1281, 560
          %v1352 = vadd.s32 %v1281, 568
          %v1353 = vadd.s32 %v1281, 576
          %v1354 = vadd.s32 %v1281, 584
          %v1355 = vadd.s32 %v1281, 592
          %v1356 = vadd.s32 %v1281, 600
          %v1357 = vadd.s32 %v1281, 608
          %v1358 = vadd.s32 %v1281, 616
          %v1359 = vadd.s32 %v1281, 624
          %v1360 = vadd.s32 %v1281, 632
          %v1361 = vadd.s32 %v1281, 640
          %v1362 = vadd.s32 %v1281, 648
          %v1363 = vadd.s32 %v1281, 656
          %v1364 = vadd.s32 %v1281, 664
          %v1365 = vadd.s32 %v1281, 672
          %v1366 = vadd.s32 %v1281, 680
          %v1367 = vadd.s32 %v1281, 688
          %v1368 = vadd.s32 %v1281, 696
          %v1369 = vadd.s32 %v1281, 704
          %v1370 = vadd.s32 %v1281, 712
          %v1371 = vadd.s32 %v1281, 720
          %v1372 = vadd.s32 %v1281, 728
          %v1373 = vadd.s32 %v1281, 736
          %v1374 = vadd.s32 %v1281, 744
          %v1375 = vadd.s32 %v1281, 752
          %v1376 = vadd.s32 %v1281, 760
          %v1377 = vadd.s32 %v1281, 768
          %v1378 = vadd.s32 %v1281, 776
          %v1379 = vadd.s32 %v1281, 784
          %v1380 = vadd.s32 %v1281, 792
          %v1381 = vadd.s32 %v1281, 800
          %v1382 = vadd.s32 %v1281, 808
          %v1383 = vadd.s32 %v1281, 816
          %v1384 = vadd.s32 %v1281, 824
          %v1385 = vadd.s32 %v1281, 832
          %v1386 = vadd.s32 %v1281, 840
          %v1387 = vadd.s32 %v1281, 848
          %v1388 = vadd.s32 %v1281, 856
          %v1389 = vadd.s32 %v1281, 864
          %v1390 = vadd.s32 %v1281, 872
          %v1391 = vadd.s32 %v1281, 880
          %v1392 = vadd.s32 %v1281, 888
          %v1393 = vadd.s32 %v1281, 896
          %v1394 = vadd.s32 %v1281, 904
          %v1395 = vadd.s32 %v1281, 912
          %v1396 = vadd.s32 %v1281, 920
          %v1397 = vadd.s32 %v1281, 928
          %v1398 = vadd.s32 %v1281, 936
          %v1399 = vadd.s32 %v1281, 944
          %v1400 = vadd.s32 %v1281, 952
          %v1401 = vadd.s32 %v1281, 960
          %v1402 = vadd.s32 %v1281, 968
          %v1403 = vadd.s32 %v1281, 976
          %v1404 = vadd.s32 %v1281, 984
          %v1405 = vadd.s32 %v1281, 992
          %v1406 = vadd.s32 %v1281, 1000
          %v1407 = vadd.s32 %v1281, 1008
          %v1408 = vadd.s32 %v1281, 1016
          %v1409 = vadd.s32 %v1281, 1024
          %v1410 = vadd.s32 %v1281, 1032
          %v1411 = vadd.s32 %v1281, 1040
          %v1412 = vadd.s32 %v1281, 1048
          %v1413 = vadd.s32 %v1281, 1056
          %v1414 = vadd.s32 %v1281, 1064
          %v1415 = vadd.s32 %v1281, 1072
          %v1416 = vadd.s32 %v1281, 1080
          %v1417 = vadd.s32 %v1281, 1088
          %v1418 = vadd.s32 %v1281, 1096
          %v1419 = vadd.s32 %v1281, 1104
          %v1420 = vadd.s32 %v1281, 1112
          %v1421 = vadd.s32 %v1281, 1120
          %v1422 = vadd.s32 %v1281, 1128
          %v1423 = vadd.s32 %v1281, 1136
          %v1424 = vadd.s32 %v1281, 1144
          %v1425 = vadd.s32 %v1281, 1152
          %v1426 = vadd.s32 %v1281, 1160
          %v1427 = vadd.s32 %v1281, 1168
          %v1428 = vadd.s32 %v1281, 1176
          %v1429 = vadd.s32 %v1281, 1184
          %v1430 = vadd.s32 %v1281, 1192
          %v1431 = vadd.s32 %v1281, 1200
          %v1432 = vadd.s32 %v1281, 1208
          %v1433 = vadd.s32 %v1281, 1216
          %v1434 = vadd.s32 %v1281, 1224
          %v1435 = vadd.s32 %v1281, 1232
          %v1436 = vadd.s32 %v1281, 1240
          %v1437 = vadd.s32 %v1281, 1248
          %v1438 = vadd.s32 %v1281, 1256
          %v1439 = vadd.s32 %v1281, 1264
          %v1440 = vadd.s32 %v1281, 1272
          %v1441 = vadd.s32 %v1281, 1280
          %v1442 = vadd.s32 %v1281, 1288
          %v1443 = vadd.s32 %v1281, 1296
          %v1444 = vadd.s32 %v1281, 1304
          %v1445 = vadd.s32 %v1281, 1312
          %v1446 = vadd.s32 %v1281, 1320
          %v1447 = vadd.s32 %v1281, 1328
          %v1448 = vadd.s32 %v1281, 1336
          %v1449 = vadd.s32 %v1281, 1344
          %v1450 = vadd.s32 %v1281, 1352
          %v1451 = vadd.s32 %v1281, 1360
          %v1452 = vadd.s32 %v1281, 1368
          %v1453 = vadd.s32 %v1281, 1376
          %v1454 = vadd.s32 %v1281, 1384
          %v1455 = vadd.s32 %v1281, 1392
          %v1456 = vadd.s32 %v1281, 1400
          %v1457 = vadd.s32 %v1281, 1408
          %v1458 = vadd.s32 %v1281, 1416
          %v1459 = vadd.s32 %v1281, 1424
          %v1460 = vadd.s32 %v1281, 1432
          %v1461 = vadd.s32 %v1281, 1440
          %v1462 = vadd.s32 %v1281, 1448
          %v1463 = vadd.s32 %v1281, 1456
          %v1464 = vadd.s32 %v1281, 1464
          %v1465 = vadd.s32 %v1281, 1472
          %v1466 = vadd.s32 %v1281, 1480
          %v1467 = vadd.s32 %v1281, 1488
          %v1468 = vadd.s32 %v1281, 1496
          %v1469 = vadd.s32 %v1281, 1504
          %v1470 = vadd.s32 %v1281, 1512
          %v1471 = vadd.s32 %v1281, 1520
          %v1472 = vadd.s32 %v1281, 1528
          %v1473 = vadd.s32 %v1281, 1536
          %v1474 = vadd.s32 %v1281, 1544
          %v1475 = vadd.s32 %v1281, 1552
          %v1476 = vadd.s32 %v1281, 1560
          %v1477 = vadd.s32 %v1281, 1568
          %v1478 = vadd.s32 %v1281, 1576
          %v1479 = vadd.s32 %v1281, 1584
          %v1480 = vadd.s32 %v1281, 1592
          %v1481 = vadd.s32 %v1281, 1600
          %v1482 = vadd.s32 %v1281, 1608
          %v1483 = vadd.s32 %v1281, 1616
          %v1484 = vadd.s32 %v1281, 1624
          %v1485 = vadd.s32 %v1281, 1632
          %v1486 = vadd.s32 %v1281, 1640
          %v1487 = vadd.s32 %v1281, 1648
          %v1488 = vadd.s32 %v1281, 1656
          %v1489 = vadd.s32 %v1281, 1664
          %v1490 = vadd.s32 %v1281, 1672
          %v1491 = vadd.s32 %v1281, 1680
          %v1492 = vadd.s32 %v1281, 1688
          %v1493 = vadd.s32 %v1281, 1696
          %v1494 = vadd.s32 %v1281, 1704
          %v1495 = vadd.s32 %v1281, 1712
          %v1496 = vadd.s32 %v1281, 1720
          %v1497 = vadd.s32 %v1281, 1728
          %v1498 = vadd.s32 %v1281, 1736
          %v1499 = vadd.s32 %v1281, 1744
          %v1500 = vadd.s32 %v1281, 1752
          %v1501 = vadd.s32 %v1281, 1760
          %v1502 = vadd.s32 %v1281, 1768
          %v1503 = vadd.s32 %v1281, 1776
          %v1504 = vadd.s32 %v1281, 1784
          %v1505 = vadd.s32 %v1281, 1792
          %v1506 = vadd.s32 %v1281, 1800
          %v1507 = vadd.s32 %v1281, 1808
          %v1508 = vadd.s32 %v1281, 1816
          %v1509 = vadd.s32 %v1281, 1824
          %v1510 = vadd.s32 %v1281, 1832
          %v1511 = vadd.s32 %v1281, 1840
          %v1512 = vadd.s32 %v1281, 1848
          %v1513 = vadd.s32 %v1281, 1856
          %v1514 = vadd.s32 %v1281, 1864
          %v1515 = vadd.s32 %v1281, 1872
          %v1516 = vadd.s32 %v1281, 1880
          %v1517 = vadd.s32 %v1281, 1888
          %v1518 = vadd.s32 %v1281, 1896
          %v1519 = vadd.s32 %v1281, 1904
          %v1520 = vadd.s32 %v1281, 1912
          %v1521 = vadd.s32 %v1281, 1920
          %v1522 = vadd.s32 %v1281, 1928
          %v1523 = vadd.s32 %v1281, 1936
          %v1524 = vadd.s32 %v1281, 1944
          %v1525 = vadd.s32 %v1281, 1952
          %v1526 = vadd.s32 %v1281, 1960
          %v1527 = vadd.s32 %v1281, 1968
          %v1528 = vadd.s32 %v1281, 1976
          %v1529 = vadd.s32 %v1281, 1984
          %v1530 = vadd.s32 %v1281, 1992
          %v1531 = vadd.s32 %v1281, 2000
          %v1532 = vadd.s32 %v1281, 2008
          %v1533 = vadd.s32 %v1281, 2016
          %v1534 = vadd.s32 %v1281, 2024
          %v1535 = vadd.s32 %v1281, 2032
          %v1536 = vadd.s32 %v1281, 2040
          %vm1537 = vcmp.lt.s32.totalorder %v1281, 2
          %vm1538 = vcmp.lt.s32.totalorder %v1282, 2
          %vm1539 = vcmp.lt.s32.totalorder %v1283, 2
          %vm1540 = vcmp.lt.s32.totalorder %v1284, 2
          %vm1541 = vcmp.lt.s32.totalorder %v1285, 2
          %vm1542 = vcmp.lt.s32.totalorder %v1286, 2
          %vm1543 = vcmp.lt.s32.totalorder %v1287, 2
          %vm1544 = vcmp.lt.s32.totalorder %v1288, 2
          %vm1545 = vcmp.lt.s32.totalorder %v1289, 2
          %vm1546 = vcmp.lt.s32.totalorder %v1290, 2
          %vm1547 = vcmp.lt.s32.totalorder %v1291, 2
          %vm1548 = vcmp.lt.s32.totalorder %v1292, 2
          %vm1549 = vcmp.lt.s32.totalorder %v1293, 2
          %vm1550 = vcmp.lt.s32.totalorder %v1294, 2
          %vm1551 = vcmp.lt.s32.totalorder %v1295, 2
          %vm1552 = vcmp.lt.s32.totalorder %v1296, 2
          %vm1553 = vcmp.lt.s32.totalorder %v1297, 2
          %vm1554 = vcmp.lt.s32.totalorder %v1298, 2
          %vm1555 = vcmp.lt.s32.totalorder %v1299, 2
          %vm1556 = vcmp.lt.s32.totalorder %v1300, 2
          %vm1557 = vcmp.lt.s32.totalorder %v1301, 2
          %vm1558 = vcmp.lt.s32.totalorder %v1302, 2
          %vm1559 = vcmp.lt.s32.totalorder %v1303, 2
          %vm1560 = vcmp.lt.s32.totalorder %v1304, 2
          %vm1561 = vcmp.lt.s32.totalorder %v1305, 2
          %vm1562 = vcmp.lt.s32.totalorder %v1306, 2
          %vm1563 = vcmp.lt.s32.totalorder %v1307, 2
          %vm1564 = vcmp.lt.s32.totalorder %v1308, 2
          %vm1565 = vcmp.lt.s32.totalorder %v1309, 2
          %vm1566 = vcmp.lt.s32.totalorder %v1310, 2
          %vm1567 = vcmp.lt.s32.totalorder %v1311, 2
          %vm1568 = vcmp.lt.s32.totalorder %v1312, 2
          %vm1569 = vcmp.lt.s32.totalorder %v1313, 2
          %vm1570 = vcmp.lt.s32.totalorder %v1314, 2
          %vm1571 = vcmp.lt.s32.totalorder %v1315, 2
          %vm1572 = vcmp.lt.s32.totalorder %v1316, 2
          %vm1573 = vcmp.lt.s32.totalorder %v1317, 2
          %vm1574 = vcmp.lt.s32.totalorder %v1318, 2
          %vm1575 = vcmp.lt.s32.totalorder %v1319, 2
          %vm1576 = vcmp.lt.s32.totalorder %v1320, 2
          %vm1577 = vcmp.lt.s32.totalorder %v1321, 2
          %vm1578 = vcmp.lt.s32.totalorder %v1322, 2
          %vm1579 = vcmp.lt.s32.totalorder %v1323, 2
          %vm1580 = vcmp.lt.s32.totalorder %v1324, 2
          %vm1581 = vcmp.lt.s32.totalorder %v1325, 2
          %vm1582 = vcmp.lt.s32.totalorder %v1326, 2
          %vm1583 = vcmp.lt.s32.totalorder %v1327, 2
          %vm1584 = vcmp.lt.s32.totalorder %v1328, 2
          %vm1585 = vcmp.lt.s32.totalorder %v1329, 2
          %vm1586 = vcmp.lt.s32.totalorder %v1330, 2
          %vm1587 = vcmp.lt.s32.totalorder %v1331, 2
          %vm1588 = vcmp.lt.s32.totalorder %v1332, 2
          %vm1589 = vcmp.lt.s32.totalorder %v1333, 2
          %vm1590 = vcmp.lt.s32.totalorder %v1334, 2
          %vm1591 = vcmp.lt.s32.totalorder %v1335, 2
          %vm1592 = vcmp.lt.s32.totalorder %v1336, 2
          %vm1593 = vcmp.lt.s32.totalorder %v1337, 2
          %vm1594 = vcmp.lt.s32.totalorder %v1338, 2
          %vm1595 = vcmp.lt.s32.totalorder %v1339, 2
          %vm1596 = vcmp.lt.s32.totalorder %v1340, 2
          %vm1597 = vcmp.lt.s32.totalorder %v1341, 2
          %vm1598 = vcmp.lt.s32.totalorder %v1342, 2
          %vm1599 = vcmp.lt.s32.totalorder %v1343, 2
          %vm1600 = vcmp.lt.s32.totalorder %v1344, 2
          %vm1601 = vcmp.lt.s32.totalorder %v1345, 2
          %vm1602 = vcmp.lt.s32.totalorder %v1346, 2
          %vm1603 = vcmp.lt.s32.totalorder %v1347, 2
          %vm1604 = vcmp.lt.s32.totalorder %v1348, 2
          %vm1605 = vcmp.lt.s32.totalorder %v1349, 2
          %vm1606 = vcmp.lt.s32.totalorder %v1350, 2
          %vm1607 = vcmp.lt.s32.totalorder %v1351, 2
          %vm1608 = vcmp.lt.s32.totalorder %v1352, 2
          %vm1609 = vcmp.lt.s32.totalorder %v1353, 2
          %vm1610 = vcmp.lt.s32.totalorder %v1354, 2
          %vm1611 = vcmp.lt.s32.totalorder %v1355, 2
          %vm1612 = vcmp.lt.s32.totalorder %v1356, 2
          %vm1613 = vcmp.lt.s32.totalorder %v1357, 2
          %vm1614 = vcmp.lt.s32.totalorder %v1358, 2
          %vm1615 = vcmp.lt.s32.totalorder %v1359, 2
          %vm1616 = vcmp.lt.s32.totalorder %v1360, 2
          %vm1617 = vcmp.lt.s32.totalorder %v1361, 2
          %vm1618 = vcmp.lt.s32.totalorder %v1362, 2
          %vm1619 = vcmp.lt.s32.totalorder %v1363, 2
          %vm1620 = vcmp.lt.s32.totalorder %v1364, 2
          %vm1621 = vcmp.lt.s32.totalorder %v1365, 2
          %vm1622 = vcmp.lt.s32.totalorder %v1366, 2
          %vm1623 = vcmp.lt.s32.totalorder %v1367, 2
          %vm1624 = vcmp.lt.s32.totalorder %v1368, 2
          %vm1625 = vcmp.lt.s32.totalorder %v1369, 2
          %vm1626 = vcmp.lt.s32.totalorder %v1370, 2
          %vm1627 = vcmp.lt.s32.totalorder %v1371, 2
          %vm1628 = vcmp.lt.s32.totalorder %v1372, 2
          %vm1629 = vcmp.lt.s32.totalorder %v1373, 2
          %vm1630 = vcmp.lt.s32.totalorder %v1374, 2
          %vm1631 = vcmp.lt.s32.totalorder %v1375, 2
          %vm1632 = vcmp.lt.s32.totalorder %v1376, 2
          %vm1633 = vcmp.lt.s32.totalorder %v1377, 2
          %vm1634 = vcmp.lt.s32.totalorder %v1378, 2
          %vm1635 = vcmp.lt.s32.totalorder %v1379, 2
          %vm1636 = vcmp.lt.s32.totalorder %v1380, 2
          %vm1637 = vcmp.lt.s32.totalorder %v1381, 2
          %vm1638 = vcmp.lt.s32.totalorder %v1382, 2
          %vm1639 = vcmp.lt.s32.totalorder %v1383, 2
          %vm1640 = vcmp.lt.s32.totalorder %v1384, 2
          %vm1641 = vcmp.lt.s32.totalorder %v1385, 2
          %vm1642 = vcmp.lt.s32.totalorder %v1386, 2
          %vm1643 = vcmp.lt.s32.totalorder %v1387, 2
          %vm1644 = vcmp.lt.s32.totalorder %v1388, 2
          %vm1645 = vcmp.lt.s32.totalorder %v1389, 2
          %vm1646 = vcmp.lt.s32.totalorder %v1390, 2
          %vm1647 = vcmp.lt.s32.totalorder %v1391, 2
          %vm1648 = vcmp.lt.s32.totalorder %v1392, 2
          %vm1649 = vcmp.lt.s32.totalorder %v1393, 2
          %vm1650 = vcmp.lt.s32.totalorder %v1394, 2
          %vm1651 = vcmp.lt.s32.totalorder %v1395, 2
          %vm1652 = vcmp.lt.s32.totalorder %v1396, 2
          %vm1653 = vcmp.lt.s32.totalorder %v1397, 2
          %vm1654 = vcmp.lt.s32.totalorder %v1398, 2
          %vm1655 = vcmp.lt.s32.totalorder %v1399, 2
          %vm1656 = vcmp.lt.s32.totalorder %v1400, 2
          %vm1657 = vcmp.lt.s32.totalorder %v1401, 2
          %vm1658 = vcmp.lt.s32.totalorder %v1402, 2
          %vm1659 = vcmp.lt.s32.totalorder %v1403, 2
          %vm1660 = vcmp.lt.s32.totalorder %v1404, 2
          %vm1661 = vcmp.lt.s32.totalorder %v1405, 2
          %vm1662 = vcmp.lt.s32.totalorder %v1406, 2
          %vm1663 = vcmp.lt.s32.totalorder %v1407, 2
          %vm1664 = vcmp.lt.s32.totalorder %v1408, 2
          %vm1665 = vcmp.lt.s32.totalorder %v1409, 2
          %vm1666 = vcmp.lt.s32.totalorder %v1410, 2
          %vm1667 = vcmp.lt.s32.totalorder %v1411, 2
          %vm1668 = vcmp.lt.s32.totalorder %v1412, 2
          %vm1669 = vcmp.lt.s32.totalorder %v1413, 2
          %vm1670 = vcmp.lt.s32.totalorder %v1414, 2
          %vm1671 = vcmp.lt.s32.totalorder %v1415, 2
          %vm1672 = vcmp.lt.s32.totalorder %v1416, 2
          %vm1673 = vcmp.lt.s32.totalorder %v1417, 2
          %vm1674 = vcmp.lt.s32.totalorder %v1418, 2
          %vm1675 = vcmp.lt.s32.totalorder %v1419, 2
          %vm1676 = vcmp.lt.s32.totalorder %v1420, 2
          %vm1677 = vcmp.lt.s32.totalorder %v1421, 2
          %vm1678 = vcmp.lt.s32.totalorder %v1422, 2
          %vm1679 = vcmp.lt.s32.totalorder %v1423, 2
          %vm1680 = vcmp.lt.s32.totalorder %v1424, 2
          %vm1681 = vcmp.lt.s32.totalorder %v1425, 2
          %vm1682 = vcmp.lt.s32.totalorder %v1426, 2
          %vm1683 = vcmp.lt.s32.totalorder %v1427, 2
          %vm1684 = vcmp.lt.s32.totalorder %v1428, 2
          %vm1685 = vcmp.lt.s32.totalorder %v1429, 2
          %vm1686 = vcmp.lt.s32.totalorder %v1430, 2
          %vm1687 = vcmp.lt.s32.totalorder %v1431, 2
          %vm1688 = vcmp.lt.s32.totalorder %v1432, 2
          %vm1689 = vcmp.lt.s32.totalorder %v1433, 2
          %vm1690 = vcmp.lt.s32.totalorder %v1434, 2
          %vm1691 = vcmp.lt.s32.totalorder %v1435, 2
          %vm1692 = vcmp.lt.s32.totalorder %v1436, 2
          %vm1693 = vcmp.lt.s32.totalorder %v1437, 2
          %vm1694 = vcmp.lt.s32.totalorder %v1438, 2
          %vm1695 = vcmp.lt.s32.totalorder %v1439, 2
          %vm1696 = vcmp.lt.s32.totalorder %v1440, 2
          %vm1697 = vcmp.lt.s32.totalorder %v1441, 2
          %vm1698 = vcmp.lt.s32.totalorder %v1442, 2
          %vm1699 = vcmp.lt.s32.totalorder %v1443, 2
          %vm1700 = vcmp.lt.s32.totalorder %v1444, 2
          %vm1701 = vcmp.lt.s32.totalorder %v1445, 2
          %vm1702 = vcmp.lt.s32.totalorder %v1446, 2
          %vm1703 = vcmp.lt.s32.totalorder %v1447, 2
          %vm1704 = vcmp.lt.s32.totalorder %v1448, 2
          %vm1705 = vcmp.lt.s32.totalorder %v1449, 2
          %vm1706 = vcmp.lt.s32.totalorder %v1450, 2
          %vm1707 = vcmp.lt.s32.totalorder %v1451, 2
          %vm1708 = vcmp.lt.s32.totalorder %v1452, 2
          %vm1709 = vcmp.lt.s32.totalorder %v1453, 2
          %vm1710 = vcmp.lt.s32.totalorder %v1454, 2
          %vm1711 = vcmp.lt.s32.totalorder %v1455, 2
          %vm1712 = vcmp.lt.s32.totalorder %v1456, 2
          %vm1713 = vcmp.lt.s32.totalorder %v1457, 2
          %vm1714 = vcmp.lt.s32.totalorder %v1458, 2
          %vm1715 = vcmp.lt.s32.totalorder %v1459, 2
          %vm1716 = vcmp.lt.s32.totalorder %v1460, 2
          %vm1717 = vcmp.lt.s32.totalorder %v1461, 2
          %vm1718 = vcmp.lt.s32.totalorder %v1462, 2
          %vm1719 = vcmp.lt.s32.totalorder %v1463, 2
          %vm1720 = vcmp.lt.s32.totalorder %v1464, 2
          %vm1721 = vcmp.lt.s32.totalorder %v1465, 2
          %vm1722 = vcmp.lt.s32.totalorder %v1466, 2
          %vm1723 = vcmp.lt.s32.totalorder %v1467, 2
          %vm1724 = vcmp.lt.s32.totalorder %v1468, 2
          %vm1725 = vcmp.lt.s32.totalorder %v1469, 2
          %vm1726 = vcmp.lt.s32.totalorder %v1470, 2
          %vm1727 = vcmp.lt.s32.totalorder %v1471, 2
          %vm1728 = vcmp.lt.s32.totalorder %v1472, 2
          %vm1729 = vcmp.lt.s32.totalorder %v1473, 2
          %vm1730 = vcmp.lt.s32.totalorder %v1474, 2
          %vm1731 = vcmp.lt.s32.totalorder %v1475, 2
          %vm1732 = vcmp.lt.s32.totalorder %v1476, 2
          %vm1733 = vcmp.lt.s32.totalorder %v1477, 2
          %vm1734 = vcmp.lt.s32.totalorder %v1478, 2
          %vm1735 = vcmp.lt.s32.totalorder %v1479, 2
          %vm1736 = vcmp.lt.s32.totalorder %v1480, 2
          %vm1737 = vcmp.lt.s32.totalorder %v1481, 2
          %vm1738 = vcmp.lt.s32.totalorder %v1482, 2
          %vm1739 = vcmp.lt.s32.totalorder %v1483, 2
          %vm1740 = vcmp.lt.s32.totalorder %v1484, 2
          %vm1741 = vcmp.lt.s32.totalorder %v1485, 2
          %vm1742 = vcmp.lt.s32.totalorder %v1486, 2
          %vm1743 = vcmp.lt.s32.totalorder %v1487, 2
          %vm1744 = vcmp.lt.s32.totalorder %v1488, 2
          %vm1745 = vcmp.lt.s32.totalorder %v1489, 2
          %vm1746 = vcmp.lt.s32.totalorder %v1490, 2
          %vm1747 = vcmp.lt.s32.totalorder %v1491, 2
          %vm1748 = vcmp.lt.s32.totalorder %v1492, 2
          %vm1749 = vcmp.lt.s32.totalorder %v1493, 2
          %vm1750 = vcmp.lt.s32.totalorder %v1494, 2
          %vm1751 = vcmp.lt.s32.totalorder %v1495, 2
          %vm1752 = vcmp.lt.s32.totalorder %v1496, 2
          %vm1753 = vcmp.lt.s32.totalorder %v1497, 2
          %vm1754 = vcmp.lt.s32.totalorder %v1498, 2
          %vm1755 = vcmp.lt.s32.totalorder %v1499, 2
          %vm1756 = vcmp.lt.s32.totalorder %v1500, 2
          %vm1757 = vcmp.lt.s32.totalorder %v1501, 2
          %vm1758 = vcmp.lt.s32.totalorder %v1502, 2
          %vm1759 = vcmp.lt.s32.totalorder %v1503, 2
          %vm1760 = vcmp.lt.s32.totalorder %v1504, 2
          %vm1761 = vcmp.lt.s32.totalorder %v1505, 2
          %vm1762 = vcmp.lt.s32.totalorder %v1506, 2
          %vm1763 = vcmp.lt.s32.totalorder %v1507, 2
          %vm1764 = vcmp.lt.s32.totalorder %v1508, 2
          %vm1765 = vcmp.lt.s32.totalorder %v1509, 2
          %vm1766 = vcmp.lt.s32.totalorder %v1510, 2
          %vm1767 = vcmp.lt.s32.totalorder %v1511, 2
          %vm1768 = vcmp.lt.s32.totalorder %v1512, 2
          %vm1769 = vcmp.lt.s32.totalorder %v1513, 2
          %vm1770 = vcmp.lt.s32.totalorder %v1514, 2
          %vm1771 = vcmp.lt.s32.totalorder %v1515, 2
          %vm1772 = vcmp.lt.s32.totalorder %v1516, 2
          %vm1773 = vcmp.lt.s32.totalorder %v1517, 2
          %vm1774 = vcmp.lt.s32.totalorder %v1518, 2
          %vm1775 = vcmp.lt.s32.totalorder %v1519, 2
          %vm1776 = vcmp.lt.s32.totalorder %v1520, 2
          %vm1777 = vcmp.lt.s32.totalorder %v1521, 2
          %vm1778 = vcmp.lt.s32.totalorder %v1522, 2
          %vm1779 = vcmp.lt.s32.totalorder %v1523, 2
          %vm1780 = vcmp.lt.s32.totalorder %v1524, 2
          %vm1781 = vcmp.lt.s32.totalorder %v1525, 2
          %vm1782 = vcmp.lt.s32.totalorder %v1526, 2
          %vm1783 = vcmp.lt.s32.totalorder %v1527, 2
          %vm1784 = vcmp.lt.s32.totalorder %v1528, 2
          %vm1785 = vcmp.lt.s32.totalorder %v1529, 2
          %vm1786 = vcmp.lt.s32.totalorder %v1530, 2
          %vm1787 = vcmp.lt.s32.totalorder %v1531, 2
          %vm1788 = vcmp.lt.s32.totalorder %v1532, 2
          %vm1789 = vcmp.lt.s32.totalorder %v1533, 2
          %vm1790 = vcmp.lt.s32.totalorder %v1534, 2
          %vm1791 = vcmp.lt.s32.totalorder %v1535, 2
          %vm1792 = vcmp.lt.s32.totalorder %v1536, 2
          %v1793 = vsel %vm1537, %v1024, 0.0
          %v1794 = vsel %vm1538, %v1025, 0.0
          %v1795 = vsel %vm1539, %v1026, 0.0
          %v1796 = vsel %vm1540, %v1027, 0.0
          %v1797 = vsel %vm1541, %v1028, 0.0
          %v1798 = vsel %vm1542, %v1029, 0.0
          %v1799 = vsel %vm1543, %v1030, 0.0
          %v1800 = vsel %vm1544, %v1031, 0.0
          %v1801 = vsel %vm1545, %v1032, 0.0
          %v1802 = vsel %vm1546, %v1033, 0.0
          %v1803 = vsel %vm1547, %v1034, 0.0
          %v1804 = vsel %vm1548, %v1035, 0.0
          %v1805 = vsel %vm1549, %v1036, 0.0
          %v1806 = vsel %vm1550, %v1037, 0.0
          %v1807 = vsel %vm1551, %v1038, 0.0
          %v1808 = vsel %vm1552, %v1039, 0.0
          %v1809 = vsel %vm1553, %v1040, 0.0
          %v1810 = vsel %vm1554, %v1041, 0.0
          %v1811 = vsel %vm1555, %v1042, 0.0
          %v1812 = vsel %vm1556, %v1043, 0.0
          %v1813 = vsel %vm1557, %v1044, 0.0
          %v1814 = vsel %vm1558, %v1045, 0.0
          %v1815 = vsel %vm1559, %v1046, 0.0
          %v1816 = vsel %vm1560, %v1047, 0.0
          %v1817 = vsel %vm1561, %v1048, 0.0
          %v1818 = vsel %vm1562, %v1049, 0.0
          %v1819 = vsel %vm1563, %v1050, 0.0
          %v1820 = vsel %vm1564, %v1051, 0.0
          %v1821 = vsel %vm1565, %v1052, 0.0
          %v1822 = vsel %vm1566, %v1053, 0.0
          %v1823 = vsel %vm1567, %v1054, 0.0
          %v1824 = vsel %vm1568, %v1055, 0.0
          %v1825 = vsel %vm1569, %v1056, 0.0
          %v1826 = vsel %vm1570, %v1057, 0.0
          %v1827 = vsel %vm1571, %v1058, 0.0
          %v1828 = vsel %vm1572, %v1059, 0.0
          %v1829 = vsel %vm1573, %v1060, 0.0
          %v1830 = vsel %vm1574, %v1061, 0.0
          %v1831 = vsel %vm1575, %v1062, 0.0
          %v1832 = vsel %vm1576, %v1063, 0.0
          %v1833 = vsel %vm1577, %v1064, 0.0
          %v1834 = vsel %vm1578, %v1065, 0.0
          %v1835 = vsel %vm1579, %v1066, 0.0
          %v1836 = vsel %vm1580, %v1067, 0.0
          %v1837 = vsel %vm1581, %v1068, 0.0
          %v1838 = vsel %vm1582, %v1069, 0.0
          %v1839 = vsel %vm1583, %v1070, 0.0
          %v1840 = vsel %vm1584, %v1071, 0.0
          %v1841 = vsel %vm1585, %v1072, 0.0
          %v1842 = vsel %vm1586, %v1073, 0.0
          %v1843 = vsel %vm1587, %v1074, 0.0
          %v1844 = vsel %vm1588, %v1075, 0.0
          %v1845 = vsel %vm1589, %v1076, 0.0
          %v1846 = vsel %vm1590, %v1077, 0.0
          %v1847 = vsel %vm1591, %v1078, 0.0
          %v1848 = vsel %vm1592, %v1079, 0.0
          %v1849 = vsel %vm1593, %v1080, 0.0
          %v1850 = vsel %vm1594, %v1081, 0.0
          %v1851 = vsel %vm1595, %v1082, 0.0
          %v1852 = vsel %vm1596, %v1083, 0.0
          %v1853 = vsel %vm1597, %v1084, 0.0
          %v1854 = vsel %vm1598, %v1085, 0.0
          %v1855 = vsel %vm1599, %v1086, 0.0
          %v1856 = vsel %vm1600, %v1087, 0.0
          %v1857 = vsel %vm1601, %v1088, 0.0
          %v1858 = vsel %vm1602, %v1089, 0.0
          %v1859 = vsel %vm1603, %v1090, 0.0
          %v1860 = vsel %vm1604, %v1091, 0.0
          %v1861 = vsel %vm1605, %v1092, 0.0
          %v1862 = vsel %vm1606, %v1093, 0.0
          %v1863 = vsel %vm1607, %v1094, 0.0
          %v1864 = vsel %vm1608, %v1095, 0.0
          %v1865 = vsel %vm1609, %v1096, 0.0
          %v1866 = vsel %vm1610, %v1097, 0.0
          %v1867 = vsel %vm1611, %v1098, 0.0
          %v1868 = vsel %vm1612, %v1099, 0.0
          %v1869 = vsel %vm1613, %v1100, 0.0
          %v1870 = vsel %vm1614, %v1101, 0.0
          %v1871 = vsel %vm1615, %v1102, 0.0
          %v1872 = vsel %vm1616, %v1103, 0.0
          %v1873 = vsel %vm1617, %v1104, 0.0
          %v1874 = vsel %vm1618, %v1105, 0.0
          %v1875 = vsel %vm1619, %v1106, 0.0
          %v1876 = vsel %vm1620, %v1107, 0.0
          %v1877 = vsel %vm1621, %v1108, 0.0
          %v1878 = vsel %vm1622, %v1109, 0.0
          %v1879 = vsel %vm1623, %v1110, 0.0
          %v1880 = vsel %vm1624, %v1111, 0.0
          %v1881 = vsel %vm1625, %v1112, 0.0
          %v1882 = vsel %vm1626, %v1113, 0.0
          %v1883 = vsel %vm1627, %v1114, 0.0
          %v1884 = vsel %vm1628, %v1115, 0.0
          %v1885 = vsel %vm1629, %v1116, 0.0
          %v1886 = vsel %vm1630, %v1117, 0.0
          %v1887 = vsel %vm1631, %v1118, 0.0
          %v1888 = vsel %vm1632, %v1119, 0.0
          %v1889 = vsel %vm1633, %v1120, 0.0
          %v1890 = vsel %vm1634, %v1121, 0.0
          %v1891 = vsel %vm1635, %v1122, 0.0
          %v1892 = vsel %vm1636, %v1123, 0.0
          %v1893 = vsel %vm1637, %v1124, 0.0
          %v1894 = vsel %vm1638, %v1125, 0.0
          %v1895 = vsel %vm1639, %v1126, 0.0
          %v1896 = vsel %vm1640, %v1127, 0.0
          %v1897 = vsel %vm1641, %v1128, 0.0
          %v1898 = vsel %vm1642, %v1129, 0.0
          %v1899 = vsel %vm1643, %v1130, 0.0
          %v1900 = vsel %vm1644, %v1131, 0.0
          %v1901 = vsel %vm1645, %v1132, 0.0
          %v1902 = vsel %vm1646, %v1133, 0.0
          %v1903 = vsel %vm1647, %v1134, 0.0
          %v1904 = vsel %vm1648, %v1135, 0.0
          %v1905 = vsel %vm1649, %v1136, 0.0
          %v1906 = vsel %vm1650, %v1137, 0.0
          %v1907 = vsel %vm1651, %v1138, 0.0
          %v1908 = vsel %vm1652, %v1139, 0.0
          %v1909 = vsel %vm1653, %v1140, 0.0
          %v1910 = vsel %vm1654, %v1141, 0.0
          %v1911 = vsel %vm1655, %v1142, 0.0
          %v1912 = vsel %vm1656, %v1143, 0.0
          %v1913 = vsel %vm1657, %v1144, 0.0
          %v1914 = vsel %vm1658, %v1145, 0.0
          %v1915 = vsel %vm1659, %v1146, 0.0
          %v1916 = vsel %vm1660, %v1147, 0.0
          %v1917 = vsel %vm1661, %v1148, 0.0
          %v1918 = vsel %vm1662, %v1149, 0.0
          %v1919 = vsel %vm1663, %v1150, 0.0
          %v1920 = vsel %vm1664, %v1151, 0.0
          %v1921 = vsel %vm1665, %v1152, 0.0
          %v1922 = vsel %vm1666, %v1153, 0.0
          %v1923 = vsel %vm1667, %v1154, 0.0
          %v1924 = vsel %vm1668, %v1155, 0.0
          %v1925 = vsel %vm1669, %v1156, 0.0
          %v1926 = vsel %vm1670, %v1157, 0.0
          %v1927 = vsel %vm1671, %v1158, 0.0
          %v1928 = vsel %vm1672, %v1159, 0.0
          %v1929 = vsel %vm1673, %v1160, 0.0
          %v1930 = vsel %vm1674, %v1161, 0.0
          %v1931 = vsel %vm1675, %v1162, 0.0
          %v1932 = vsel %vm1676, %v1163, 0.0
          %v1933 = vsel %vm1677, %v1164, 0.0
          %v1934 = vsel %vm1678, %v1165, 0.0
          %v1935 = vsel %vm1679, %v1166, 0.0
          %v1936 = vsel %vm1680, %v1167, 0.0
          %v1937 = vsel %vm1681, %v1168, 0.0
          %v1938 = vsel %vm1682, %v1169, 0.0
          %v1939 = vsel %vm1683, %v1170, 0.0
          %v1940 = vsel %vm1684, %v1171, 0.0
          %v1941 = vsel %vm1685, %v1172, 0.0
          %v1942 = vsel %vm1686, %v1173, 0.0
          %v1943 = vsel %vm1687, %v1174, 0.0
          %v1944 = vsel %vm1688, %v1175, 0.0
          %v1945 = vsel %vm1689, %v1176, 0.0
          %v1946 = vsel %vm1690, %v1177, 0.0
          %v1947 = vsel %vm1691, %v1178, 0.0
          %v1948 = vsel %vm1692, %v1179, 0.0
          %v1949 = vsel %vm1693, %v1180, 0.0
          %v1950 = vsel %vm1694, %v1181, 0.0
          %v1951 = vsel %vm1695, %v1182, 0.0
          %v1952 = vsel %vm1696, %v1183, 0.0
          %v1953 = vsel %vm1697, %v1184, 0.0
          %v1954 = vsel %vm1698, %v1185, 0.0
          %v1955 = vsel %vm1699, %v1186, 0.0
          %v1956 = vsel %vm1700, %v1187, 0.0
          %v1957 = vsel %vm1701, %v1188, 0.0
          %v1958 = vsel %vm1702, %v1189, 0.0
          %v1959 = vsel %vm1703, %v1190, 0.0
          %v1960 = vsel %vm1704, %v1191, 0.0
          %v1961 = vsel %vm1705, %v1192, 0.0
          %v1962 = vsel %vm1706, %v1193, 0.0
          %v1963 = vsel %vm1707, %v1194, 0.0
          %v1964 = vsel %vm1708, %v1195, 0.0
          %v1965 = vsel %vm1709, %v1196, 0.0
          %v1966 = vsel %vm1710, %v1197, 0.0
          %v1967 = vsel %vm1711, %v1198, 0.0
          %v1968 = vsel %vm1712, %v1199, 0.0
          %v1969 = vsel %vm1713, %v1200, 0.0
          %v1970 = vsel %vm1714, %v1201, 0.0
          %v1971 = vsel %vm1715, %v1202, 0.0
          %v1972 = vsel %vm1716, %v1203, 0.0
          %v1973 = vsel %vm1717, %v1204, 0.0
          %v1974 = vsel %vm1718, %v1205, 0.0
          %v1975 = vsel %vm1719, %v1206, 0.0
          %v1976 = vsel %vm1720, %v1207, 0.0
          %v1977 = vsel %vm1721, %v1208, 0.0
          %v1978 = vsel %vm1722, %v1209, 0.0
          %v1979 = vsel %vm1723, %v1210, 0.0
          %v1980 = vsel %vm1724, %v1211, 0.0
          %v1981 = vsel %vm1725, %v1212, 0.0
          %v1982 = vsel %vm1726, %v1213, 0.0
          %v1983 = vsel %vm1727, %v1214, 0.0
          %v1984 = vsel %vm1728, %v1215, 0.0
          %v1985 = vsel %vm1729, %v1216, 0.0
          %v1986 = vsel %vm1730, %v1217, 0.0
          %v1987 = vsel %vm1731, %v1218, 0.0
          %v1988 = vsel %vm1732, %v1219, 0.0
          %v1989 = vsel %vm1733, %v1220, 0.0
          %v1990 = vsel %vm1734, %v1221, 0.0
          %v1991 = vsel %vm1735, %v1222, 0.0
          %v1992 = vsel %vm1736, %v1223, 0.0
          %v1993 = vsel %vm1737, %v1224, 0.0
          %v1994 = vsel %vm1738, %v1225, 0.0
          %v1995 = vsel %vm1739, %v1226, 0.0
          %v1996 = vsel %vm1740, %v1227, 0.0
          %v1997 = vsel %vm1741, %v1228, 0.0
          %v1998 = vsel %vm1742, %v1229, 0.0
          %v1999 = vsel %vm1743, %v1230, 0.0
          %v2000 = vsel %vm1744, %v1231, 0.0
          %v2001 = vsel %vm1745, %v1232, 0.0
          %v2002 = vsel %vm1746, %v1233, 0.0
          %v2003 = vsel %vm1747, %v1234, 0.0
          %v2004 = vsel %vm1748, %v1235, 0.0
          %v2005 = vsel %vm1749, %v1236, 0.0
          %v2006 = vsel %vm1750, %v1237, 0.0
          %v2007 = vsel %vm1751, %v1238, 0.0
          %v2008 = vsel %vm1752, %v1239, 0.0
          %v2009 = vsel %vm1753, %v1240, 0.0
          %v2010 = vsel %vm1754, %v1241, 0.0
          %v2011 = vsel %vm1755, %v1242, 0.0
          %v2012 = vsel %vm1756, %v1243, 0.0
          %v2013 = vsel %vm1757, %v1244, 0.0
          %v2014 = vsel %vm1758, %v1245, 0.0
          %v2015 = vsel %vm1759, %v1246, 0.0
          %v2016 = vsel %vm1760, %v1247, 0.0
          %v2017 = vsel %vm1761, %v1248, 0.0
          %v2018 = vsel %vm1762, %v1249, 0.0
          %v2019 = vsel %vm1763, %v1250, 0.0
          %v2020 = vsel %vm1764, %v1251, 0.0
          %v2021 = vsel %vm1765, %v1252, 0.0
          %v2022 = vsel %vm1766, %v1253, 0.0
          %v2023 = vsel %vm1767, %v1254, 0.0
          %v2024 = vsel %vm1768, %v1255, 0.0
          %v2025 = vsel %vm1769, %v1256, 0.0
          %v2026 = vsel %vm1770, %v1257, 0.0
          %v2027 = vsel %vm1771, %v1258, 0.0
          %v2028 = vsel %vm1772, %v1259, 0.0
          %v2029 = vsel %vm1773, %v1260, 0.0
          %v2030 = vsel %vm1774, %v1261, 0.0
          %v2031 = vsel %vm1775, %v1262, 0.0
          %v2032 = vsel %vm1776, %v1263, 0.0
          %v2033 = vsel %vm1777, %v1264, 0.0
          %v2034 = vsel %vm1778, %v1265, 0.0
          %v2035 = vsel %vm1779, %v1266, 0.0
          %v2036 = vsel %vm1780, %v1267, 0.0
          %v2037 = vsel %vm1781, %v1268, 0.0
          %v2038 = vsel %vm1782, %v1269, 0.0
          %v2039 = vsel %vm1783, %v1270, 0.0
          %v2040 = vsel %vm1784, %v1271, 0.0
          %v2041 = vsel %vm1785, %v1272, 0.0
          %v2042 = vsel %vm1786, %v1273, 0.0
          %v2043 = vsel %vm1787, %v1274, 0.0
          %v2044 = vsel %vm1788, %v1275, 0.0
          %v2045 = vsel %vm1789, %v1276, 0.0
          %v2046 = vsel %vm1790, %v1277, 0.0
          %v2047 = vsel %vm1791, %v1278, 0.0
          %v2048 = vsel %vm1792, %v1279, 0.0
          %v2049 = vld [vmem:[#allocation7] sm:$0xff]
          %v2050 = vadd.f32 %v1793, %v1794
          %v2051 = vadd.f32 %v2050, %v1795
          %v2052 = vadd.f32 %v2051, %v1796
          %v2053 = vadd.f32 %v2052, %v1797
          %v2054 = vadd.f32 %v2053, %v1798
          %v2055 = vadd.f32 %v2054, %v1799
          %v2056 = vadd.f32 %v2055, %v1800
          %v2057 = vadd.f32 %v2056, %v1801
          %v2058 = vadd.f32 %v2057, %v1802
          %v2059 = vadd.f32 %v2058, %v1803
          %v2060 = vadd.f32 %v2059, %v1804
          %v2061 = vadd.f32 %v2060, %v1805
          %v2062 = vadd.f32 %v2061, %v1806
          %v2063 = vadd.f32 %v2062, %v1807
          %v2064 = vadd.f32 %v2063, %v1808
          %v2065 = vadd.f32 %v2064, %v1809
          %v2066 = vadd.f32 %v2065, %v1810
          %v2067 = vadd.f32 %v2066, %v1811
          %v2068 = vadd.f32 %v2067, %v1812
          %v2069 = vadd.f32 %v2068, %v1813
          %v2070 = vadd.f32 %v2069, %v1814
          %v2071 = vadd.f32 %v2070, %v1815
          %v2072 = vadd.f32 %v2071, %v1816
          %v2073 = vadd.f32 %v2072, %v1817
          %v2074 = vadd.f32 %v2073, %v1818
          %v2075 = vadd.f32 %v2074, %v1819
          %v2076 = vadd.f32 %v2075, %v1820
          %v2077 = vadd.f32 %v2076, %v1821
          %v2078 = vadd.f32 %v2077, %v1822
          %v2079 = vadd.f32 %v2078, %v1823
          %v2080 = vadd.f32 %v2079, %v1824
          %v2081 = vadd.f32 %v2080, %v1825
          %v2082 = vadd.f32 %v2081, %v1826
          %v2083 = vadd.f32 %v2082, %v1827
          %v2084 = vadd.f32 %v2083, %v1828
          %v2085 = vadd.f32 %v2084, %v1829
          %v2086 = vadd.f32 %v2085, %v1830
          %v2087 = vadd.f32 %v2086, %v1831
          %v2088 = vadd.f32 %v2087, %v1832
          %v2089 = vadd.f32 %v2088, %v1833
          %v2090 = vadd.f32 %v2089, %v1834
          %v2091 = vadd.f32 %v2090, %v1835
          %v2092 = vadd.f32 %v2091, %v1836
          %v2093 = vadd.f32 %v2092, %v1837
          %v2094 = vadd.f32 %v2093, %v1838
          %v2095 = vadd.f32 %v2094, %v1839
          %v2096 = vadd.f32 %v2095, %v1840
          %v2097 = vadd.f32 %v2096, %v1841
          %v2098 = vadd.f32 %v2097, %v1842
          %v2099 = vadd.f32 %v2098, %v1843
          %v2100 = vadd.f32 %v2099, %v1844
          %v2101 = vadd.f32 %v2100, %v1845
          %v2102 = vadd.f32 %v2101, %v1846
          %v2103 = vadd.f32 %v2102, %v1847
          %v2104 = vadd.f32 %v2103, %v1848
          %v2105 = vadd.f32 %v2104, %v1849
          %v2106 = vadd.f32 %v2105, %v1850
          %v2107 = vadd.f32 %v2106, %v1851
          %v2108 = vadd.f32 %v2107, %v1852
          %v2109 = vadd.f32 %v2108, %v1853
          %v2110 = vadd.f32 %v2109, %v1854
          %v2111 = vadd.f32 %v2110, %v1855
          %v2112 = vadd.f32 %v2111, %v1856
          %v2113 = vadd.f32 %v2112, %v1857
          %v2114 = vadd.f32 %v2113, %v1858
          %v2115 = vadd.f32 %v2114, %v1859
          %v2116 = vadd.f32 %v2115, %v1860
          %v2117 = vadd.f32 %v2116, %v1861
          %v2118 = vadd.f32 %v2117, %v1862
          %v2119 = vadd.f32 %v2118, %v1863
          %v2120 = vadd.f32 %v2119, %v1864
          %v2121 = vadd.f32 %v2120, %v1865
          %v2122 = vadd.f32 %v2121, %v1866
          %v2123 = vadd.f32 %v2122, %v1867
          %v2124 = vadd.f32 %v2123, %v1868
          %v2125 = vadd.f32 %v2124, %v1869
          %v2126 = vadd.f32 %v2125, %v1870
          %v2127 = vadd.f32 %v2126, %v1871
          %v2128 = vadd.f32 %v2127, %v1872
          %v2129 = vadd.f32 %v2128, %v1873
          %v2130 = vadd.f32 %v2129, %v1874
          %v2131 = vadd.f32 %v2130, %v1875
          %v2132 = vadd.f32 %v2131, %v1876
          %v2133 = vadd.f32 %v2132, %v1877
          %v2134 = vadd.f32 %v2133, %v1878
          %v2135 = vadd.f32 %v2134, %v1879
          %v2136 = vadd.f32 %v2135, %v1880
          %v2137 = vadd.f32 %v2136, %v1881
          %v2138 = vadd.f32 %v2137, %v1882
          %v2139 = vadd.f32 %v2138, %v1883
          %v2140 = vadd.f32 %v2139, %v1884
          %v2141 = vadd.f32 %v2140, %v1885
          %v2142 = vadd.f32 %v2141, %v1886
          %v2143 = vadd.f32 %v2142, %v1887
          %v2144 = vadd.f32 %v2143, %v1888
          %v2145 = vadd.f32 %v2144, %v1889
          %v2146 = vadd.f32 %v2145, %v1890
          %v2147 = vadd.f32 %v2146, %v1891
          %v2148 = vadd.f32 %v2147, %v1892
          %v2149 = vadd.f32 %v2148, %v1893
          %v2150 = vadd.f32 %v2149, %v1894
          %v2151 = vadd.f32 %v2150, %v1895
          %v2152 = vadd.f32 %v2151, %v1896
          %v2153 = vadd.f32 %v2152, %v1897
          %v2154 = vadd.f32 %v2153, %v1898
          %v2155 = vadd.f32 %v2154, %v1899
          %v2156 = vadd.f32 %v2155, %v1900
          %v2157 = vadd.f32 %v2156, %v1901
          %v2158 = vadd.f32 %v2157, %v1902
          %v2159 = vadd.f32 %v2158, %v1903
          %v2160 = vadd.f32 %v2159, %v1904
          %v2161 = vadd.f32 %v2160, %v1905
          %v2162 = vadd.f32 %v2161, %v1906
          %v2163 = vadd.f32 %v2162, %v1907
          %v2164 = vadd.f32 %v2163, %v1908
          %v2165 = vadd.f32 %v2164, %v1909
          %v2166 = vadd.f32 %v2165, %v1910
          %v2167 = vadd.f32 %v2166, %v1911
          %v2168 = vadd.f32 %v2167, %v1912
          %v2169 = vadd.f32 %v2168, %v1913
          %v2170 = vadd.f32 %v2169, %v1914
          %v2171 = vadd.f32 %v2170, %v1915
          %v2172 = vadd.f32 %v2171, %v1916
          %v2173 = vadd.f32 %v2172, %v1917
          %v2174 = vadd.f32 %v2173, %v1918
          %v2175 = vadd.f32 %v2174, %v1919
          %v2176 = vadd.f32 %v2175, %v1920
          %v2177 = vadd.f32 %v2176, %v1921
          %v2178 = vadd.f32 %v2177, %v1922
          %v2179 = vadd.f32 %v2178, %v1923
          %v2180 = vadd.f32 %v2179, %v1924
          %v2181 = vadd.f32 %v2180, %v1925
          %v2182 = vadd.f32 %v2181, %v1926
          %v2183 = vadd.f32 %v2182, %v1927
          %v2184 = vadd.f32 %v2183, %v1928
          %v2185 = vadd.f32 %v2184, %v1929
          %v2186 = vadd.f32 %v2185, %v1930
          %v2187 = vadd.f32 %v2186, %v1931
          %v2188 = vadd.f32 %v2187, %v1932
          %v2189 = vadd.f32 %v2188, %v1933
          %v2190 = vadd.f32 %v2189, %v1934
          %v2191 = vadd.f32 %v2190, %v1935
          %v2192 = vadd.f32 %v2191, %v1936
          %v2193 = vadd.f32 %v2192, %v1937
          %v2194 = vadd.f32 %v2193, %v1938
          %v2195 = vadd.f32 %v2194, %v1939
          %v2196 = vadd.f32 %v2195, %v1940
          %v2197 = vadd.f32 %v2196, %v1941
          %v2198 = vadd.f32 %v2197, %v1942
          %v2199 = vadd.f32 %v2198, %v1943
          %v2200 = vadd.f32 %v2199, %v1944
          %v2201 = vadd.f32 %v2200, %v1945
          %v2202 = vadd.f32 %v2201, %v1946
          %v2203 = vadd.f32 %v2202, %v1947
          %v2204 = vadd.f32 %v2203, %v1948
          %v2205 = vadd.f32 %v2204, %v1949
          %v2206 = vadd.f32 %v2205, %v1950
          %v2207 = vadd.f32 %v2206, %v1951
          %v2208 = vadd.f32 %v2207, %v1952
          %v2209 = vadd.f32 %v2208, %v1953
          %v2210 = vadd.f32 %v2209, %v1954
          %v2211 = vadd.f32 %v2210, %v1955
          %v2212 = vadd.f32 %v2211, %v1956
          %v2213 = vadd.f32 %v2212, %v1957
          %v2214 = vadd.f32 %v2213, %v1958
          %v2215 = vadd.f32 %v2214, %v1959
          %v2216 = vadd.f32 %v2215, %v1960
          %v2217 = vadd.f32 %v2216, %v1961
          %v2218 = vadd.f32 %v2217, %v1962
          %v2219 = vadd.f32 %v2218, %v1963
          %v2220 = vadd.f32 %v2219, %v1964
          %v2221 = vadd.f32 %v2220, %v1965
          %v2222 = vadd.f32 %v2221, %v1966
          %v2223 = vadd.f32 %v2222, %v1967
          %v2224 = vadd.f32 %v2223, %v1968
          %v2225 = vadd.f32 %v2224, %v1969
          %v2226 = vadd.f32 %v2225, %v1970
          %v2227 = vadd.f32 %v2226, %v1971
          %v2228 = vadd.f32 %v2227, %v1972
          %v2229 = vadd.f32 %v2228, %v1973
          %v2230 = vadd.f32 %v2229, %v1974
          %v2231 = vadd.f32 %v2230, %v1975
          %v2232 = vadd.f32 %v2231, %v1976
          %v2233 = vadd.f32 %v2232, %v1977
          %v2234 = vadd.f32 %v2233, %v1978
          %v2235 = vadd.f32 %v2234, %v1979
          %v2236 = vadd.f32 %v2235, %v1980
          %v2237 = vadd.f32 %v2236, %v1981
          %v2238 = vadd.f32 %v2237, %v1982
          %v2239 = vadd.f32 %v2238, %v1983
          %v2240 = vadd.f32 %v2239, %v1984
          %v2241 = vadd.f32 %v2240, %v1985
          %v2242 = vadd.f32 %v2241, %v1986
          %v2243 = vadd.f32 %v2242, %v1987
          %v2244 = vadd.f32 %v2243, %v1988
          %v2245 = vadd.f32 %v2244, %v1989
          %v2246 = vadd.f32 %v2245, %v1990
          %v2247 = vadd.f32 %v2246, %v1991
          %v2248 = vadd.f32 %v2247, %v1992
          %v2249 = vadd.f32 %v2248, %v1993
          %v2250 = vadd.f32 %v2249, %v1994
          %v2251 = vadd.f32 %v2250, %v1995
          %v2252 = vadd.f32 %v2251, %v1996
          %v2253 = vadd.f32 %v2252, %v1997
          %v2254 = vadd.f32 %v2253, %v1998
          %v2255 = vadd.f32 %v2254, %v1999
          %v2256 = vadd.f32 %v2255, %v2000
          %v2257 = vadd.f32 %v2256, %v2001
          %v2258 = vadd.f32 %v2257, %v2002
          %v2259 = vadd.f32 %v2258, %v2003
          %v2260 = vadd.f32 %v2259, %v2004
          %v2261 = vadd.f32 %v2260, %v2005
          %v2262 = vadd.f32 %v2261, %v2006
          %v2263 = vadd.f32 %v2262, %v2007
          %v2264 = vadd.f32 %v2263, %v2008
          %v2265 = vadd.f32 %v2264, %v2009
          %v2266 = vadd.f32 %v2265, %v2010
          %v2267 = vadd.f32 %v2266, %v2011
          %v2268 = vadd.f32 %v2267, %v2012
          %v2269 = vadd.f32 %v2268, %v2013
          %v2270 = vadd.f32 %v2269, %v2014
          %v2271 = vadd.f32 %v2270, %v2015
          %v2272 = vadd.f32 %v2271, %v2016
          %v2273 = vadd.f32 %v2272, %v2017
          %v2274 = vadd.f32 %v2273, %v2018
          %v2275 = vadd.f32 %v2274, %v2019
          %v2276 = vadd.f32 %v2275, %v2020
          %v2277 = vadd.f32 %v2276, %v2021
          %v2278 = vadd.f32 %v2277, %v2022
          %v2279 = vadd.f32 %v2278, %v2023
          %v2280 = vadd.f32 %v2279, %v2024
          %v2281 = vadd.f32 %v2280, %v2025
          %v2282 = vadd.f32 %v2281, %v2026
          %v2283 = vadd.f32 %v2282, %v2027
          %v2284 = vadd.f32 %v2283, %v2028
          %v2285 = vadd.f32 %v2284, %v2029
          %v2286 = vadd.f32 %v2285, %v2030
          %v2287 = vadd.f32 %v2286, %v2031
          %v2288 = vadd.f32 %v2287, %v2032
          %v2289 = vadd.f32 %v2288, %v2033
          %v2290 = vadd.f32 %v2289, %v2034
          %v2291 = vadd.f32 %v2290, %v2035
          %v2292 = vadd.f32 %v2291, %v2036
          %v2293 = vadd.f32 %v2292, %v2037
          %v2294 = vadd.f32 %v2293, %v2038
          %v2295 = vadd.f32 %v2294, %v2039
          %v2296 = vadd.f32 %v2295, %v2040
          %v2297 = vadd.f32 %v2296, %v2041
          %v2298 = vadd.f32 %v2297, %v2042
          %v2299 = vadd.f32 %v2298, %v2043
          %v2300 = vadd.f32 %v2299, %v2044
          %v2301 = vadd.f32 %v2300, %v2045
          %v2302 = vadd.f32 %v2301, %v2046
          %v2303 = vadd.f32 %v2302, %v2047
          %v2304 = vadd.f32 %v2303, %v2048
          %v2305 = vadd.f32 %v2049, %v2304
          %2306 = vst [vmem:[#allocation7] sm:$0xff] %v2305
        $region44: #{tpu_custom_call.1} parent=27 // pred_fallthru
          _
        %p2307 = scmp.lt.s32.totalorder %s246, 1
        // Predicated region
        $region45: #{tpu_custom_call.1} parent=27 // pred_check
          %p2308 = pneg %p2307
        $region46: #{tpu_custom_call.1} parent=27 // pred_check_branch
          %2310 = sbr.rel (%p2308) target = $region48
        $region47: #{tpu_custom_call.1} parent=27 // pred_region
          %v2311 = vld [vmem:[%s201] sm:$0xff]
          %v2312 = vld [vmem:[%s201 + $0x8] sm:$0xff]
          %v2313 = vld [vmem:[%s201 + $0x10] sm:$0xff]
          %v2314 = vld [vmem:[%s201 + $0x18] sm:$0xff]
          %v2315 = vld [vmem:[%s201 + $0x20] sm:$0xff]
          %v2316 = vld [vmem:[%s201 + $0x28] sm:$0xff]
          %v2317 = vld [vmem:[%s201 + $0x30] sm:$0xff]
          %v2318 = vld [vmem:[%s201 + $0x38] sm:$0xff]
          %v2319 = vld [vmem:[%s201 + $0x40] sm:$0xff]
          %v2320 = vld [vmem:[%s201 + $0x48] sm:$0xff]
          %v2321 = vld [vmem:[%s201 + $0x50] sm:$0xff]
          %v2322 = vld [vmem:[%s201 + $0x58] sm:$0xff]
          %v2323 = vld [vmem:[%s201 + $0x60] sm:$0xff]
          %v2324 = vld [vmem:[%s201 + $0x68] sm:$0xff]
          %v2325 = vld [vmem:[%s201 + $0x70] sm:$0xff]
          %v2326 = vld [vmem:[%s201 + $0x78] sm:$0xff]
          %v2327 = vld [vmem:[%s201 + $0x80] sm:$0xff]
          %v2328 = vld [vmem:[%s201 + $0x88] sm:$0xff]
          %v2329 = vld [vmem:[%s201 + $0x90] sm:$0xff]
          %v2330 = vld [vmem:[%s201 + $0x98] sm:$0xff]
          %v2331 = vld [vmem:[%s201 + $0xa0] sm:$0xff]
          %v2332 = vld [vmem:[%s201 + $0xa8] sm:$0xff]
          %v2333 = vld [vmem:[%s201 + $0xb0] sm:$0xff]
          %v2334 = vld [vmem:[%s201 + $0xb8] sm:$0xff]
          %v2335 = vld [vmem:[%s201 + $0xc0] sm:$0xff]
          %v2336 = vld [vmem:[%s201 + $0xc8] sm:$0xff]
          %v2337 = vld [vmem:[%s201 + $0xd0] sm:$0xff]
          %v2338 = vld [vmem:[%s201 + $0xd8] sm:$0xff]
          %v2339 = vld [vmem:[%s201 + $0xe0] sm:$0xff]
          %v2340 = vld [vmem:[%s201 + $0xe8] sm:$0xff]
          %v2341 = vld [vmem:[%s201 + $0xf0] sm:$0xff]
          %v2342 = vld [vmem:[%s201 + $0xf8] sm:$0xff]
          %v2343 = vld [vmem:[%s201 + $0x100] sm:$0xff]
          %v2344 = vld [vmem:[%s201 + $0x108] sm:$0xff]
          %v2345 = vld [vmem:[%s201 + $0x110] sm:$0xff]
          %v2346 = vld [vmem:[%s201 + $0x118] sm:$0xff]
          %v2347 = vld [vmem:[%s201 + $0x120] sm:$0xff]
          %v2348 = vld [vmem:[%s201 + $0x128] sm:$0xff]
          %v2349 = vld [vmem:[%s201 + $0x130] sm:$0xff]
          %v2350 = vld [vmem:[%s201 + $0x138] sm:$0xff]
          %v2351 = vld [vmem:[%s201 + $0x140] sm:$0xff]
          %v2352 = vld [vmem:[%s201 + $0x148] sm:$0xff]
          %v2353 = vld [vmem:[%s201 + $0x150] sm:$0xff]
          %v2354 = vld [vmem:[%s201 + $0x158] sm:$0xff]
          %v2355 = vld [vmem:[%s201 + $0x160] sm:$0xff]
          %v2356 = vld [vmem:[%s201 + $0x168] sm:$0xff]
          %v2357 = vld [vmem:[%s201 + $0x170] sm:$0xff]
          %v2358 = vld [vmem:[%s201 + $0x178] sm:$0xff]
          %v2359 = vld [vmem:[%s201 + $0x180] sm:$0xff]
          %v2360 = vld [vmem:[%s201 + $0x188] sm:$0xff]
          %v2361 = vld [vmem:[%s201 + $0x190] sm:$0xff]
          %v2362 = vld [vmem:[%s201 + $0x198] sm:$0xff]
          %v2363 = vld [vmem:[%s201 + $0x1a0] sm:$0xff]
          %v2364 = vld [vmem:[%s201 + $0x1a8] sm:$0xff]
          %v2365 = vld [vmem:[%s201 + $0x1b0] sm:$0xff]
          %v2366 = vld [vmem:[%s201 + $0x1b8] sm:$0xff]
          %v2367 = vld [vmem:[%s201 + $0x1c0] sm:$0xff]
          %v2368 = vld [vmem:[%s201 + $0x1c8] sm:$0xff]
          %v2369 = vld [vmem:[%s201 + $0x1d0] sm:$0xff]
          %v2370 = vld [vmem:[%s201 + $0x1d8] sm:$0xff]
          %v2371 = vld [vmem:[%s201 + $0x1e0] sm:$0xff]
          %v2372 = vld [vmem:[%s201 + $0x1e8] sm:$0xff]
          %v2373 = vld [vmem:[%s201 + $0x1f0] sm:$0xff]
          %v2374 = vld [vmem:[%s201 + $0x1f8] sm:$0xff]
          %v2375 = vld [vmem:[%s201 + $0x200] sm:$0xff]
          %v2376 = vld [vmem:[%s201 + $0x208] sm:$0xff]
          %v2377 = vld [vmem:[%s201 + $0x210] sm:$0xff]
          %v2378 = vld [vmem:[%s201 + $0x218] sm:$0xff]
          %v2379 = vld [vmem:[%s201 + $0x220] sm:$0xff]
          %v2380 = vld [vmem:[%s201 + $0x228] sm:$0xff]
          %v2381 = vld [vmem:[%s201 + $0x230] sm:$0xff]
          %v2382 = vld [vmem:[%s201 + $0x238] sm:$0xff]
          %v2383 = vld [vmem:[%s201 + $0x240] sm:$0xff]
          %v2384 = vld [vmem:[%s201 + $0x248] sm:$0xff]
          %v2385 = vld [vmem:[%s201 + $0x250] sm:$0xff]
          %v2386 = vld [vmem:[%s201 + $0x258] sm:$0xff]
          %v2387 = vld [vmem:[%s201 + $0x260] sm:$0xff]
          %v2388 = vld [vmem:[%s201 + $0x268] sm:$0xff]
          %v2389 = vld [vmem:[%s201 + $0x270] sm:$0xff]
          %v2390 = vld [vmem:[%s201 + $0x278] sm:$0xff]
          %v2391 = vld [vmem:[%s201 + $0x280] sm:$0xff]
          %v2392 = vld [vmem:[%s201 + $0x288] sm:$0xff]
          %v2393 = vld [vmem:[%s201 + $0x290] sm:$0xff]
          %v2394 = vld [vmem:[%s201 + $0x298] sm:$0xff]
          %v2395 = vld [vmem:[%s201 + $0x2a0] sm:$0xff]
          %v2396 = vld [vmem:[%s201 + $0x2a8] sm:$0xff]
          %v2397 = vld [vmem:[%s201 + $0x2b0] sm:$0xff]
          %v2398 = vld [vmem:[%s201 + $0x2b8] sm:$0xff]
          %v2399 = vld [vmem:[%s201 + $0x2c0] sm:$0xff]
          %v2400 = vld [vmem:[%s201 + $0x2c8] sm:$0xff]
          %v2401 = vld [vmem:[%s201 + $0x2d0] sm:$0xff]
          %v2402 = vld [vmem:[%s201 + $0x2d8] sm:$0xff]
          %v2403 = vld [vmem:[%s201 + $0x2e0] sm:$0xff]
          %v2404 = vld [vmem:[%s201 + $0x2e8] sm:$0xff]
          %v2405 = vld [vmem:[%s201 + $0x2f0] sm:$0xff]
          %v2406 = vld [vmem:[%s201 + $0x2f8] sm:$0xff]
          %v2407 = vld [vmem:[%s201 + $0x300] sm:$0xff]
          %v2408 = vld [vmem:[%s201 + $0x308] sm:$0xff]
          %v2409 = vld [vmem:[%s201 + $0x310] sm:$0xff]
          %v2410 = vld [vmem:[%s201 + $0x318] sm:$0xff]
          %v2411 = vld [vmem:[%s201 + $0x320] sm:$0xff]
          %v2412 = vld [vmem:[%s201 + $0x328] sm:$0xff]
          %v2413 = vld [vmem:[%s201 + $0x330] sm:$0xff]
          %v2414 = vld [vmem:[%s201 + $0x338] sm:$0xff]
          %v2415 = vld [vmem:[%s201 + $0x340] sm:$0xff]
          %v2416 = vld [vmem:[%s201 + $0x348] sm:$0xff]
          %v2417 = vld [vmem:[%s201 + $0x350] sm:$0xff]
          %v2418 = vld [vmem:[%s201 + $0x358] sm:$0xff]
          %v2419 = vld [vmem:[%s201 + $0x360] sm:$0xff]
          %v2420 = vld [vmem:[%s201 + $0x368] sm:$0xff]
          %v2421 = vld [vmem:[%s201 + $0x370] sm:$0xff]
          %v2422 = vld [vmem:[%s201 + $0x378] sm:$0xff]
          %v2423 = vld [vmem:[%s201 + $0x380] sm:$0xff]
          %v2424 = vld [vmem:[%s201 + $0x388] sm:$0xff]
          %v2425 = vld [vmem:[%s201 + $0x390] sm:$0xff]
          %v2426 = vld [vmem:[%s201 + $0x398] sm:$0xff]
          %v2427 = vld [vmem:[%s201 + $0x3a0] sm:$0xff]
          %v2428 = vld [vmem:[%s201 + $0x3a8] sm:$0xff]
          %v2429 = vld [vmem:[%s201 + $0x3b0] sm:$0xff]
          %v2430 = vld [vmem:[%s201 + $0x3b8] sm:$0xff]
          %v2431 = vld [vmem:[%s201 + $0x3c0] sm:$0xff]
          %v2432 = vld [vmem:[%s201 + $0x3c8] sm:$0xff]
          %v2433 = vld [vmem:[%s201 + $0x3d0] sm:$0xff]
          %v2434 = vld [vmem:[%s201 + $0x3d8] sm:$0xff]
          %v2435 = vld [vmem:[%s201 + $0x3e0] sm:$0xff]
          %v2436 = vld [vmem:[%s201 + $0x3e8] sm:$0xff]
          %v2437 = vld [vmem:[%s201 + $0x3f0] sm:$0xff]
          %v2438 = vld [vmem:[%s201 + $0x3f8] sm:$0xff]
          %v2439 = vld [vmem:[%s201 + $0x400] sm:$0xff]
          %v2440 = vld [vmem:[%s201 + $0x408] sm:$0xff]
          %v2441 = vld [vmem:[%s201 + $0x410] sm:$0xff]
          %v2442 = vld [vmem:[%s201 + $0x418] sm:$0xff]
          %v2443 = vld [vmem:[%s201 + $0x420] sm:$0xff]
          %v2444 = vld [vmem:[%s201 + $0x428] sm:$0xff]
          %v2445 = vld [vmem:[%s201 + $0x430] sm:$0xff]
          %v2446 = vld [vmem:[%s201 + $0x438] sm:$0xff]
          %v2447 = vld [vmem:[%s201 + $0x440] sm:$0xff]
          %v2448 = vld [vmem:[%s201 + $0x448] sm:$0xff]
          %v2449 = vld [vmem:[%s201 + $0x450] sm:$0xff]
          %v2450 = vld [vmem:[%s201 + $0x458] sm:$0xff]
          %v2451 = vld [vmem:[%s201 + $0x460] sm:$0xff]
          %v2452 = vld [vmem:[%s201 + $0x468] sm:$0xff]
          %v2453 = vld [vmem:[%s201 + $0x470] sm:$0xff]
          %v2454 = vld [vmem:[%s201 + $0x478] sm:$0xff]
          %v2455 = vld [vmem:[%s201 + $0x480] sm:$0xff]
          %v2456 = vld [vmem:[%s201 + $0x488] sm:$0xff]
          %v2457 = vld [vmem:[%s201 + $0x490] sm:$0xff]
          %v2458 = vld [vmem:[%s201 + $0x498] sm:$0xff]
          %v2459 = vld [vmem:[%s201 + $0x4a0] sm:$0xff]
          %v2460 = vld [vmem:[%s201 + $0x4a8] sm:$0xff]
          %v2461 = vld [vmem:[%s201 + $0x4b0] sm:$0xff]
          %v2462 = vld [vmem:[%s201 + $0x4b8] sm:$0xff]
          %v2463 = vld [vmem:[%s201 + $0x4c0] sm:$0xff]
          %v2464 = vld [vmem:[%s201 + $0x4c8] sm:$0xff]
          %v2465 = vld [vmem:[%s201 + $0x4d0] sm:$0xff]
          %v2466 = vld [vmem:[%s201 + $0x4d8] sm:$0xff]
          %v2467 = vld [vmem:[%s201 + $0x4e0] sm:$0xff]
          %v2468 = vld [vmem:[%s201 + $0x4e8] sm:$0xff]
          %v2469 = vld [vmem:[%s201 + $0x4f0] sm:$0xff]
          %v2470 = vld [vmem:[%s201 + $0x4f8] sm:$0xff]
          %v2471 = vld [vmem:[%s201 + $0x500] sm:$0xff]
          %v2472 = vld [vmem:[%s201 + $0x508] sm:$0xff]
          %v2473 = vld [vmem:[%s201 + $0x510] sm:$0xff]
          %v2474 = vld [vmem:[%s201 + $0x518] sm:$0xff]
          %v2475 = vld [vmem:[%s201 + $0x520] sm:$0xff]
          %v2476 = vld [vmem:[%s201 + $0x528] sm:$0xff]
          %v2477 = vld [vmem:[%s201 + $0x530] sm:$0xff]
          %v2478 = vld [vmem:[%s201 + $0x538] sm:$0xff]
          %v2479 = vld [vmem:[%s201 + $0x540] sm:$0xff]
          %v2480 = vld [vmem:[%s201 + $0x548] sm:$0xff]
          %v2481 = vld [vmem:[%s201 + $0x550] sm:$0xff]
          %v2482 = vld [vmem:[%s201 + $0x558] sm:$0xff]
          %v2483 = vld [vmem:[%s201 + $0x560] sm:$0xff]
          %v2484 = vld [vmem:[%s201 + $0x568] sm:$0xff]
          %v2485 = vld [vmem:[%s201 + $0x570] sm:$0xff]
          %v2486 = vld [vmem:[%s201 + $0x578] sm:$0xff]
          %v2487 = vld [vmem:[%s201 + $0x580] sm:$0xff]
          %v2488 = vld [vmem:[%s201 + $0x588] sm:$0xff]
          %v2489 = vld [vmem:[%s201 + $0x590] sm:$0xff]
          %v2490 = vld [vmem:[%s201 + $0x598] sm:$0xff]
          %v2491 = vld [vmem:[%s201 + $0x5a0] sm:$0xff]
          %v2492 = vld [vmem:[%s201 + $0x5a8] sm:$0xff]
          %v2493 = vld [vmem:[%s201 + $0x5b0] sm:$0xff]
          %v2494 = vld [vmem:[%s201 + $0x5b8] sm:$0xff]
          %v2495 = vld [vmem:[%s201 + $0x5c0] sm:$0xff]
          %v2496 = vld [vmem:[%s201 + $0x5c8] sm:$0xff]
          %v2497 = vld [vmem:[%s201 + $0x5d0] sm:$0xff]
          %v2498 = vld [vmem:[%s201 + $0x5d8] sm:$0xff]
          %v2499 = vld [vmem:[%s201 + $0x5e0] sm:$0xff]
          %v2500 = vld [vmem:[%s201 + $0x5e8] sm:$0xff]
          %v2501 = vld [vmem:[%s201 + $0x5f0] sm:$0xff]
          %v2502 = vld [vmem:[%s201 + $0x5f8] sm:$0xff]
          %v2503 = vld [vmem:[%s201 + $0x600] sm:$0xff]
          %v2504 = vld [vmem:[%s201 + $0x608] sm:$0xff]
          %v2505 = vld [vmem:[%s201 + $0x610] sm:$0xff]
          %v2506 = vld [vmem:[%s201 + $0x618] sm:$0xff]
          %v2507 = vld [vmem:[%s201 + $0x620] sm:$0xff]
          %v2508 = vld [vmem:[%s201 + $0x628] sm:$0xff]
          %v2509 = vld [vmem:[%s201 + $0x630] sm:$0xff]
          %v2510 = vld [vmem:[%s201 + $0x638] sm:$0xff]
          %v2511 = vld [vmem:[%s201 + $0x640] sm:$0xff]
          %v2512 = vld [vmem:[%s201 + $0x648] sm:$0xff]
          %v2513 = vld [vmem:[%s201 + $0x650] sm:$0xff]
          %v2514 = vld [vmem:[%s201 + $0x658] sm:$0xff]
          %v2515 = vld [vmem:[%s201 + $0x660] sm:$0xff]
          %v2516 = vld [vmem:[%s201 + $0x668] sm:$0xff]
          %v2517 = vld [vmem:[%s201 + $0x670] sm:$0xff]
          %v2518 = vld [vmem:[%s201 + $0x678] sm:$0xff]
          %v2519 = vld [vmem:[%s201 + $0x680] sm:$0xff]
          %v2520 = vld [vmem:[%s201 + $0x688] sm:$0xff]
          %v2521 = vld [vmem:[%s201 + $0x690] sm:$0xff]
          %v2522 = vld [vmem:[%s201 + $0x698] sm:$0xff]
          %v2523 = vld [vmem:[%s201 + $0x6a0] sm:$0xff]
          %v2524 = vld [vmem:[%s201 + $0x6a8] sm:$0xff]
          %v2525 = vld [vmem:[%s201 + $0x6b0] sm:$0xff]
          %v2526 = vld [vmem:[%s201 + $0x6b8] sm:$0xff]
          %v2527 = vld [vmem:[%s201 + $0x6c0] sm:$0xff]
          %v2528 = vld [vmem:[%s201 + $0x6c8] sm:$0xff]
          %v2529 = vld [vmem:[%s201 + $0x6d0] sm:$0xff]
          %v2530 = vld [vmem:[%s201 + $0x6d8] sm:$0xff]
          %v2531 = vld [vmem:[%s201 + $0x6e0] sm:$0xff]
          %v2532 = vld [vmem:[%s201 + $0x6e8] sm:$0xff]
          %v2533 = vld [vmem:[%s201 + $0x6f0] sm:$0xff]
          %v2534 = vld [vmem:[%s201 + $0x6f8] sm:$0xff]
          %v2535 = vld [vmem:[%s201 + $0x700] sm:$0xff]
          %v2536 = vld [vmem:[%s201 + $0x708] sm:$0xff]
          %v2537 = vld [vmem:[%s201 + $0x710] sm:$0xff]
          %v2538 = vld [vmem:[%s201 + $0x718] sm:$0xff]
          %v2539 = vld [vmem:[%s201 + $0x720] sm:$0xff]
          %v2540 = vld [vmem:[%s201 + $0x728] sm:$0xff]
          %v2541 = vld [vmem:[%s201 + $0x730] sm:$0xff]
          %v2542 = vld [vmem:[%s201 + $0x738] sm:$0xff]
          %v2543 = vld [vmem:[%s201 + $0x740] sm:$0xff]
          %v2544 = vld [vmem:[%s201 + $0x748] sm:$0xff]
          %v2545 = vld [vmem:[%s201 + $0x750] sm:$0xff]
          %v2546 = vld [vmem:[%s201 + $0x758] sm:$0xff]
          %v2547 = vld [vmem:[%s201 + $0x760] sm:$0xff]
          %v2548 = vld [vmem:[%s201 + $0x768] sm:$0xff]
          %v2549 = vld [vmem:[%s201 + $0x770] sm:$0xff]
          %v2550 = vld [vmem:[%s201 + $0x778] sm:$0xff]
          %v2551 = vld [vmem:[%s201 + $0x780] sm:$0xff]
          %v2552 = vld [vmem:[%s201 + $0x788] sm:$0xff]
          %v2553 = vld [vmem:[%s201 + $0x790] sm:$0xff]
          %v2554 = vld [vmem:[%s201 + $0x798] sm:$0xff]
          %v2555 = vld [vmem:[%s201 + $0x7a0] sm:$0xff]
          %v2556 = vld [vmem:[%s201 + $0x7a8] sm:$0xff]
          %v2557 = vld [vmem:[%s201 + $0x7b0] sm:$0xff]
          %v2558 = vld [vmem:[%s201 + $0x7b8] sm:$0xff]
          %v2559 = vld [vmem:[%s201 + $0x7c0] sm:$0xff]
          %v2560 = vld [vmem:[%s201 + $0x7c8] sm:$0xff]
          %v2561 = vld [vmem:[%s201 + $0x7d0] sm:$0xff]
          %v2562 = vld [vmem:[%s201 + $0x7d8] sm:$0xff]
          %v2563 = vld [vmem:[%s201 + $0x7e0] sm:$0xff]
          %v2564 = vld [vmem:[%s201 + $0x7e8] sm:$0xff]
          %v2565 = vld [vmem:[%s201 + $0x7f0] sm:$0xff]
          %v2566 = vld [vmem:[%s201 + $0x7f8] sm:$0xff]
          %v2567 = vld [vmem:[%s210] sm:$0xff]
          %v2568 = vld [vmem:[%s210 + $0x8] sm:$0xff]
          %v2569 = vld [vmem:[%s210 + $0x10] sm:$0xff]
          %v2570 = vld [vmem:[%s210 + $0x18] sm:$0xff]
          %v2571 = vld [vmem:[%s210 + $0x20] sm:$0xff]
          %v2572 = vld [vmem:[%s210 + $0x28] sm:$0xff]
          %v2573 = vld [vmem:[%s210 + $0x30] sm:$0xff]
          %v2574 = vld [vmem:[%s210 + $0x38] sm:$0xff]
          %v2575 = vld [vmem:[%s210 + $0x40] sm:$0xff]
          %v2576 = vld [vmem:[%s210 + $0x48] sm:$0xff]
          %v2577 = vld [vmem:[%s210 + $0x50] sm:$0xff]
          %v2578 = vld [vmem:[%s210 + $0x58] sm:$0xff]
          %v2579 = vld [vmem:[%s210 + $0x60] sm:$0xff]
          %v2580 = vld [vmem:[%s210 + $0x68] sm:$0xff]
          %v2581 = vld [vmem:[%s210 + $0x70] sm:$0xff]
          %v2582 = vld [vmem:[%s210 + $0x78] sm:$0xff]
          %v2583 = vld [vmem:[%s210 + $0x80] sm:$0xff]
          %v2584 = vld [vmem:[%s210 + $0x88] sm:$0xff]
          %v2585 = vld [vmem:[%s210 + $0x90] sm:$0xff]
          %v2586 = vld [vmem:[%s210 + $0x98] sm:$0xff]
          %v2587 = vld [vmem:[%s210 + $0xa0] sm:$0xff]
          %v2588 = vld [vmem:[%s210 + $0xa8] sm:$0xff]
          %v2589 = vld [vmem:[%s210 + $0xb0] sm:$0xff]
          %v2590 = vld [vmem:[%s210 + $0xb8] sm:$0xff]
          %v2591 = vld [vmem:[%s210 + $0xc0] sm:$0xff]
          %v2592 = vld [vmem:[%s210 + $0xc8] sm:$0xff]
          %v2593 = vld [vmem:[%s210 + $0xd0] sm:$0xff]
          %v2594 = vld [vmem:[%s210 + $0xd8] sm:$0xff]
          %v2595 = vld [vmem:[%s210 + $0xe0] sm:$0xff]
          %v2596 = vld [vmem:[%s210 + $0xe8] sm:$0xff]
          %v2597 = vld [vmem:[%s210 + $0xf0] sm:$0xff]
          %v2598 = vld [vmem:[%s210 + $0xf8] sm:$0xff]
          %v2599 = vld [vmem:[%s210 + $0x100] sm:$0xff]
          %v2600 = vld [vmem:[%s210 + $0x108] sm:$0xff]
          %v2601 = vld [vmem:[%s210 + $0x110] sm:$0xff]
          %v2602 = vld [vmem:[%s210 + $0x118] sm:$0xff]
          %v2603 = vld [vmem:[%s210 + $0x120] sm:$0xff]
          %v2604 = vld [vmem:[%s210 + $0x128] sm:$0xff]
          %v2605 = vld [vmem:[%s210 + $0x130] sm:$0xff]
          %v2606 = vld [vmem:[%s210 + $0x138] sm:$0xff]
          %v2607 = vld [vmem:[%s210 + $0x140] sm:$0xff]
          %v2608 = vld [vmem:[%s210 + $0x148] sm:$0xff]
          %v2609 = vld [vmem:[%s210 + $0x150] sm:$0xff]
          %v2610 = vld [vmem:[%s210 + $0x158] sm:$0xff]
          %v2611 = vld [vmem:[%s210 + $0x160] sm:$0xff]
          %v2612 = vld [vmem:[%s210 + $0x168] sm:$0xff]
          %v2613 = vld [vmem:[%s210 + $0x170] sm:$0xff]
          %v2614 = vld [vmem:[%s210 + $0x178] sm:$0xff]
          %v2615 = vld [vmem:[%s210 + $0x180] sm:$0xff]
          %v2616 = vld [vmem:[%s210 + $0x188] sm:$0xff]
          %v2617 = vld [vmem:[%s210 + $0x190] sm:$0xff]
          %v2618 = vld [vmem:[%s210 + $0x198] sm:$0xff]
          %v2619 = vld [vmem:[%s210 + $0x1a0] sm:$0xff]
          %v2620 = vld [vmem:[%s210 + $0x1a8] sm:$0xff]
          %v2621 = vld [vmem:[%s210 + $0x1b0] sm:$0xff]
          %v2622 = vld [vmem:[%s210 + $0x1b8] sm:$0xff]
          %v2623 = vld [vmem:[%s210 + $0x1c0] sm:$0xff]
          %v2624 = vld [vmem:[%s210 + $0x1c8] sm:$0xff]
          %v2625 = vld [vmem:[%s210 + $0x1d0] sm:$0xff]
          %v2626 = vld [vmem:[%s210 + $0x1d8] sm:$0xff]
          %v2627 = vld [vmem:[%s210 + $0x1e0] sm:$0xff]
          %v2628 = vld [vmem:[%s210 + $0x1e8] sm:$0xff]
          %v2629 = vld [vmem:[%s210 + $0x1f0] sm:$0xff]
          %v2630 = vld [vmem:[%s210 + $0x1f8] sm:$0xff]
          %v2631 = vld [vmem:[%s210 + $0x200] sm:$0xff]
          %v2632 = vld [vmem:[%s210 + $0x208] sm:$0xff]
          %v2633 = vld [vmem:[%s210 + $0x210] sm:$0xff]
          %v2634 = vld [vmem:[%s210 + $0x218] sm:$0xff]
          %v2635 = vld [vmem:[%s210 + $0x220] sm:$0xff]
          %v2636 = vld [vmem:[%s210 + $0x228] sm:$0xff]
          %v2637 = vld [vmem:[%s210 + $0x230] sm:$0xff]
          %v2638 = vld [vmem:[%s210 + $0x238] sm:$0xff]
          %v2639 = vld [vmem:[%s210 + $0x240] sm:$0xff]
          %v2640 = vld [vmem:[%s210 + $0x248] sm:$0xff]
          %v2641 = vld [vmem:[%s210 + $0x250] sm:$0xff]
          %v2642 = vld [vmem:[%s210 + $0x258] sm:$0xff]
          %v2643 = vld [vmem:[%s210 + $0x260] sm:$0xff]
          %v2644 = vld [vmem:[%s210 + $0x268] sm:$0xff]
          %v2645 = vld [vmem:[%s210 + $0x270] sm:$0xff]
          %v2646 = vld [vmem:[%s210 + $0x278] sm:$0xff]
          %v2647 = vld [vmem:[%s210 + $0x280] sm:$0xff]
          %v2648 = vld [vmem:[%s210 + $0x288] sm:$0xff]
          %v2649 = vld [vmem:[%s210 + $0x290] sm:$0xff]
          %v2650 = vld [vmem:[%s210 + $0x298] sm:$0xff]
          %v2651 = vld [vmem:[%s210 + $0x2a0] sm:$0xff]
          %v2652 = vld [vmem:[%s210 + $0x2a8] sm:$0xff]
          %v2653 = vld [vmem:[%s210 + $0x2b0] sm:$0xff]
          %v2654 = vld [vmem:[%s210 + $0x2b8] sm:$0xff]
          %v2655 = vld [vmem:[%s210 + $0x2c0] sm:$0xff]
          %v2656 = vld [vmem:[%s210 + $0x2c8] sm:$0xff]
          %v2657 = vld [vmem:[%s210 + $0x2d0] sm:$0xff]
          %v2658 = vld [vmem:[%s210 + $0x2d8] sm:$0xff]
          %v2659 = vld [vmem:[%s210 + $0x2e0] sm:$0xff]
          %v2660 = vld [vmem:[%s210 + $0x2e8] sm:$0xff]
          %v2661 = vld [vmem:[%s210 + $0x2f0] sm:$0xff]
          %v2662 = vld [vmem:[%s210 + $0x2f8] sm:$0xff]
          %v2663 = vld [vmem:[%s210 + $0x300] sm:$0xff]
          %v2664 = vld [vmem:[%s210 + $0x308] sm:$0xff]
          %v2665 = vld [vmem:[%s210 + $0x310] sm:$0xff]
          %v2666 = vld [vmem:[%s210 + $0x318] sm:$0xff]
          %v2667 = vld [vmem:[%s210 + $0x320] sm:$0xff]
          %v2668 = vld [vmem:[%s210 + $0x328] sm:$0xff]
          %v2669 = vld [vmem:[%s210 + $0x330] sm:$0xff]
          %v2670 = vld [vmem:[%s210 + $0x338] sm:$0xff]
          %v2671 = vld [vmem:[%s210 + $0x340] sm:$0xff]
          %v2672 = vld [vmem:[%s210 + $0x348] sm:$0xff]
          %v2673 = vld [vmem:[%s210 + $0x350] sm:$0xff]
          %v2674 = vld [vmem:[%s210 + $0x358] sm:$0xff]
          %v2675 = vld [vmem:[%s210 + $0x360] sm:$0xff]
          %v2676 = vld [vmem:[%s210 + $0x368] sm:$0xff]
          %v2677 = vld [vmem:[%s210 + $0x370] sm:$0xff]
          %v2678 = vld [vmem:[%s210 + $0x378] sm:$0xff]
          %v2679 = vld [vmem:[%s210 + $0x380] sm:$0xff]
          %v2680 = vld [vmem:[%s210 + $0x388] sm:$0xff]
          %v2681 = vld [vmem:[%s210 + $0x390] sm:$0xff]
          %v2682 = vld [vmem:[%s210 + $0x398] sm:$0xff]
          %v2683 = vld [vmem:[%s210 + $0x3a0] sm:$0xff]
          %v2684 = vld [vmem:[%s210 + $0x3a8] sm:$0xff]
          %v2685 = vld [vmem:[%s210 + $0x3b0] sm:$0xff]
          %v2686 = vld [vmem:[%s210 + $0x3b8] sm:$0xff]
          %v2687 = vld [vmem:[%s210 + $0x3c0] sm:$0xff]
          %v2688 = vld [vmem:[%s210 + $0x3c8] sm:$0xff]
          %v2689 = vld [vmem:[%s210 + $0x3d0] sm:$0xff]
          %v2690 = vld [vmem:[%s210 + $0x3d8] sm:$0xff]
          %v2691 = vld [vmem:[%s210 + $0x3e0] sm:$0xff]
          %v2692 = vld [vmem:[%s210 + $0x3e8] sm:$0xff]
          %v2693 = vld [vmem:[%s210 + $0x3f0] sm:$0xff]
          %v2694 = vld [vmem:[%s210 + $0x3f8] sm:$0xff]
          %v2695 = vld [vmem:[%s210 + $0x400] sm:$0xff]
          %v2696 = vld [vmem:[%s210 + $0x408] sm:$0xff]
          %v2697 = vld [vmem:[%s210 + $0x410] sm:$0xff]
          %v2698 = vld [vmem:[%s210 + $0x418] sm:$0xff]
          %v2699 = vld [vmem:[%s210 + $0x420] sm:$0xff]
          %v2700 = vld [vmem:[%s210 + $0x428] sm:$0xff]
          %v2701 = vld [vmem:[%s210 + $0x430] sm:$0xff]
          %v2702 = vld [vmem:[%s210 + $0x438] sm:$0xff]
          %v2703 = vld [vmem:[%s210 + $0x440] sm:$0xff]
          %v2704 = vld [vmem:[%s210 + $0x448] sm:$0xff]
          %v2705 = vld [vmem:[%s210 + $0x450] sm:$0xff]
          %v2706 = vld [vmem:[%s210 + $0x458] sm:$0xff]
          %v2707 = vld [vmem:[%s210 + $0x460] sm:$0xff]
          %v2708 = vld [vmem:[%s210 + $0x468] sm:$0xff]
          %v2709 = vld [vmem:[%s210 + $0x470] sm:$0xff]
          %v2710 = vld [vmem:[%s210 + $0x478] sm:$0xff]
          %v2711 = vld [vmem:[%s210 + $0x480] sm:$0xff]
          %v2712 = vld [vmem:[%s210 + $0x488] sm:$0xff]
          %v2713 = vld [vmem:[%s210 + $0x490] sm:$0xff]
          %v2714 = vld [vmem:[%s210 + $0x498] sm:$0xff]
          %v2715 = vld [vmem:[%s210 + $0x4a0] sm:$0xff]
          %v2716 = vld [vmem:[%s210 + $0x4a8] sm:$0xff]
          %v2717 = vld [vmem:[%s210 + $0x4b0] sm:$0xff]
          %v2718 = vld [vmem:[%s210 + $0x4b8] sm:$0xff]
          %v2719 = vld [vmem:[%s210 + $0x4c0] sm:$0xff]
          %v2720 = vld [vmem:[%s210 + $0x4c8] sm:$0xff]
          %v2721 = vld [vmem:[%s210 + $0x4d0] sm:$0xff]
          %v2722 = vld [vmem:[%s210 + $0x4d8] sm:$0xff]
          %v2723 = vld [vmem:[%s210 + $0x4e0] sm:$0xff]
          %v2724 = vld [vmem:[%s210 + $0x4e8] sm:$0xff]
          %v2725 = vld [vmem:[%s210 + $0x4f0] sm:$0xff]
          %v2726 = vld [vmem:[%s210 + $0x4f8] sm:$0xff]
          %v2727 = vld [vmem:[%s210 + $0x500] sm:$0xff]
          %v2728 = vld [vmem:[%s210 + $0x508] sm:$0xff]
          %v2729 = vld [vmem:[%s210 + $0x510] sm:$0xff]
          %v2730 = vld [vmem:[%s210 + $0x518] sm:$0xff]
          %v2731 = vld [vmem:[%s210 + $0x520] sm:$0xff]
          %v2732 = vld [vmem:[%s210 + $0x528] sm:$0xff]
          %v2733 = vld [vmem:[%s210 + $0x530] sm:$0xff]
          %v2734 = vld [vmem:[%s210 + $0x538] sm:$0xff]
          %v2735 = vld [vmem:[%s210 + $0x540] sm:$0xff]
          %v2736 = vld [vmem:[%s210 + $0x548] sm:$0xff]
          %v2737 = vld [vmem:[%s210 + $0x550] sm:$0xff]
          %v2738 = vld [vmem:[%s210 + $0x558] sm:$0xff]
          %v2739 = vld [vmem:[%s210 + $0x560] sm:$0xff]
          %v2740 = vld [vmem:[%s210 + $0x568] sm:$0xff]
          %v2741 = vld [vmem:[%s210 + $0x570] sm:$0xff]
          %v2742 = vld [vmem:[%s210 + $0x578] sm:$0xff]
          %v2743 = vld [vmem:[%s210 + $0x580] sm:$0xff]
          %v2744 = vld [vmem:[%s210 + $0x588] sm:$0xff]
          %v2745 = vld [vmem:[%s210 + $0x590] sm:$0xff]
          %v2746 = vld [vmem:[%s210 + $0x598] sm:$0xff]
          %v2747 = vld [vmem:[%s210 + $0x5a0] sm:$0xff]
          %v2748 = vld [vmem:[%s210 + $0x5a8] sm:$0xff]
          %v2749 = vld [vmem:[%s210 + $0x5b0] sm:$0xff]
          %v2750 = vld [vmem:[%s210 + $0x5b8] sm:$0xff]
          %v2751 = vld [vmem:[%s210 + $0x5c0] sm:$0xff]
          %v2752 = vld [vmem:[%s210 + $0x5c8] sm:$0xff]
          %v2753 = vld [vmem:[%s210 + $0x5d0] sm:$0xff]
          %v2754 = vld [vmem:[%s210 + $0x5d8] sm:$0xff]
          %v2755 = vld [vmem:[%s210 + $0x5e0] sm:$0xff]
          %v2756 = vld [vmem:[%s210 + $0x5e8] sm:$0xff]
          %v2757 = vld [vmem:[%s210 + $0x5f0] sm:$0xff]
          %v2758 = vld [vmem:[%s210 + $0x5f8] sm:$0xff]
          %v2759 = vld [vmem:[%s210 + $0x600] sm:$0xff]
          %v2760 = vld [vmem:[%s210 + $0x608] sm:$0xff]
          %v2761 = vld [vmem:[%s210 + $0x610] sm:$0xff]
          %v2762 = vld [vmem:[%s210 + $0x618] sm:$0xff]
          %v2763 = vld [vmem:[%s210 + $0x620] sm:$0xff]
          %v2764 = vld [vmem:[%s210 + $0x628] sm:$0xff]
          %v2765 = vld [vmem:[%s210 + $0x630] sm:$0xff]
          %v2766 = vld [vmem:[%s210 + $0x638] sm:$0xff]
          %v2767 = vld [vmem:[%s210 + $0x640] sm:$0xff]
          %v2768 = vld [vmem:[%s210 + $0x648] sm:$0xff]
          %v2769 = vld [vmem:[%s210 + $0x650] sm:$0xff]
          %v2770 = vld [vmem:[%s210 + $0x658] sm:$0xff]
          %v2771 = vld [vmem:[%s210 + $0x660] sm:$0xff]
          %v2772 = vld [vmem:[%s210 + $0x668] sm:$0xff]
          %v2773 = vld [vmem:[%s210 + $0x670] sm:$0xff]
          %v2774 = vld [vmem:[%s210 + $0x678] sm:$0xff]
          %v2775 = vld [vmem:[%s210 + $0x680] sm:$0xff]
          %v2776 = vld [vmem:[%s210 + $0x688] sm:$0xff]
          %v2777 = vld [vmem:[%s210 + $0x690] sm:$0xff]
          %v2778 = vld [vmem:[%s210 + $0x698] sm:$0xff]
          %v2779 = vld [vmem:[%s210 + $0x6a0] sm:$0xff]
          %v2780 = vld [vmem:[%s210 + $0x6a8] sm:$0xff]
          %v2781 = vld [vmem:[%s210 + $0x6b0] sm:$0xff]
          %v2782 = vld [vmem:[%s210 + $0x6b8] sm:$0xff]
          %v2783 = vld [vmem:[%s210 + $0x6c0] sm:$0xff]
          %v2784 = vld [vmem:[%s210 + $0x6c8] sm:$0xff]
          %v2785 = vld [vmem:[%s210 + $0x6d0] sm:$0xff]
          %v2786 = vld [vmem:[%s210 + $0x6d8] sm:$0xff]
          %v2787 = vld [vmem:[%s210 + $0x6e0] sm:$0xff]
          %v2788 = vld [vmem:[%s210 + $0x6e8] sm:$0xff]
          %v2789 = vld [vmem:[%s210 + $0x6f0] sm:$0xff]
          %v2790 = vld [vmem:[%s210 + $0x6f8] sm:$0xff]
          %v2791 = vld [vmem:[%s210 + $0x700] sm:$0xff]
          %v2792 = vld [vmem:[%s210 + $0x708] sm:$0xff]
          %v2793 = vld [vmem:[%s210 + $0x710] sm:$0xff]
          %v2794 = vld [vmem:[%s210 + $0x718] sm:$0xff]
          %v2795 = vld [vmem:[%s210 + $0x720] sm:$0xff]
          %v2796 = vld [vmem:[%s210 + $0x728] sm:$0xff]
          %v2797 = vld [vmem:[%s210 + $0x730] sm:$0xff]
          %v2798 = vld [vmem:[%s210 + $0x738] sm:$0xff]
          %v2799 = vld [vmem:[%s210 + $0x740] sm:$0xff]
          %v2800 = vld [vmem:[%s210 + $0x748] sm:$0xff]
          %v2801 = vld [vmem:[%s210 + $0x750] sm:$0xff]
          %v2802 = vld [vmem:[%s210 + $0x758] sm:$0xff]
          %v2803 = vld [vmem:[%s210 + $0x760] sm:$0xff]
          %v2804 = vld [vmem:[%s210 + $0x768] sm:$0xff]
          %v2805 = vld [vmem:[%s210 + $0x770] sm:$0xff]
          %v2806 = vld [vmem:[%s210 + $0x778] sm:$0xff]
          %v2807 = vld [vmem:[%s210 + $0x780] sm:$0xff]
          %v2808 = vld [vmem:[%s210 + $0x788] sm:$0xff]
          %v2809 = vld [vmem:[%s210 + $0x790] sm:$0xff]
          %v2810 = vld [vmem:[%s210 + $0x798] sm:$0xff]
          %v2811 = vld [vmem:[%s210 + $0x7a0] sm:$0xff]
          %v2812 = vld [vmem:[%s210 + $0x7a8] sm:$0xff]
          %v2813 = vld [vmem:[%s210 + $0x7b0] sm:$0xff]
          %v2814 = vld [vmem:[%s210 + $0x7b8] sm:$0xff]
          %v2815 = vld [vmem:[%s210 + $0x7c0] sm:$0xff]
          %v2816 = vld [vmem:[%s210 + $0x7c8] sm:$0xff]
          %v2817 = vld [vmem:[%s210 + $0x7d0] sm:$0xff]
          %v2818 = vld [vmem:[%s210 + $0x7d8] sm:$0xff]
          %v2819 = vld [vmem:[%s210 + $0x7e0] sm:$0xff]
          %v2820 = vld [vmem:[%s210 + $0x7e8] sm:$0xff]
          %v2821 = vld [vmem:[%s210 + $0x7f0] sm:$0xff]
          %v2822 = vld [vmem:[%s210 + $0x7f8] sm:$0xff]
          %v2823 = vsub.f32 %v2311, %v2567
          %v2824 = vsub.f32 %v2312, %v2568
          %v2825 = vsub.f32 %v2313, %v2569
          %v2826 = vsub.f32 %v2314, %v2570
          %v2827 = vsub.f32 %v2315, %v2571
          %v2828 = vsub.f32 %v2316, %v2572
          %v2829 = vsub.f32 %v2317, %v2573
          %v2830 = vsub.f32 %v2318, %v2574
          %v2831 = vsub.f32 %v2319, %v2575
          %v2832 = vsub.f32 %v2320, %v2576
          %v2833 = vsub.f32 %v2321, %v2577
          %v2834 = vsub.f32 %v2322, %v2578
          %v2835 = vsub.f32 %v2323, %v2579
          %v2836 = vsub.f32 %v2324, %v2580
          %v2837 = vsub.f32 %v2325, %v2581
          %v2838 = vsub.f32 %v2326, %v2582
          %v2839 = vsub.f32 %v2327, %v2583
          %v2840 = vsub.f32 %v2328, %v2584
          %v2841 = vsub.f32 %v2329, %v2585
          %v2842 = vsub.f32 %v2330, %v2586
          %v2843 = vsub.f32 %v2331, %v2587
          %v2844 = vsub.f32 %v2332, %v2588
          %v2845 = vsub.f32 %v2333, %v2589
          %v2846 = vsub.f32 %v2334, %v2590
          %v2847 = vsub.f32 %v2335, %v2591
          %v2848 = vsub.f32 %v2336, %v2592
          %v2849 = vsub.f32 %v2337, %v2593
          %v2850 = vsub.f32 %v2338, %v2594
          %v2851 = vsub.f32 %v2339, %v2595
          %v2852 = vsub.f32 %v2340, %v2596
          %v2853 = vsub.f32 %v2341, %v2597
          %v2854 = vsub.f32 %v2342, %v2598
          %v2855 = vsub.f32 %v2343, %v2599
          %v2856 = vsub.f32 %v2344, %v2600
          %v2857 = vsub.f32 %v2345, %v2601
          %v2858 = vsub.f32 %v2346, %v2602
          %v2859 = vsub.f32 %v2347, %v2603
          %v2860 = vsub.f32 %v2348, %v2604
          %v2861 = vsub.f32 %v2349, %v2605
          %v2862 = vsub.f32 %v2350, %v2606
          %v2863 = vsub.f32 %v2351, %v2607
          %v2864 = vsub.f32 %v2352, %v2608
          %v2865 = vsub.f32 %v2353, %v2609
          %v2866 = vsub.f32 %v2354, %v2610
          %v2867 = vsub.f32 %v2355, %v2611
          %v2868 = vsub.f32 %v2356, %v2612
          %v2869 = vsub.f32 %v2357, %v2613
          %v2870 = vsub.f32 %v2358, %v2614
          %v2871 = vsub.f32 %v2359, %v2615
          %v2872 = vsub.f32 %v2360, %v2616
          %v2873 = vsub.f32 %v2361, %v2617
          %v2874 = vsub.f32 %v2362, %v2618
          %v2875 = vsub.f32 %v2363, %v2619
          %v2876 = vsub.f32 %v2364, %v2620
          %v2877 = vsub.f32 %v2365, %v2621
          %v2878 = vsub.f32 %v2366, %v2622
          %v2879 = vsub.f32 %v2367, %v2623
          %v2880 = vsub.f32 %v2368, %v2624
          %v2881 = vsub.f32 %v2369, %v2625
          %v2882 = vsub.f32 %v2370, %v2626
          %v2883 = vsub.f32 %v2371, %v2627
          %v2884 = vsub.f32 %v2372, %v2628
          %v2885 = vsub.f32 %v2373, %v2629
          %v2886 = vsub.f32 %v2374, %v2630
          %v2887 = vsub.f32 %v2375, %v2631
          %v2888 = vsub.f32 %v2376, %v2632
          %v2889 = vsub.f32 %v2377, %v2633
          %v2890 = vsub.f32 %v2378, %v2634
          %v2891 = vsub.f32 %v2379, %v2635
          %v2892 = vsub.f32 %v2380, %v2636
          %v2893 = vsub.f32 %v2381, %v2637
          %v2894 = vsub.f32 %v2382, %v2638
          %v2895 = vsub.f32 %v2383, %v2639
          %v2896 = vsub.f32 %v2384, %v2640
          %v2897 = vsub.f32 %v2385, %v2641
          %v2898 = vsub.f32 %v2386, %v2642
          %v2899 = vsub.f32 %v2387, %v2643
          %v2900 = vsub.f32 %v2388, %v2644
          %v2901 = vsub.f32 %v2389, %v2645
          %v2902 = vsub.f32 %v2390, %v2646
          %v2903 = vsub.f32 %v2391, %v2647
          %v2904 = vsub.f32 %v2392, %v2648
          %v2905 = vsub.f32 %v2393, %v2649
          %v2906 = vsub.f32 %v2394, %v2650
          %v2907 = vsub.f32 %v2395, %v2651
          %v2908 = vsub.f32 %v2396, %v2652
          %v2909 = vsub.f32 %v2397, %v2653
          %v2910 = vsub.f32 %v2398, %v2654
          %v2911 = vsub.f32 %v2399, %v2655
          %v2912 = vsub.f32 %v2400, %v2656
          %v2913 = vsub.f32 %v2401, %v2657
          %v2914 = vsub.f32 %v2402, %v2658
          %v2915 = vsub.f32 %v2403, %v2659
          %v2916 = vsub.f32 %v2404, %v2660
          %v2917 = vsub.f32 %v2405, %v2661
          %v2918 = vsub.f32 %v2406, %v2662
          %v2919 = vsub.f32 %v2407, %v2663
          %v2920 = vsub.f32 %v2408, %v2664
          %v2921 = vsub.f32 %v2409, %v2665
          %v2922 = vsub.f32 %v2410, %v2666
          %v2923 = vsub.f32 %v2411, %v2667
          %v2924 = vsub.f32 %v2412, %v2668
          %v2925 = vsub.f32 %v2413, %v2669
          %v2926 = vsub.f32 %v2414, %v2670
          %v2927 = vsub.f32 %v2415, %v2671
          %v2928 = vsub.f32 %v2416, %v2672
          %v2929 = vsub.f32 %v2417, %v2673
          %v2930 = vsub.f32 %v2418, %v2674
          %v2931 = vsub.f32 %v2419, %v2675
          %v2932 = vsub.f32 %v2420, %v2676
          %v2933 = vsub.f32 %v2421, %v2677
          %v2934 = vsub.f32 %v2422, %v2678
          %v2935 = vsub.f32 %v2423, %v2679
          %v2936 = vsub.f32 %v2424, %v2680
          %v2937 = vsub.f32 %v2425, %v2681
          %v2938 = vsub.f32 %v2426, %v2682
          %v2939 = vsub.f32 %v2427, %v2683
          %v2940 = vsub.f32 %v2428, %v2684
          %v2941 = vsub.f32 %v2429, %v2685
          %v2942 = vsub.f32 %v2430, %v2686
          %v2943 = vsub.f32 %v2431, %v2687
          %v2944 = vsub.f32 %v2432, %v2688
          %v2945 = vsub.f32 %v2433, %v2689
          %v2946 = vsub.f32 %v2434, %v2690
          %v2947 = vsub.f32 %v2435, %v2691
          %v2948 = vsub.f32 %v2436, %v2692
          %v2949 = vsub.f32 %v2437, %v2693
          %v2950 = vsub.f32 %v2438, %v2694
          %v2951 = vsub.f32 %v2439, %v2695
          %v2952 = vsub.f32 %v2440, %v2696
          %v2953 = vsub.f32 %v2441, %v2697
          %v2954 = vsub.f32 %v2442, %v2698
          %v2955 = vsub.f32 %v2443, %v2699
          %v2956 = vsub.f32 %v2444, %v2700
          %v2957 = vsub.f32 %v2445, %v2701
          %v2958 = vsub.f32 %v2446, %v2702
          %v2959 = vsub.f32 %v2447, %v2703
          %v2960 = vsub.f32 %v2448, %v2704
          %v2961 = vsub.f32 %v2449, %v2705
          %v2962 = vsub.f32 %v2450, %v2706
          %v2963 = vsub.f32 %v2451, %v2707
          %v2964 = vsub.f32 %v2452, %v2708
          %v2965 = vsub.f32 %v2453, %v2709
          %v2966 = vsub.f32 %v2454, %v2710
          %v2967 = vsub.f32 %v2455, %v2711
          %v2968 = vsub.f32 %v2456, %v2712
          %v2969 = vsub.f32 %v2457, %v2713
          %v2970 = vsub.f32 %v2458, %v2714
          %v2971 = vsub.f32 %v2459, %v2715
          %v2972 = vsub.f32 %v2460, %v2716
          %v2973 = vsub.f32 %v2461, %v2717
          %v2974 = vsub.f32 %v2462, %v2718
          %v2975 = vsub.f32 %v2463, %v2719
          %v2976 = vsub.f32 %v2464, %v2720
          %v2977 = vsub.f32 %v2465, %v2721
          %v2978 = vsub.f32 %v2466, %v2722
          %v2979 = vsub.f32 %v2467, %v2723
          %v2980 = vsub.f32 %v2468, %v2724
          %v2981 = vsub.f32 %v2469, %v2725
          %v2982 = vsub.f32 %v2470, %v2726
          %v2983 = vsub.f32 %v2471, %v2727
          %v2984 = vsub.f32 %v2472, %v2728
          %v2985 = vsub.f32 %v2473, %v2729
          %v2986 = vsub.f32 %v2474, %v2730
          %v2987 = vsub.f32 %v2475, %v2731
          %v2988 = vsub.f32 %v2476, %v2732
          %v2989 = vsub.f32 %v2477, %v2733
          %v2990 = vsub.f32 %v2478, %v2734
          %v2991 = vsub.f32 %v2479, %v2735
          %v2992 = vsub.f32 %v2480, %v2736
          %v2993 = vsub.f32 %v2481, %v2737
          %v2994 = vsub.f32 %v2482, %v2738
          %v2995 = vsub.f32 %v2483, %v2739
          %v2996 = vsub.f32 %v2484, %v2740
          %v2997 = vsub.f32 %v2485, %v2741
          %v2998 = vsub.f32 %v2486, %v2742
          %v2999 = vsub.f32 %v2487, %v2743
          %v3000 = vsub.f32 %v2488, %v2744
          %v3001 = vsub.f32 %v2489, %v2745
          %v3002 = vsub.f32 %v2490, %v2746
          %v3003 = vsub.f32 %v2491, %v2747
          %v3004 = vsub.f32 %v2492, %v2748
          %v3005 = vsub.f32 %v2493, %v2749
          %v3006 = vsub.f32 %v2494, %v2750
          %v3007 = vsub.f32 %v2495, %v2751
          %v3008 = vsub.f32 %v2496, %v2752
          %v3009 = vsub.f32 %v2497, %v2753
          %v3010 = vsub.f32 %v2498, %v2754
          %v3011 = vsub.f32 %v2499, %v2755
          %v3012 = vsub.f32 %v2500, %v2756
          %v3013 = vsub.f32 %v2501, %v2757
          %v3014 = vsub.f32 %v2502, %v2758
          %v3015 = vsub.f32 %v2503, %v2759
          %v3016 = vsub.f32 %v2504, %v2760
          %v3017 = vsub.f32 %v2505, %v2761
          %v3018 = vsub.f32 %v2506, %v2762
          %v3019 = vsub.f32 %v2507, %v2763
          %v3020 = vsub.f32 %v2508, %v2764
          %v3021 = vsub.f32 %v2509, %v2765
          %v3022 = vsub.f32 %v2510, %v2766
          %v3023 = vsub.f32 %v2511, %v2767
          %v3024 = vsub.f32 %v2512, %v2768
          %v3025 = vsub.f32 %v2513, %v2769
          %v3026 = vsub.f32 %v2514, %v2770
          %v3027 = vsub.f32 %v2515, %v2771
          %v3028 = vsub.f32 %v2516, %v2772
          %v3029 = vsub.f32 %v2517, %v2773
          %v3030 = vsub.f32 %v2518, %v2774
          %v3031 = vsub.f32 %v2519, %v2775
          %v3032 = vsub.f32 %v2520, %v2776
          %v3033 = vsub.f32 %v2521, %v2777
          %v3034 = vsub.f32 %v2522, %v2778
          %v3035 = vsub.f32 %v2523, %v2779
          %v3036 = vsub.f32 %v2524, %v2780
          %v3037 = vsub.f32 %v2525, %v2781
          %v3038 = vsub.f32 %v2526, %v2782
          %v3039 = vsub.f32 %v2527, %v2783
          %v3040 = vsub.f32 %v2528, %v2784
          %v3041 = vsub.f32 %v2529, %v2785
          %v3042 = vsub.f32 %v2530, %v2786
          %v3043 = vsub.f32 %v2531, %v2787
          %v3044 = vsub.f32 %v2532, %v2788
          %v3045 = vsub.f32 %v2533, %v2789
          %v3046 = vsub.f32 %v2534, %v2790
          %v3047 = vsub.f32 %v2535, %v2791
          %v3048 = vsub.f32 %v2536, %v2792
          %v3049 = vsub.f32 %v2537, %v2793
          %v3050 = vsub.f32 %v2538, %v2794
          %v3051 = vsub.f32 %v2539, %v2795
          %v3052 = vsub.f32 %v2540, %v2796
          %v3053 = vsub.f32 %v2541, %v2797
          %v3054 = vsub.f32 %v2542, %v2798
          %v3055 = vsub.f32 %v2543, %v2799
          %v3056 = vsub.f32 %v2544, %v2800
          %v3057 = vsub.f32 %v2545, %v2801
          %v3058 = vsub.f32 %v2546, %v2802
          %v3059 = vsub.f32 %v2547, %v2803
          %v3060 = vsub.f32 %v2548, %v2804
          %v3061 = vsub.f32 %v2549, %v2805
          %v3062 = vsub.f32 %v2550, %v2806
          %v3063 = vsub.f32 %v2551, %v2807
          %v3064 = vsub.f32 %v2552, %v2808
          %v3065 = vsub.f32 %v2553, %v2809
          %v3066 = vsub.f32 %v2554, %v2810
          %v3067 = vsub.f32 %v2555, %v2811
          %v3068 = vsub.f32 %v2556, %v2812
          %v3069 = vsub.f32 %v2557, %v2813
          %v3070 = vsub.f32 %v2558, %v2814
          %v3071 = vsub.f32 %v2559, %v2815
          %v3072 = vsub.f32 %v2560, %v2816
          %v3073 = vsub.f32 %v2561, %v2817
          %v3074 = vsub.f32 %v2562, %v2818
          %v3075 = vsub.f32 %v2563, %v2819
          %v3076 = vsub.f32 %v2564, %v2820
          %v3077 = vsub.f32 %v2565, %v2821
          %v3078 = vsub.f32 %v2566, %v2822
          %v3079 = vmul.f32 %v2823, %v2823
          %v3080 = vmul.f32 %v2824, %v2824
          %v3081 = vmul.f32 %v2825, %v2825
          %v3082 = vmul.f32 %v2826, %v2826
          %v3083 = vmul.f32 %v2827, %v2827
          %v3084 = vmul.f32 %v2828, %v2828
          %v3085 = vmul.f32 %v2829, %v2829
          %v3086 = vmul.f32 %v2830, %v2830
          %v3087 = vmul.f32 %v2831, %v2831
          %v3088 = vmul.f32 %v2832, %v2832
          %v3089 = vmul.f32 %v2833, %v2833
          %v3090 = vmul.f32 %v2834, %v2834
          %v3091 = vmul.f32 %v2835, %v2835
          %v3092 = vmul.f32 %v2836, %v2836
          %v3093 = vmul.f32 %v2837, %v2837
          %v3094 = vmul.f32 %v2838, %v2838
          %v3095 = vmul.f32 %v2839, %v2839
          %v3096 = vmul.f32 %v2840, %v2840
          %v3097 = vmul.f32 %v2841, %v2841
          %v3098 = vmul.f32 %v2842, %v2842
          %v3099 = vmul.f32 %v2843, %v2843
          %v3100 = vmul.f32 %v2844, %v2844
          %v3101 = vmul.f32 %v2845, %v2845
          %v3102 = vmul.f32 %v2846, %v2846
          %v3103 = vmul.f32 %v2847, %v2847
          %v3104 = vmul.f32 %v2848, %v2848
          %v3105 = vmul.f32 %v2849, %v2849
          %v3106 = vmul.f32 %v2850, %v2850
          %v3107 = vmul.f32 %v2851, %v2851
          %v3108 = vmul.f32 %v2852, %v2852
          %v3109 = vmul.f32 %v2853, %v2853
          %v3110 = vmul.f32 %v2854, %v2854
          %v3111 = vmul.f32 %v2855, %v2855
          %v3112 = vmul.f32 %v2856, %v2856
          %v3113 = vmul.f32 %v2857, %v2857
          %v3114 = vmul.f32 %v2858, %v2858
          %v3115 = vmul.f32 %v2859, %v2859
          %v3116 = vmul.f32 %v2860, %v2860
          %v3117 = vmul.f32 %v2861, %v2861
          %v3118 = vmul.f32 %v2862, %v2862
          %v3119 = vmul.f32 %v2863, %v2863
          %v3120 = vmul.f32 %v2864, %v2864
          %v3121 = vmul.f32 %v2865, %v2865
          %v3122 = vmul.f32 %v2866, %v2866
          %v3123 = vmul.f32 %v2867, %v2867
          %v3124 = vmul.f32 %v2868, %v2868
          %v3125 = vmul.f32 %v2869, %v2869
          %v3126 = vmul.f32 %v2870, %v2870
          %v3127 = vmul.f32 %v2871, %v2871
          %v3128 = vmul.f32 %v2872, %v2872
          %v3129 = vmul.f32 %v2873, %v2873
          %v3130 = vmul.f32 %v2874, %v2874
          %v3131 = vmul.f32 %v2875, %v2875
          %v3132 = vmul.f32 %v2876, %v2876
          %v3133 = vmul.f32 %v2877, %v2877
          %v3134 = vmul.f32 %v2878, %v2878
          %v3135 = vmul.f32 %v2879, %v2879
          %v3136 = vmul.f32 %v2880, %v2880
          %v3137 = vmul.f32 %v2881, %v2881
          %v3138 = vmul.f32 %v2882, %v2882
          %v3139 = vmul.f32 %v2883, %v2883
          %v3140 = vmul.f32 %v2884, %v2884
          %v3141 = vmul.f32 %v2885, %v2885
          %v3142 = vmul.f32 %v2886, %v2886
          %v3143 = vmul.f32 %v2887, %v2887
          %v3144 = vmul.f32 %v2888, %v2888
          %v3145 = vmul.f32 %v2889, %v2889
          %v3146 = vmul.f32 %v2890, %v2890
          %v3147 = vmul.f32 %v2891, %v2891
          %v3148 = vmul.f32 %v2892, %v2892
          %v3149 = vmul.f32 %v2893, %v2893
          %v3150 = vmul.f32 %v2894, %v2894
          %v3151 = vmul.f32 %v2895, %v2895
          %v3152 = vmul.f32 %v2896, %v2896
          %v3153 = vmul.f32 %v2897, %v2897
          %v3154 = vmul.f32 %v2898, %v2898
          %v3155 = vmul.f32 %v2899, %v2899
          %v3156 = vmul.f32 %v2900, %v2900
          %v3157 = vmul.f32 %v2901, %v2901
          %v3158 = vmul.f32 %v2902, %v2902
          %v3159 = vmul.f32 %v2903, %v2903
          %v3160 = vmul.f32 %v2904, %v2904
          %v3161 = vmul.f32 %v2905, %v2905
          %v3162 = vmul.f32 %v2906, %v2906
          %v3163 = vmul.f32 %v2907, %v2907
          %v3164 = vmul.f32 %v2908, %v2908
          %v3165 = vmul.f32 %v2909, %v2909
          %v3166 = vmul.f32 %v2910, %v2910
          %v3167 = vmul.f32 %v2911, %v2911
          %v3168 = vmul.f32 %v2912, %v2912
          %v3169 = vmul.f32 %v2913, %v2913
          %v3170 = vmul.f32 %v2914, %v2914
          %v3171 = vmul.f32 %v2915, %v2915
          %v3172 = vmul.f32 %v2916, %v2916
          %v3173 = vmul.f32 %v2917, %v2917
          %v3174 = vmul.f32 %v2918, %v2918
          %v3175 = vmul.f32 %v2919, %v2919
          %v3176 = vmul.f32 %v2920, %v2920
          %v3177 = vmul.f32 %v2921, %v2921
          %v3178 = vmul.f32 %v2922, %v2922
          %v3179 = vmul.f32 %v2923, %v2923
          %v3180 = vmul.f32 %v2924, %v2924
          %v3181 = vmul.f32 %v2925, %v2925
          %v3182 = vmul.f32 %v2926, %v2926
          %v3183 = vmul.f32 %v2927, %v2927
          %v3184 = vmul.f32 %v2928, %v2928
          %v3185 = vmul.f32 %v2929, %v2929
          %v3186 = vmul.f32 %v2930, %v2930
          %v3187 = vmul.f32 %v2931, %v2931
          %v3188 = vmul.f32 %v2932, %v2932
          %v3189 = vmul.f32 %v2933, %v2933
          %v3190 = vmul.f32 %v2934, %v2934
          %v3191 = vmul.f32 %v2935, %v2935
          %v3192 = vmul.f32 %v2936, %v2936
          %v3193 = vmul.f32 %v2937, %v2937
          %v3194 = vmul.f32 %v2938, %v2938
          %v3195 = vmul.f32 %v2939, %v2939
          %v3196 = vmul.f32 %v2940, %v2940
          %v3197 = vmul.f32 %v2941, %v2941
          %v3198 = vmul.f32 %v2942, %v2942
          %v3199 = vmul.f32 %v2943, %v2943
          %v3200 = vmul.f32 %v2944, %v2944
          %v3201 = vmul.f32 %v2945, %v2945
          %v3202 = vmul.f32 %v2946, %v2946
          %v3203 = vmul.f32 %v2947, %v2947
          %v3204 = vmul.f32 %v2948, %v2948
          %v3205 = vmul.f32 %v2949, %v2949
          %v3206 = vmul.f32 %v2950, %v2950
          %v3207 = vmul.f32 %v2951, %v2951
          %v3208 = vmul.f32 %v2952, %v2952
          %v3209 = vmul.f32 %v2953, %v2953
          %v3210 = vmul.f32 %v2954, %v2954
          %v3211 = vmul.f32 %v2955, %v2955
          %v3212 = vmul.f32 %v2956, %v2956
          %v3213 = vmul.f32 %v2957, %v2957
          %v3214 = vmul.f32 %v2958, %v2958
          %v3215 = vmul.f32 %v2959, %v2959
          %v3216 = vmul.f32 %v2960, %v2960
          %v3217 = vmul.f32 %v2961, %v2961
          %v3218 = vmul.f32 %v2962, %v2962
          %v3219 = vmul.f32 %v2963, %v2963
          %v3220 = vmul.f32 %v2964, %v2964
          %v3221 = vmul.f32 %v2965, %v2965
          %v3222 = vmul.f32 %v2966, %v2966
          %v3223 = vmul.f32 %v2967, %v2967
          %v3224 = vmul.f32 %v2968, %v2968
          %v3225 = vmul.f32 %v2969, %v2969
          %v3226 = vmul.f32 %v2970, %v2970
          %v3227 = vmul.f32 %v2971, %v2971
          %v3228 = vmul.f32 %v2972, %v2972
          %v3229 = vmul.f32 %v2973, %v2973
          %v3230 = vmul.f32 %v2974, %v2974
          %v3231 = vmul.f32 %v2975, %v2975
          %v3232 = vmul.f32 %v2976, %v2976
          %v3233 = vmul.f32 %v2977, %v2977
          %v3234 = vmul.f32 %v2978, %v2978
          %v3235 = vmul.f32 %v2979, %v2979
          %v3236 = vmul.f32 %v2980, %v2980
          %v3237 = vmul.f32 %v2981, %v2981
          %v3238 = vmul.f32 %v2982, %v2982
          %v3239 = vmul.f32 %v2983, %v2983
          %v3240 = vmul.f32 %v2984, %v2984
          %v3241 = vmul.f32 %v2985, %v2985
          %v3242 = vmul.f32 %v2986, %v2986
          %v3243 = vmul.f32 %v2987, %v2987
          %v3244 = vmul.f32 %v2988, %v2988
          %v3245 = vmul.f32 %v2989, %v2989
          %v3246 = vmul.f32 %v2990, %v2990
          %v3247 = vmul.f32 %v2991, %v2991
          %v3248 = vmul.f32 %v2992, %v2992
          %v3249 = vmul.f32 %v2993, %v2993
          %v3250 = vmul.f32 %v2994, %v2994
          %v3251 = vmul.f32 %v2995, %v2995
          %v3252 = vmul.f32 %v2996, %v2996
          %v3253 = vmul.f32 %v2997, %v2997
          %v3254 = vmul.f32 %v2998, %v2998
          %v3255 = vmul.f32 %v2999, %v2999
          %v3256 = vmul.f32 %v3000, %v3000
          %v3257 = vmul.f32 %v3001, %v3001
          %v3258 = vmul.f32 %v3002, %v3002
          %v3259 = vmul.f32 %v3003, %v3003
          %v3260 = vmul.f32 %v3004, %v3004
          %v3261 = vmul.f32 %v3005, %v3005
          %v3262 = vmul.f32 %v3006, %v3006
          %v3263 = vmul.f32 %v3007, %v3007
          %v3264 = vmul.f32 %v3008, %v3008
          %v3265 = vmul.f32 %v3009, %v3009
          %v3266 = vmul.f32 %v3010, %v3010
          %v3267 = vmul.f32 %v3011, %v3011
          %v3268 = vmul.f32 %v3012, %v3012
          %v3269 = vmul.f32 %v3013, %v3013
          %v3270 = vmul.f32 %v3014, %v3014
          %v3271 = vmul.f32 %v3015, %v3015
          %v3272 = vmul.f32 %v3016, %v3016
          %v3273 = vmul.f32 %v3017, %v3017
          %v3274 = vmul.f32 %v3018, %v3018
          %v3275 = vmul.f32 %v3019, %v3019
          %v3276 = vmul.f32 %v3020, %v3020
          %v3277 = vmul.f32 %v3021, %v3021
          %v3278 = vmul.f32 %v3022, %v3022
          %v3279 = vmul.f32 %v3023, %v3023
          %v3280 = vmul.f32 %v3024, %v3024
          %v3281 = vmul.f32 %v3025, %v3025
          %v3282 = vmul.f32 %v3026, %v3026
          %v3283 = vmul.f32 %v3027, %v3027
          %v3284 = vmul.f32 %v3028, %v3028
          %v3285 = vmul.f32 %v3029, %v3029
          %v3286 = vmul.f32 %v3030, %v3030
          %v3287 = vmul.f32 %v3031, %v3031
          %v3288 = vmul.f32 %v3032, %v3032
          %v3289 = vmul.f32 %v3033, %v3033
          %v3290 = vmul.f32 %v3034, %v3034
          %v3291 = vmul.f32 %v3035, %v3035
          %v3292 = vmul.f32 %v3036, %v3036
          %v3293 = vmul.f32 %v3037, %v3037
          %v3294 = vmul.f32 %v3038, %v3038
          %v3295 = vmul.f32 %v3039, %v3039
          %v3296 = vmul.f32 %v3040, %v3040
          %v3297 = vmul.f32 %v3041, %v3041
          %v3298 = vmul.f32 %v3042, %v3042
          %v3299 = vmul.f32 %v3043, %v3043
          %v3300 = vmul.f32 %v3044, %v3044
          %v3301 = vmul.f32 %v3045, %v3045
          %v3302 = vmul.f32 %v3046, %v3046
          %v3303 = vmul.f32 %v3047, %v3047
          %v3304 = vmul.f32 %v3048, %v3048
          %v3305 = vmul.f32 %v3049, %v3049
          %v3306 = vmul.f32 %v3050, %v3050
          %v3307 = vmul.f32 %v3051, %v3051
          %v3308 = vmul.f32 %v3052, %v3052
          %v3309 = vmul.f32 %v3053, %v3053
          %v3310 = vmul.f32 %v3054, %v3054
          %v3311 = vmul.f32 %v3055, %v3055
          %v3312 = vmul.f32 %v3056, %v3056
          %v3313 = vmul.f32 %v3057, %v3057
          %v3314 = vmul.f32 %v3058, %v3058
          %v3315 = vmul.f32 %v3059, %v3059
          %v3316 = vmul.f32 %v3060, %v3060
          %v3317 = vmul.f32 %v3061, %v3061
          %v3318 = vmul.f32 %v3062, %v3062
          %v3319 = vmul.f32 %v3063, %v3063
          %v3320 = vmul.f32 %v3064, %v3064
          %v3321 = vmul.f32 %v3065, %v3065
          %v3322 = vmul.f32 %v3066, %v3066
          %v3323 = vmul.f32 %v3067, %v3067
          %v3324 = vmul.f32 %v3068, %v3068
          %v3325 = vmul.f32 %v3069, %v3069
          %v3326 = vmul.f32 %v3070, %v3070
          %v3327 = vmul.f32 %v3071, %v3071
          %v3328 = vmul.f32 %v3072, %v3072
          %v3329 = vmul.f32 %v3073, %v3073
          %v3330 = vmul.f32 %v3074, %v3074
          %v3331 = vmul.f32 %v3075, %v3075
          %v3332 = vmul.f32 %v3076, %v3076
          %v3333 = vmul.f32 %v3077, %v3077
          %v3334 = vmul.f32 %v3078, %v3078
          %v3335 = vld [vmem:[#allocation7] sm:$0xff]
          %v3336 = vadd.f32 %v3079, %v3080
          %v3337 = vadd.f32 %v3336, %v3081
          %v3338 = vadd.f32 %v3337, %v3082
          %v3339 = vadd.f32 %v3338, %v3083
          %v3340 = vadd.f32 %v3339, %v3084
          %v3341 = vadd.f32 %v3340, %v3085
          %v3342 = vadd.f32 %v3341, %v3086
          %v3343 = vadd.f32 %v3342, %v3087
          %v3344 = vadd.f32 %v3343, %v3088
          %v3345 = vadd.f32 %v3344, %v3089
          %v3346 = vadd.f32 %v3345, %v3090
          %v3347 = vadd.f32 %v3346, %v3091
          %v3348 = vadd.f32 %v3347, %v3092
          %v3349 = vadd.f32 %v3348, %v3093
          %v3350 = vadd.f32 %v3349, %v3094
          %v3351 = vadd.f32 %v3350, %v3095
          %v3352 = vadd.f32 %v3351, %v3096
          %v3353 = vadd.f32 %v3352, %v3097
          %v3354 = vadd.f32 %v3353, %v3098
          %v3355 = vadd.f32 %v3354, %v3099
          %v3356 = vadd.f32 %v3355, %v3100
          %v3357 = vadd.f32 %v3356, %v3101
          %v3358 = vadd.f32 %v3357, %v3102
          %v3359 = vadd.f32 %v3358, %v3103
          %v3360 = vadd.f32 %v3359, %v3104
          %v3361 = vadd.f32 %v3360, %v3105
          %v3362 = vadd.f32 %v3361, %v3106
          %v3363 = vadd.f32 %v3362, %v3107
          %v3364 = vadd.f32 %v3363, %v3108
          %v3365 = vadd.f32 %v3364, %v3109
          %v3366 = vadd.f32 %v3365, %v3110
          %v3367 = vadd.f32 %v3366, %v3111
          %v3368 = vadd.f32 %v3367, %v3112
          %v3369 = vadd.f32 %v3368, %v3113
          %v3370 = vadd.f32 %v3369, %v3114
          %v3371 = vadd.f32 %v3370, %v3115
          %v3372 = vadd.f32 %v3371, %v3116
          %v3373 = vadd.f32 %v3372, %v3117
          %v3374 = vadd.f32 %v3373, %v3118
          %v3375 = vadd.f32 %v3374, %v3119
          %v3376 = vadd.f32 %v3375, %v3120
          %v3377 = vadd.f32 %v3376, %v3121
          %v3378 = vadd.f32 %v3377, %v3122
          %v3379 = vadd.f32 %v3378, %v3123
          %v3380 = vadd.f32 %v3379, %v3124
          %v3381 = vadd.f32 %v3380, %v3125
          %v3382 = vadd.f32 %v3381, %v3126
          %v3383 = vadd.f32 %v3382, %v3127
          %v3384 = vadd.f32 %v3383, %v3128
          %v3385 = vadd.f32 %v3384, %v3129
          %v3386 = vadd.f32 %v3385, %v3130
          %v3387 = vadd.f32 %v3386, %v3131
          %v3388 = vadd.f32 %v3387, %v3132
          %v3389 = vadd.f32 %v3388, %v3133
          %v3390 = vadd.f32 %v3389, %v3134
          %v3391 = vadd.f32 %v3390, %v3135
          %v3392 = vadd.f32 %v3391, %v3136
          %v3393 = vadd.f32 %v3392, %v3137
          %v3394 = vadd.f32 %v3393, %v3138
          %v3395 = vadd.f32 %v3394, %v3139
          %v3396 = vadd.f32 %v3395, %v3140
          %v3397 = vadd.f32 %v3396, %v3141
          %v3398 = vadd.f32 %v3397, %v3142
          %v3399 = vadd.f32 %v3398, %v3143
          %v3400 = vadd.f32 %v3399, %v3144
          %v3401 = vadd.f32 %v3400, %v3145
          %v3402 = vadd.f32 %v3401, %v3146
          %v3403 = vadd.f32 %v3402, %v3147
          %v3404 = vadd.f32 %v3403, %v3148
          %v3405 = vadd.f32 %v3404, %v3149
          %v3406 = vadd.f32 %v3405, %v3150
          %v3407 = vadd.f32 %v3406, %v3151
          %v3408 = vadd.f32 %v3407, %v3152
          %v3409 = vadd.f32 %v3408, %v3153
          %v3410 = vadd.f32 %v3409, %v3154
          %v3411 = vadd.f32 %v3410, %v3155
          %v3412 = vadd.f32 %v3411, %v3156
          %v3413 = vadd.f32 %v3412, %v3157
          %v3414 = vadd.f32 %v3413, %v3158
          %v3415 = vadd.f32 %v3414, %v3159
          %v3416 = vadd.f32 %v3415, %v3160
          %v3417 = vadd.f32 %v3416, %v3161
          %v3418 = vadd.f32 %v3417, %v3162
          %v3419 = vadd.f32 %v3418, %v3163
          %v3420 = vadd.f32 %v3419, %v3164
          %v3421 = vadd.f32 %v3420, %v3165
          %v3422 = vadd.f32 %v3421, %v3166
          %v3423 = vadd.f32 %v3422, %v3167
          %v3424 = vadd.f32 %v3423, %v3168
          %v3425 = vadd.f32 %v3424, %v3169
          %v3426 = vadd.f32 %v3425, %v3170
          %v3427 = vadd.f32 %v3426, %v3171
          %v3428 = vadd.f32 %v3427, %v3172
          %v3429 = vadd.f32 %v3428, %v3173
          %v3430 = vadd.f32 %v3429, %v3174
          %v3431 = vadd.f32 %v3430, %v3175
          %v3432 = vadd.f32 %v3431, %v3176
          %v3433 = vadd.f32 %v3432, %v3177
          %v3434 = vadd.f32 %v3433, %v3178
          %v3435 = vadd.f32 %v3434, %v3179
          %v3436 = vadd.f32 %v3435, %v3180
          %v3437 = vadd.f32 %v3436, %v3181
          %v3438 = vadd.f32 %v3437, %v3182
          %v3439 = vadd.f32 %v3438, %v3183
          %v3440 = vadd.f32 %v3439, %v3184
          %v3441 = vadd.f32 %v3440, %v3185
          %v3442 = vadd.f32 %v3441, %v3186
          %v3443 = vadd.f32 %v3442, %v3187
          %v3444 = vadd.f32 %v3443, %v3188
          %v3445 = vadd.f32 %v3444, %v3189
          %v3446 = vadd.f32 %v3445, %v3190
          %v3447 = vadd.f32 %v3446, %v3191
          %v3448 = vadd.f32 %v3447, %v3192
          %v3449 = vadd.f32 %v3448, %v3193
          %v3450 = vadd.f32 %v3449, %v3194
          %v3451 = vadd.f32 %v3450, %v3195
          %v3452 = vadd.f32 %v3451, %v3196
          %v3453 = vadd.f32 %v3452, %v3197
          %v3454 = vadd.f32 %v3453, %v3198
          %v3455 = vadd.f32 %v3454, %v3199
          %v3456 = vadd.f32 %v3455, %v3200
          %v3457 = vadd.f32 %v3456, %v3201
          %v3458 = vadd.f32 %v3457, %v3202
          %v3459 = vadd.f32 %v3458, %v3203
          %v3460 = vadd.f32 %v3459, %v3204
          %v3461 = vadd.f32 %v3460, %v3205
          %v3462 = vadd.f32 %v3461, %v3206
          %v3463 = vadd.f32 %v3462, %v3207
          %v3464 = vadd.f32 %v3463, %v3208
          %v3465 = vadd.f32 %v3464, %v3209
          %v3466 = vadd.f32 %v3465, %v3210
          %v3467 = vadd.f32 %v3466, %v3211
          %v3468 = vadd.f32 %v3467, %v3212
          %v3469 = vadd.f32 %v3468, %v3213
          %v3470 = vadd.f32 %v3469, %v3214
          %v3471 = vadd.f32 %v3470, %v3215
          %v3472 = vadd.f32 %v3471, %v3216
          %v3473 = vadd.f32 %v3472, %v3217
          %v3474 = vadd.f32 %v3473, %v3218
          %v3475 = vadd.f32 %v3474, %v3219
          %v3476 = vadd.f32 %v3475, %v3220
          %v3477 = vadd.f32 %v3476, %v3221
          %v3478 = vadd.f32 %v3477, %v3222
          %v3479 = vadd.f32 %v3478, %v3223
          %v3480 = vadd.f32 %v3479, %v3224
          %v3481 = vadd.f32 %v3480, %v3225
          %v3482 = vadd.f32 %v3481, %v3226
          %v3483 = vadd.f32 %v3482, %v3227
          %v3484 = vadd.f32 %v3483, %v3228
          %v3485 = vadd.f32 %v3484, %v3229
          %v3486 = vadd.f32 %v3485, %v3230
          %v3487 = vadd.f32 %v3486, %v3231
          %v3488 = vadd.f32 %v3487, %v3232
          %v3489 = vadd.f32 %v3488, %v3233
          %v3490 = vadd.f32 %v3489, %v3234
          %v3491 = vadd.f32 %v3490, %v3235
          %v3492 = vadd.f32 %v3491, %v3236
          %v3493 = vadd.f32 %v3492, %v3237
          %v3494 = vadd.f32 %v3493, %v3238
          %v3495 = vadd.f32 %v3494, %v3239
          %v3496 = vadd.f32 %v3495, %v3240
          %v3497 = vadd.f32 %v3496, %v3241
          %v3498 = vadd.f32 %v3497, %v3242
          %v3499 = vadd.f32 %v3498, %v3243
          %v3500 = vadd.f32 %v3499, %v3244
          %v3501 = vadd.f32 %v3500, %v3245
          %v3502 = vadd.f32 %v3501, %v3246
          %v3503 = vadd.f32 %v3502, %v3247
          %v3504 = vadd.f32 %v3503, %v3248
          %v3505 = vadd.f32 %v3504, %v3249
          %v3506 = vadd.f32 %v3505, %v3250
          %v3507 = vadd.f32 %v3506, %v3251
          %v3508 = vadd.f32 %v3507, %v3252
          %v3509 = vadd.f32 %v3508, %v3253
          %v3510 = vadd.f32 %v3509, %v3254
          %v3511 = vadd.f32 %v3510, %v3255
          %v3512 = vadd.f32 %v3511, %v3256
          %v3513 = vadd.f32 %v3512, %v3257
          %v3514 = vadd.f32 %v3513, %v3258
          %v3515 = vadd.f32 %v3514, %v3259
          %v3516 = vadd.f32 %v3515, %v3260
          %v3517 = vadd.f32 %v3516, %v3261
          %v3518 = vadd.f32 %v3517, %v3262
          %v3519 = vadd.f32 %v3518, %v3263
          %v3520 = vadd.f32 %v3519, %v3264
          %v3521 = vadd.f32 %v3520, %v3265
          %v3522 = vadd.f32 %v3521, %v3266
          %v3523 = vadd.f32 %v3522, %v3267
          %v3524 = vadd.f32 %v3523, %v3268
          %v3525 = vadd.f32 %v3524, %v3269
          %v3526 = vadd.f32 %v3525, %v3270
          %v3527 = vadd.f32 %v3526, %v3271
          %v3528 = vadd.f32 %v3527, %v3272
          %v3529 = vadd.f32 %v3528, %v3273
          %v3530 = vadd.f32 %v3529, %v3274
          %v3531 = vadd.f32 %v3530, %v3275
          %v3532 = vadd.f32 %v3531, %v3276
          %v3533 = vadd.f32 %v3532, %v3277
          %v3534 = vadd.f32 %v3533, %v3278
          %v3535 = vadd.f32 %v3534, %v3279
          %v3536 = vadd.f32 %v3535, %v3280
          %v3537 = vadd.f32 %v3536, %v3281
          %v3538 = vadd.f32 %v3537, %v3282
          %v3539 = vadd.f32 %v3538, %v3283
          %v3540 = vadd.f32 %v3539, %v3284
          %v3541 = vadd.f32 %v3540, %v3285
          %v3542 = vadd.f32 %v3541, %v3286
          %v3543 = vadd.f32 %v3542, %v3287
          %v3544 = vadd.f32 %v3543, %v3288
          %v3545 = vadd.f32 %v3544, %v3289
          %v3546 = vadd.f32 %v3545, %v3290
          %v3547 = vadd.f32 %v3546, %v3291
          %v3548 = vadd.f32 %v3547, %v3292
          %v3549 = vadd.f32 %v3548, %v3293
          %v3550 = vadd.f32 %v3549, %v3294
          %v3551 = vadd.f32 %v3550, %v3295
          %v3552 = vadd.f32 %v3551, %v3296
          %v3553 = vadd.f32 %v3552, %v3297
          %v3554 = vadd.f32 %v3553, %v3298
          %v3555 = vadd.f32 %v3554, %v3299
          %v3556 = vadd.f32 %v3555, %v3300
          %v3557 = vadd.f32 %v3556, %v3301
          %v3558 = vadd.f32 %v3557, %v3302
          %v3559 = vadd.f32 %v3558, %v3303
          %v3560 = vadd.f32 %v3559, %v3304
          %v3561 = vadd.f32 %v3560, %v3305
          %v3562 = vadd.f32 %v3561, %v3306
          %v3563 = vadd.f32 %v3562, %v3307
          %v3564 = vadd.f32 %v3563, %v3308
          %v3565 = vadd.f32 %v3564, %v3309
          %v3566 = vadd.f32 %v3565, %v3310
          %v3567 = vadd.f32 %v3566, %v3311
          %v3568 = vadd.f32 %v3567, %v3312
          %v3569 = vadd.f32 %v3568, %v3313
          %v3570 = vadd.f32 %v3569, %v3314
          %v3571 = vadd.f32 %v3570, %v3315
          %v3572 = vadd.f32 %v3571, %v3316
          %v3573 = vadd.f32 %v3572, %v3317
          %v3574 = vadd.f32 %v3573, %v3318
          %v3575 = vadd.f32 %v3574, %v3319
          %v3576 = vadd.f32 %v3575, %v3320
          %v3577 = vadd.f32 %v3576, %v3321
          %v3578 = vadd.f32 %v3577, %v3322
          %v3579 = vadd.f32 %v3578, %v3323
          %v3580 = vadd.f32 %v3579, %v3324
          %v3581 = vadd.f32 %v3580, %v3325
          %v3582 = vadd.f32 %v3581, %v3326
          %v3583 = vadd.f32 %v3582, %v3327
          %v3584 = vadd.f32 %v3583, %v3328
          %v3585 = vadd.f32 %v3584, %v3329
          %v3586 = vadd.f32 %v3585, %v3330
          %v3587 = vadd.f32 %v3586, %v3331
          %v3588 = vadd.f32 %v3587, %v3332
          %v3589 = vadd.f32 %v3588, %v3333
          %v3590 = vadd.f32 %v3589, %v3334
          %v3591 = vadd.f32 %v3335, %v3590
          %3592 = vst [vmem:[#allocation7] sm:$0xff] %v3591
        $region48: #{tpu_custom_call.1} parent=27 // pred_fallthru
          _
        // Predicated region
        $region49: #{tpu_custom_call.1} parent=27 // pred_check
          %p3593 = pneg %p110
        $region50: #{tpu_custom_call.1} parent=27 // pred_check_branch
          %3595 = sbr.rel (%p3593) target = $region52
        $region51: #{tpu_custom_call.1} parent=27 // pred_region
          %s3597 = ssub.s32 128, 128
          %3598 = vsyncadd [#allocation4], %s3597
          %s3599 = smul.addr %s24, 128
          %s3600 = scalar_lea.hbm %s2, %s3599
          %s3602 = sshll.u32 [#allocation7], 4
          %s3603 = int_to_ptr.vmem [resolvable:$true] %s3602
          %3605 = dma.vmem_to_hbm [thread:$0]  %s3603, 128, %s3600, [#allocation4]
        $region52: #{tpu_custom_call.1} parent=27 // pred_fallthru
          _
        // Predicated region
        $region53: #{tpu_custom_call.1} parent=27 // pred_check
          %p3606 = pneg %p110
        $region54: #{tpu_custom_call.1} parent=27 // pred_check_branch
          %3608 = sbr.rel (%p3606) target = $region56
        $region55: #{tpu_custom_call.1} parent=27 // pred_region
          %3609 = dma.done [#allocation4], 128
        $region56: #{tpu_custom_call.1} parent=27 // pred_fallthru
          _
      $region28: #{tpu_custom_call.1} parent=5 // pred_fallthru
        _
      %p3610 = scmp.le.s32.totalorder 2, %s15
      // Predicated region
      $region57: #{tpu_custom_call.1} parent=5 // pred_check
        %p3611 = pneg %p3610
      $region58: #{tpu_custom_call.1} parent=5 // pred_check_branch
        %3613 = sbr.rel (%p3611) target = $region60
      $region59: #{tpu_custom_call.1} parent=5 // pred_region
        %s3614 = ssub.s32 %s15, 2
      $region60: #{tpu_custom_call.1} parent=5 // pred_fallthru
        _
    $region6: #{tpu_custom_call.1} parent=1 // loop_footer
      %s19 = sadd.s32 1, %s15
    $region7: #{tpu_custom_call.1} parent=1 // loop_footer_branch
      %14 = sbr.rel target = $region3
    $region8: #{tpu_custom_call.1} parent=1 // loop_exit
      _
    %3615 = vsyncpa [#allocation3], 1
    %s3616 = scalar_lea.sflag [#allocation3], 1
    %3617 = vsyncpa %s3616, 1
    %3618 = vsyncpa [#allocation6], 1
    %s3619 = scalar_lea.sflag [#allocation6], 1
    %3620 = vsyncpa %s3619, 1
    %3621 = vsyncpa [#allocation4], 1
    %s3622 = scalar_lea.sflag [#allocation4], 1
    %3623 = vsyncpa %s3622, 1

</llo_original>
